<compile_context>
chip_gen: v6e
topology: v6e:2x2x1
jax: 0.10.0
libtpu: 0.0.40
codegen_flags: <defaults>
</compile_context>

<pallas_src>
import functools

import jax
import jax.numpy as jnp
from jax.experimental import pallas as pl
from jax.experimental.pallas import tpu as pltpu

EPS = 1e-5
LANE = 128


def _round_up(a, b):
    return (a + b - 1) // b * b


def _pad_axis(x, size, axis):
    pad = size - x.shape[axis]
    if pad == 0:
        return x
    cfg = [(0, 0)] * x.ndim
    cfg[axis] = (0, pad)
    return jnp.pad(x, cfg)


def _pick_row_tile(hw, target=1024):
    """Largest row tile <= target that divides hw (prefer multiples of 16 for bf16 blocks)."""
    if hw <= target:
        return hw
    for step in (16, 8):
        t = (target // step) * step
        while t >= step:
            if hw % t == 0:
                return t
            t -= step
    return hw


def _vmem_ceiling():
    cap = 64 << 20                      # conservative default (v7x physical VMEM per TC)
    try:
        cap = int(getattr(pltpu.get_tpu_info(), "vmem_capacity_bytes", cap))
    except Exception:
        pass
    return max((cap * 3) // 4, 32 << 20)   # ~48 MiB on v7x, ~96 MiB on v5e/v6e


def _cparams(block_bytes, grid_rank):
    limit = int(min(max(3 * block_bytes + (8 << 20), 32 << 20), _vmem_ceiling()))
    return pltpu.CompilerParams(
        dimension_semantics=("parallel",) * grid_rank,
        vmem_limit_bytes=limit)


# ------------------------------- kernels -------------------------------------
def _block_stats(v):
    """(sum, sum of squared deviations from the block mean) -> (2, C) in f32.
    Combined Welford-style on the host; avoids E[x^2]-E[x]^2 cancellation."""
    n = v.shape[0]
    s = jnp.sum(v, axis=0, keepdims=True)
    d = v - s * (1.0 / n)
    return jnp.concatenate([s, jnp.sum(d * d, axis=0, keepdims=True)], axis=0)


def _stage1_kernel(x_ref, a1_ref, w1_ref, b1_ref, t1_ref, st_ref):
    """t1 = (x * a1) @ W1 + b1  (BN1 folded into the 1x1 conv).  t1 stored bf16."""
    xs = (x_ref[...] * a1_ref[...]).astype(jnp.bfloat16)       # BN math f32, MXU operand bf16
    t1 = jnp.dot(xs, w1_ref[...], preferred_element_type=jnp.float32) + b1_ref[...]
    st_ref[...] = _block_stats(t1)                             # stats from f32, pre-cast
    t1_ref[...] = t1.astype(t1_ref.dtype)


def _conv3x3_kernel(t1_ref, a2_ref, s2_ref, m_ref, w2_ref, c2_ref, t2_ref, st_ref, *, W):
    """t2 = conv3x3(BN2(t1), pad=1) + c2 as a single K=9*P matmul.  t2 stored bf16."""
    t1h = t1_ref[...].astype(jnp.float32) * a2_ref[...] + s2_ref[...]   # BN2 in f32, (HW, Pp)
    taps = []
    k = 0
    for dy in (-1, 0, 1):
        for dx in (-1, 0, 1):
            off = dy * W + dx
            # tap[p] = t1h[p + off] when (h+dy, w+dx) lies inside the image, else 0.
            shifted = t1h if off == 0 else jnp.roll(t1h, -off, axis=0)
            # TODO(synk): pltpu.roll would push the shift onto the XLU slot; jnp.roll
            #             (static slice+concat) kept as the known-good lowering path.
            tap = shifted.astype(jnp.bfloat16)                  # bf16 taps: 3x smaller footprint
            if dy != 0 or dx != 0:
                tap = tap * m_ref[k]                            # (HW,1) bf16 host-precomputed mask
            taps.append(tap)
            k += 1
    # One fused MXU pass: (HW, 9P) @ (9P, P) instead of 9 tiny matmuls.
    tap_cat = jnp.concatenate(taps, axis=1)
    t2 = jnp.dot(tap_cat, w2_ref[...], preferred_element_type=jnp.float32) + c2_ref[...]
    st_ref[...] = _block_stats(t2)
    t2_ref[...] = t2.astype(t2_ref.dtype)


def _stage3_kernel(x_ref, t2_ref, a3_ref, w3_ref, b3_ref, out_ref):
    """out = x + (t2 * a3) @ W3 + b3  (BN3 folded into the 1x1 conv + shortcut add)."""
    t2s = (t2_ref[...].astype(jnp.float32) * a3_ref[...]).astype(jnp.bfloat16)
    y = jnp.dot(t2s, w3_ref[...], preferred_element_type=jnp.float32) + b3_ref[...]
    out_ref[...] = x_ref[...] + y


# ------------------------------- specs / folds --------------------------------
def _row_spec(tr, c):
    return pl.BlockSpec((None, tr, c), lambda n, r: (n, r, 0))


def _img_spec(hw, c):
    return pl.BlockSpec((None, hw, c), lambda n: (n, 0, 0))


def _const_spec(shape):
    zeros = (0,) * len(shape)
    return pl.BlockSpec(shape, lambda *_: zeros)


def _bn_fold(stats, block_rows, gamma, beta):
    """Combine per-block (sum, M2-about-block-mean) rows into per-channel scale/shift."""
    c = stats.shape[-1]
    s = stats[..., 0, :].reshape(-1, c)
    m2 = stats[..., 1, :].reshape(-1, c)
    count = s.shape[0] * block_rows
    mean = jnp.sum(s, axis=0) / count
    mu_b = s / block_rows
    var = (jnp.sum(m2, axis=0) + block_rows * jnp.sum((mu_b - mean) ** 2, axis=0)) / count
    var = jnp.maximum(var, 0.0)
    scale = gamma * jax.lax.rsqrt(var + EPS)
    shift = beta - mean * scale
    return scale, shift


# ------------------------------- wrapper --------------------------------------
def bottleneck_pallas(x_nchw, params):
    """x_nchw: (N, Cin, H, W) float32. Returns (N, Cin, H, W)."""
    N, Cin, H, W = x_nchw.shape
    P = params["w1"].shape[0]                       # planes
    Cout = params["w3"].shape[0]                    # planes * 4
    assert Cout == Cin, "identity shortcut needs in_planes == 4*planes"
    HW = H * W
    Cp = _round_up(Cin, LANE)                       # lane-padded channel widths
    Pp = _round_up(P, LANE)
    TR = _pick_row_tile(HW)                         # pixel-row tile (divides HW)
    n_rt = HW // TR
    f32, bf16 = jnp.float32, jnp.bfloat16

    # NCHW -> (N, HW, Cp): channels on lanes, zero-padded to the 128-lane width (no-op pad
    # when Cin is already lane-aligned).
    # TODO(synk): an NHWC-native caller would avoid this transpose round trip entirely.
    xr = jnp.transpose(x_nchw, (0, 2, 3, 1)).reshape(N, HW, Cin).astype(f32)
    xr = _pad_axis(xr, Cp, 2)

    # ---- host-side repack of weights / BN params (tiny) ----
    w1 = _pad_axis(_pad_axis(params["w1"][:, :, 0, 0].T.astype(f32), Cp, 0), Pp, 1)   # (Cp, Pp)
    w3 = _pad_axis(_pad_axis(params["w3"][:, :, 0, 0].T.astype(f32), Pp, 0), Cp, 1)   # (Pp, Cp)
    w2 = jnp.stack([params["w2"][:, :, ky, kx].T.astype(f32)
                    for ky in range(3) for kx in range(3)], axis=0)                    # (9, P, P)
    w2 = _pad_axis(_pad_axis(w2, Pp, 1), Pp, 2).reshape(9 * Pp, Pp)                    # (9P, Pp)
    w1_bf, w2_bf, w3_bf = (w.astype(bf16) for w in (w1, w2, w3))

    g1 = _pad_axis(params["g1"].astype(f32), Cp, 0)
    b1 = _pad_axis(params["b1"].astype(f32), Cp, 0)
    g2 = _pad_axis(params["g2"].astype(f32), Pp, 0)
    b2 = _pad_axis(params["b2"].astype(f32), Pp, 0)
    g3 = _pad_axis(params["g3"].astype(f32), Pp, 0)
    b3 = _pad_axis(params["b3"].astype(f32), Pp, 0)
    c1b = _pad_axis(params["c1b"].astype(f32), Pp, 0)
    c2b = _pad_axis(params["c2b"].astype(f32), Pp, 0)
    c3b = _pad_axis(params["c3b"].astype(f32), Cp, 0)

    # Host-precomputed 3x3 border masks: one (HW, 1) column per tap, tap order matches w2.
    rid = jnp.arange(HW)
    hh, ww = rid // W, rid % W
    mask9 = jnp.stack(
        [((hh + dy >= 0) & (hh + dy < H) & (ww + dx >= 0) & (ww + dx < W))
         for dy in (-1, 0, 1) for dx in (-1, 0, 1)], axis=0)
    mask9 = mask9.astype(bf16).reshape(9, HW, 1)

    # ---- BN1 statistics of x: plain XLA reduction fused into the relayout (no extra pass) ----
    mean1 = jnp.mean(xr, axis=(0, 1))
    var1 = jnp.var(xr, axis=(0, 1))                 # biased, PyTorch training-BN semantics
    a1 = g1 * jax.lax.rsqrt(var1 + EPS)
    sh1 = b1 - mean1 * a1
    bconst1 = (sh1 @ w1 + c1b).reshape(1, Pp)       # BN1 shift + conv1 bias, folded

    grid_rows = (N, n_rt)

    # ---- pass 1: conv1 (1x1) + BN2 partial statistics; t1 stored bf16 ----
    blk1 = TR * Cp * 6 + TR * Pp * 10 + Cp * Pp * 2 + 4 * Pp * 4
    t1, stats_t1 = pl.pallas_call(
        _stage1_kernel,
        grid=grid_rows,
        in_specs=[_row_spec(TR, Cp), _const_spec((1, Cp)),
                  _const_spec((Cp, Pp)), _const_spec((1, Pp))],
        out_specs=(_row_spec(TR, Pp),
                   pl.BlockSpec((None, None, 2, Pp), lambda n, r: (n, r, 0, 0))),
        out_shape=(jax.ShapeDtypeStruct((N, HW, Pp), bf16),
                   jax.ShapeDtypeStruct((N, n_rt, 2, Pp), f32)),
        compiler_params=_cparams(blk1, 2),
    )(xr, a1.reshape(1, Cp), w1_bf, bconst1)
    a2, sh2 = _bn_fold(stats_t1, TR, g2, b2)

    # ---- pass 2: conv2 (3x3, pad=1) + BN3 partial statistics; t2 stored bf16 ----
    # Needs the full HW plane per image for the static tap shifts (no row tiling here).
    conv2 = functools.partial(_conv3x3_kernel, W=W)
    blk2 = HW * Pp * 12 + 36 * HW * Pp + 9 * Pp * Pp * 2 + 9 * HW * 2 + 4 * Pp * 4
    t2, stats_t2 = pl.pallas_call(
        conv2,
        grid=(N,),
        in_specs=[_img_spec(HW, Pp), _const_spec((1, Pp)), _const_spec((1, Pp)),
                  _const_spec((9, HW, 1)), _const_spec((9 * Pp, Pp)), _const_spec((1, Pp))],
        out_specs=(_img_spec(HW, Pp),
                   pl.BlockSpec((None, 2, Pp), lambda n: (n, 0, 0))),
        out_shape=(jax.ShapeDtypeStruct((N, HW, Pp), bf16),
                   jax.ShapeDtypeStruct((N, 2, Pp), f32)),
        compiler_params=_cparams(blk2, 1),
    )(t1, a2.reshape(1, Pp), sh2.reshape(1, Pp), mask9, w2_bf, c2b.reshape(1, Pp))
    a3, sh3 = _bn_fold(stats_t2, HW, g3, b3)
    bconst3 = (sh3 @ w3 + c3b).reshape(1, Cp)       # BN3 shift + conv3 bias, folded

    # ---- pass 3: conv3 (1x1) + residual add (output aliases x's HBM buffer) ----
    # TODO(synk): with the row axis tiled, pipeline_mode=pl.Buffered(3) on the streamed
    #             inputs is worth a sweep on v7x.
    blk3 = 3 * TR * Cp * 4 + 2 * TR * Pp * 2 + Pp * Cp * 2
    out2d = pl.pallas_call(
        _stage3_kernel,
        grid=grid_rows,
        in_specs=[_row_spec(TR, Cp), _row_spec(TR, Pp), _const_spec((1, Pp)),
                  _const_spec((Pp, Cp)), _const_spec((1, Cp))],
        out_specs=_row_spec(TR, Cp),
        out_shape=jax.ShapeDtypeStruct((N, HW, Cp), f32),
        input_output_aliases={0: 0},
        compiler_params=_cparams(blk3, 2),
    )(xr, t2, a3.reshape(1, Pp), w3_bf, bconst3)

    # Channel un-pad is skipped when Cin is already a multiple of the lane width.
    out = out2d if Cp == Cin else out2d[:, :, :Cin]
    out = out.reshape(N, H, W, Cin)
    return jnp.transpose(out, (0, 3, 1, 2))


# ---------------- pure-JAX reference (NCHW, PyTorch training-BN semantics) ----------------
def _bn_ref(x, g, b):
    m = x.mean(axis=(0, 2, 3), keepdims=True)
    v = ((x - m) ** 2).mean(axis=(0, 2, 3), keepdims=True)
    return (x - m) / jnp.sqrt(v + EPS) * g.reshape(1, -1, 1, 1) + b.reshape(1, -1, 1, 1)


def _conv_ref(x, w, b, pad):
    y = jax.lax.conv_general_dilated(
        x, w, window_strides=(1, 1), padding=pad,
        dimension_numbers=("NCHW", "OIHW", "NCHW"))
    return y + b.reshape(1, -1, 1, 1)


def bottleneck_ref(x, p):
    t = _conv_ref(_bn_ref(x, p["g1"], p["b1"]), p["w1"], p["c1b"], ((0, 0), (0, 0)))
    t = _conv_ref(_bn_ref(t, p["g2"], p["b2"]), p["w2"], p["c2b"], ((1, 1), (1, 1)))
    t = _conv_ref(_bn_ref(t, p["g3"], p["b3"]), p["w3"], p["c3b"], ((0, 0), (0, 0)))
    return x + t


if __name__ == "__main__":
    # Small deterministic problem: planes=4 -> in_planes = 4*planes = 16, stride=1.
    N, planes, H, W = 2, 4, 8, 8
    in_planes = planes * 4

    key = jax.random.PRNGKey(0)
    ks = jax.random.split(key, 13)

    params = {
        "g1": 1.0 + 0.1 * jax.random.normal(ks[0], (in_planes,), jnp.float32),
        "b1": 0.1 * jax.random.normal(ks[1], (in_planes,), jnp.float32),
        "w1": 0.1 * jax.random.normal(ks[2], (planes, in_planes, 1, 1), jnp.float32),
        "c1b": 0.1 * jax.random.normal(ks[3], (planes,), jnp.float32),
        "g2": 1.0 + 0.1 * jax.random.normal(ks[4], (planes,), jnp.float32),
        "b2": 0.1 * jax.random.normal(ks[5], (planes,), jnp.float32),
        "w2": 0.1 * jax.random.normal(ks[6], (planes, planes, 3, 3), jnp.float32),
        "c2b": 0.1 * jax.random.normal(ks[7], (planes,), jnp.float32),
        "g3": 1.0 + 0.1 * jax.random.normal(ks[8], (planes,), jnp.float32),
        "b3": 0.1 * jax.random.normal(ks[9], (planes,), jnp.float32),
        "w3": 0.1 * jax.random.normal(ks[10], (planes * 4, planes, 1, 1), jnp.float32),
        "c3b": 0.1 * jax.random.normal(ks[11], (planes * 4,), jnp.float32),
    }
    x = jax.random.normal(ks[12], (N, in_planes, H, W), jnp.float32)

    fwd = jax.jit(bottleneck_pallas)
    out = jax.block_until_ready(fwd(x, params))

    ref = jax.block_until_ready(bottleneck_ref(x, params))
    assert out.shape == x.shape
    # bf16 MXU operands + bf16 t1/t2 intermediates (f32 accumulation / stats) -> loose
    # tolerance against the all-f32 reference.
    max_err = float(jnp.max(jnp.abs(out - ref)))
    assert max_err < 8e-2, max_err
    print("KERNEL_OK")
</pallas_src>

<mosaic_0001>
module attributes {stable_mosaic.version = 11 : i64} {
  func.func @_stage1_kernel(%arg0: i32, %arg1: i32, %arg2: memref<1x64x128xf32, #tpu.memory_space<vmem>>, %arg3: memref<1x128xf32, #tpu.memory_space<vmem>>, %arg4: memref<128x128xbf16, #tpu.memory_space<vmem>>, %arg5: memref<1x128xf32, #tpu.memory_space<vmem>>, %arg6: memref<1x64x128xbf16, #tpu.memory_space<vmem>>, %arg7: memref<1x1x2x128xf32, #tpu.memory_space<vmem>>) attributes {dimension_semantics = [#tpu.dimension_semantics<parallel>, #tpu.dimension_semantics<parallel>], iteration_bounds = array<i64: 2, 1>, scalar_prefetch = 0 : i64, scratch_operands = 0 : i64, tpu.core_type = #tpu.core_type<tc>, window_params = [{transform_indices = @transform_0, window_bounds = array<i64: 1, 64, 128>}, {pipeline_mode = #tpu.pipeline_mode<synchronous>, transform_indices = @transform_1, window_bounds = array<i64: 1, 128>}, {pipeline_mode = #tpu.pipeline_mode<synchronous>, transform_indices = @transform_2, window_bounds = array<i64: 128, 128>}, {pipeline_mode = #tpu.pipeline_mode<synchronous>, transform_indices = @transform_3, window_bounds = array<i64: 1, 128>}, {transform_indices = @transform_4, window_bounds = array<i64: 1, 64, 128>}, {transform_indices = @transform_5, window_bounds = array<i64: 1, 1, 2, 128>}]} {
    %c0 = arith.constant 0 : index
    %c0_0 = arith.constant 0 : index
    %c0_1 = arith.constant 0 : index
    %0 = vector.load %arg2[%c0, %c0_0, %c0_1] : memref<1x64x128xf32, #tpu.memory_space<vmem>>, vector<1x64x128xf32>
    %1 = vector.shape_cast %0 : vector<1x64x128xf32> to vector<64x128xf32>
    %c0_2 = arith.constant 0 : index
    %c0_3 = arith.constant 0 : index
    %2 = vector.load %arg3[%c0_2, %c0_3] : memref<1x128xf32, #tpu.memory_space<vmem>>, vector<1x128xf32>
    %3 = vector.broadcast %2 : vector<1x128xf32> to vector<64x128xf32>
    %4 = arith.mulf %1, %3 : vector<64x128xf32>
    %5 = arith.truncf %4 : vector<64x128xf32> to vector<64x128xbf16>
    %c0_4 = arith.constant 0 : index
    %c0_5 = arith.constant 0 : index
    %6 = vector.load %arg4[%c0_4, %c0_5] : memref<128x128xbf16, #tpu.memory_space<vmem>>, vector<128x128xbf16>
    %cst = arith.constant dense<0.000000e+00> : vector<64x128xf32>
    %7 = tpu.matmul %5, %6, %cst {dimension_numbers = #tpu.dot_dimension_numbers<[1], [0], [0], [1], [0, 0, 1, 1], [], []>} : vector<64x128xbf16>, vector<128x128xbf16>, vector<64x128xf32> -> vector<64x128xf32>
    %c0_6 = arith.constant 0 : index
    %c0_7 = arith.constant 0 : index
    %8 = vector.load %arg5[%c0_6, %c0_7] : memref<1x128xf32, #tpu.memory_space<vmem>>, vector<1x128xf32>
    %9 = vector.broadcast %8 : vector<1x128xf32> to vector<64x128xf32>
    %10 = arith.addf %7, %9 : vector<64x128xf32>
    %cst_8 = arith.constant dense<0.000000e+00> : vector<128xf32>
    %11 = vector.multi_reduction <add>, %10, %cst_8 [0] : vector<64x128xf32> to vector<128xf32>
    %12 = vector.shape_cast %11 : vector<128xf32> to vector<1x128xf32>
    %cst_9 = arith.constant 1.562500e-02 : f32
    %13 = vector.broadcast %cst_9 : f32 to vector<1x128xf32>
    %14 = arith.mulf %12, %13 : vector<1x128xf32>
    %15 = vector.broadcast %14 : vector<1x128xf32> to vector<64x128xf32>
    %16 = arith.subf %10, %15 : vector<64x128xf32>
    %17 = arith.mulf %16, %16 : vector<64x128xf32>
    %cst_10 = arith.constant dense<0.000000e+00> : vector<128xf32>
    %18 = vector.multi_reduction <add>, %17, %cst_10 [0] : vector<64x128xf32> to vector<128xf32>
    %19 = vector.shape_cast %18 : vector<128xf32> to vector<1x128xf32>
    %20 = tpu.concatenate %12, %19 in 0 : vector<1x128xf32>, vector<1x128xf32> -> vector<2x128xf32>
    %c0_11 = arith.constant 0 : index
    %c0_12 = arith.constant 0 : index
    %c0_13 = arith.constant 0 : index
    %c0_14 = arith.constant 0 : index
    %21 = vector.load %arg7[%c0_11, %c0_12, %c0_13, %c0_14] : memref<1x1x2x128xf32, #tpu.memory_space<vmem>>, vector<1x1x2x128xf32>
    %22 = vector.shape_cast %21 : vector<1x1x2x128xf32> to vector<2x128xf32>
    %23 = vector.shape_cast %20 : vector<2x128xf32> to vector<1x1x2x128xf32>
    tpu.vector_store %arg7[%c0_11, %c0_12, %c0_13, %c0_14], %23 {strides = array<i32>} : memref<1x1x2x128xf32, #tpu.memory_space<vmem>>, vector<1x1x2x128xf32>,
    %24 = arith.truncf %10 : vector<64x128xf32> to vector<64x128xbf16>
    %c0_15 = arith.constant 0 : index
    %c0_16 = arith.constant 0 : index
    %c0_17 = arith.constant 0 : index
    %25 = vector.load %arg6[%c0_15, %c0_16, %c0_17] : memref<1x64x128xbf16, #tpu.memory_space<vmem>>, vector<1x64x128xbf16>
    %26 = vector.shape_cast %25 : vector<1x64x128xbf16> to vector<64x128xbf16>
    %27 = vector.shape_cast %24 : vector<64x128xbf16> to vector<1x64x128xbf16>
    tpu.vector_store %arg6[%c0_15, %c0_16, %c0_17], %27 {strides = array<i32>} : memref<1x64x128xbf16, #tpu.memory_space<vmem>>, vector<1x64x128xbf16>,
    return
  }
  func.func @transform_0(%arg0: i32, %arg1: i32) -> (i32, i32, i32) {
    %c0_i32 = arith.constant 0 : i32
    %c0_i32_0 = arith.constant 0 : i32
    return %arg0, %arg1, %c0_i32 : i32, i32, i32
  }
  func.func @transform_1(%arg0: i32, %arg1: i32) -> (i32, i32) {
    %c0_i32 = arith.constant 0 : i32
    %c0_i32_0 = arith.constant 0 : i32
    %c0_i32_1 = arith.constant 0 : i32
    return %c0_i32, %c0_i32_0 : i32, i32
  }
  func.func @transform_2(%arg0: i32, %arg1: i32) -> (i32, i32) {
    %c0_i32 = arith.constant 0 : i32
    %c0_i32_0 = arith.constant 0 : i32
    %c0_i32_1 = arith.constant 0 : i32
    return %c0_i32, %c0_i32_0 : i32, i32
  }
  func.func @transform_3(%arg0: i32, %arg1: i32) -> (i32, i32) {
    %c0_i32 = arith.constant 0 : i32
    %c0_i32_0 = arith.constant 0 : i32
    %c0_i32_1 = arith.constant 0 : i32
    return %c0_i32, %c0_i32_0 : i32, i32
  }
  func.func @transform_4(%arg0: i32, %arg1: i32) -> (i32, i32, i32) {
    %c0_i32 = arith.constant 0 : i32
    %c0_i32_0 = arith.constant 0 : i32
    return %arg0, %arg1, %c0_i32 : i32, i32, i32
  }
  func.func @transform_5(%arg0: i32, %arg1: i32) -> (i32, i32, i32, i32) {
    %c0_i32 = arith.constant 0 : i32
    %c0_i32_0 = arith.constant 0 : i32
    %c0_i32_1 = arith.constant 0 : i32
    return %arg0, %arg1, %c0_i32, %c0_i32_0 : i32, i32, i32, i32
  }
}

module attributes {stable_mosaic.version = 11 : i64} {
  func.func @_conv3x3_kernel(%arg0: i32, %arg1: memref<1x64x128xbf16, #tpu.memory_space<vmem>>, %arg2: memref<1x128xf32, #tpu.memory_space<vmem>>, %arg3: memref<1x128xf32, #tpu.memory_space<vmem>>, %arg4: memref<9x64x1xbf16, #tpu.memory_space<vmem>>, %arg5: memref<1152x128xbf16, #tpu.memory_space<vmem>>, %arg6: memref<1x128xf32, #tpu.memory_space<vmem>>, %arg7: memref<1x64x128xbf16, #tpu.memory_space<vmem>>, %arg8: memref<1x2x128xf32, #tpu.memory_space<vmem>>) attributes {dimension_semantics = [#tpu.dimension_semantics<parallel>], iteration_bounds = array<i64: 2>, scalar_prefetch = 0 : i64, scratch_operands = 0 : i64, tpu.core_type = #tpu.core_type<tc>, window_params = [{transform_indices = @transform_0, window_bounds = array<i64: 1, 64, 128>}, {pipeline_mode = #tpu.pipeline_mode<synchronous>, transform_indices = @transform_1, window_bounds = array<i64: 1, 128>}, {pipeline_mode = #tpu.pipeline_mode<synchronous>, transform_indices = @transform_2, window_bounds = array<i64: 1, 128>}, {pipeline_mode = #tpu.pipeline_mode<synchronous>, transform_indices = @transform_3, window_bounds = array<i64: 9, 64, 1>}, {pipeline_mode = #tpu.pipeline_mode<synchronous>, transform_indices = @transform_4, window_bounds = array<i64: 1152, 128>}, {pipeline_mode = #tpu.pipeline_mode<synchronous>, transform_indices = @transform_5, window_bounds = array<i64: 1, 128>}, {transform_indices = @transform_6, window_bounds = array<i64: 1, 64, 128>}, {transform_indices = @transform_7, window_bounds = array<i64: 1, 2, 128>}]} {
    %c0 = arith.constant 0 : index
    %c0_0 = arith.constant 0 : index
    %c0_1 = arith.constant 0 : index
    %0 = vector.load %arg1[%c0, %c0_0, %c0_1] : memref<1x64x128xbf16, #tpu.memory_space<vmem>>, vector<1x64x128xbf16>
    %1 = vector.shape_cast %0 : vector<1x64x128xbf16> to vector<64x128xbf16>
    %2 = arith.extf %1 : vector<64x128xbf16> to vector<64x128xf32>
    %c0_2 = arith.constant 0 : index
    %c0_3 = arith.constant 0 : index
    %3 = vector.load %arg2[%c0_2, %c0_3] : memref<1x128xf32, #tpu.memory_space<vmem>>, vector<1x128xf32>
    %4 = vector.broadcast %3 : vector<1x128xf32> to vector<64x128xf32>
    %5 = arith.mulf %2, %4 : vector<64x128xf32>
    %c0_4 = arith.constant 0 : index
    %c0_5 = arith.constant 0 : index
    %6 = vector.load %arg3[%c0_4, %c0_5] : memref<1x128xf32, #tpu.memory_space<vmem>>, vector<1x128xf32>
    %7 = vector.broadcast %6 : vector<1x128xf32> to vector<64x128xf32>
    %8 = arith.addf %5, %7 : vector<64x128xf32>
    %9 = vector.extract_strided_slice %8 {offsets = [55, 0], sizes = [9, 128], strides = [1, 1]} : vector<64x128xf32> to vector<9x128xf32>
    %10 = vector.extract_strided_slice %8 {offsets = [0, 0], sizes = [55, 128], strides = [1, 1]} : vector<64x128xf32> to vector<55x128xf32>
    %11 = tpu.concatenate %9, %10 in 0 : vector<9x128xf32>, vector<55x128xf32> -> vector<64x128xf32>
    %12 = arith.truncf %11 : vector<64x128xf32> to vector<64x128xbf16>
    %c0_6 = arith.constant 0 : index
    %c0_7 = arith.constant 0 : index
    %c0_8 = arith.constant 0 : index
    %13 = vector.load %arg4[%c0_6, %c0_7, %c0_8] : memref<9x64x1xbf16, #tpu.memory_space<vmem>>, vector<1x64x1xbf16>
    %14 = vector.shape_cast %13 : vector<1x64x1xbf16> to vector<64x1xbf16>
    %15 = vector.broadcast %14 : vector<64x1xbf16> to vector<64x128xbf16>
    %16 = arith.mulf %12, %15 : vector<64x128xbf16>
    %17 = vector.extract_strided_slice %8 {offsets = [56, 0], sizes = [8, 128], strides = [1, 1]} : vector<64x128xf32> to vector<8x128xf32>
    %18 = vector.extract_strided_slice %8 {offsets = [0, 0], sizes = [56, 128], strides = [1, 1]} : vector<64x128xf32> to vector<56x128xf32>
    %19 = tpu.concatenate %17, %18 in 0 : vector<8x128xf32>, vector<56x128xf32> -> vector<64x128xf32>
    %20 = arith.truncf %19 : vector<64x128xf32> to vector<64x128xbf16>
    %c1 = arith.constant 1 : index
    %c0_9 = arith.constant 0 : index
    %c0_10 = arith.constant 0 : index
    %21 = vector.load %arg4[%c1, %c0_9, %c0_10] : memref<9x64x1xbf16, #tpu.memory_space<vmem>>, vector<1x64x1xbf16>
    %22 = vector.shape_cast %21 : vector<1x64x1xbf16> to vector<64x1xbf16>
    %23 = vector.broadcast %22 : vector<64x1xbf16> to vector<64x128xbf16>
    %24 = arith.mulf %20, %23 : vector<64x128xbf16>
    %25 = vector.extract_strided_slice %8 {offsets = [57, 0], sizes = [7, 128], strides = [1, 1]} : vector<64x128xf32> to vector<7x128xf32>
    %26 = vector.extract_strided_slice %8 {offsets = [0, 0], sizes = [57, 128], strides = [1, 1]} : vector<64x128xf32> to vector<57x128xf32>
    %27 = tpu.concatenate %25, %26 in 0 : vector<7x128xf32>, vector<57x128xf32> -> vector<64x128xf32>
    %28 = arith.truncf %27 : vector<64x128xf32> to vector<64x128xbf16>
    %c2 = arith.constant 2 : index
    %c0_11 = arith.constant 0 : index
    %c0_12 = arith.constant 0 : index
    %29 = vector.load %arg4[%c2, %c0_11, %c0_12] : memref<9x64x1xbf16, #tpu.memory_space<vmem>>, vector<1x64x1xbf16>
    %30 = vector.shape_cast %29 : vector<1x64x1xbf16> to vector<64x1xbf16>
    %31 = vector.broadcast %30 : vector<64x1xbf16> to vector<64x128xbf16>
    %32 = arith.mulf %28, %31 : vector<64x128xbf16>
    %33 = vector.extract_strided_slice %8 {offsets = [63, 0], sizes = [1, 128], strides = [1, 1]} : vector<64x128xf32> to vector<1x128xf32>
    %34 = vector.extract_strided_slice %8 {offsets = [0, 0], sizes = [63, 128], strides = [1, 1]} : vector<64x128xf32> to vector<63x128xf32>
    %35 = tpu.concatenate %33, %34 in 0 : vector<1x128xf32>, vector<63x128xf32> -> vector<64x128xf32>
    %36 = arith.truncf %35 : vector<64x128xf32> to vector<64x128xbf16>
    %c3 = arith.constant 3 : index
    %c0_13 = arith.constant 0 : index
    %c0_14 = arith.constant 0 : index
    %37 = vector.load %arg4[%c3, %c0_13, %c0_14] : memref<9x64x1xbf16, #tpu.memory_space<vmem>>, vector<1x64x1xbf16>
    %38 = vector.shape_cast %37 : vector<1x64x1xbf16> to vector<64x1xbf16>
    %39 = vector.broadcast %38 : vector<64x1xbf16> to vector<64x128xbf16>
    %40 = arith.mulf %36, %39 : vector<64x128xbf16>
    %41 = arith.truncf %8 : vector<64x128xf32> to vector<64x128xbf16>
    %42 = vector.extract_strided_slice %8 {offsets = [1, 0], sizes = [63, 128], strides = [1, 1]} : vector<64x128xf32> to vector<63x128xf32>
    %43 = vector.extract_strided_slice %8 {offsets = [0, 0], sizes = [1, 128], strides = [1, 1]} : vector<64x128xf32> to vector<1x128xf32>
    %44 = tpu.concatenate %42, %43 in 0 : vector<63x128xf32>, vector<1x128xf32> -> vector<64x128xf32>
    %45 = arith.truncf %44 : vector<64x128xf32> to vector<64x128xbf16>
    %c5 = arith.constant 5 : index
    %c0_15 = arith.constant 0 : index
    %c0_16 = arith.constant 0 : index
    %46 = vector.load %arg4[%c5, %c0_15, %c0_16] : memref<9x64x1xbf16, #tpu.memory_space<vmem>>, vector<1x64x1xbf16>
    %47 = vector.shape_cast %46 : vector<1x64x1xbf16> to vector<64x1xbf16>
    %48 = vector.broadcast %47 : vector<64x1xbf16> to vector<64x128xbf16>
    %49 = arith.mulf %45, %48 : vector<64x128xbf16>
    %50 = vector.extract_strided_slice %8 {offsets = [7, 0], sizes = [57, 128], strides = [1, 1]} : vector<64x128xf32> to vector<57x128xf32>
    %51 = vector.extract_strided_slice %8 {offsets = [0, 0], sizes = [7, 128], strides = [1, 1]} : vector<64x128xf32> to vector<7x128xf32>
    %52 = tpu.concatenate %50, %51 in 0 : vector<57x128xf32>, vector<7x128xf32> -> vector<64x128xf32>
    %53 = arith.truncf %52 : vector<64x128xf32> to vector<64x128xbf16>
    %c6 = arith.constant 6 : index
    %c0_17 = arith.constant 0 : index
    %c0_18 = arith.constant 0 : index
    %54 = vector.load %arg4[%c6, %c0_17, %c0_18] : memref<9x64x1xbf16, #tpu.memory_space<vmem>>, vector<1x64x1xbf16>
    %55 = vector.shape_cast %54 : vector<1x64x1xbf16> to vector<64x1xbf16>
    %56 = vector.broadcast %55 : vector<64x1xbf16> to vector<64x128xbf16>
    %57 = arith.mulf %53, %56 : vector<64x128xbf16>
    %58 = vector.extract_strided_slice %8 {offsets = [8, 0], sizes = [56, 128], strides = [1, 1]} : vector<64x128xf32> to vector<56x128xf32>
    %59 = vector.extract_strided_slice %8 {offsets = [0, 0], sizes = [8, 128], strides = [1, 1]} : vector<64x128xf32> to vector<8x128xf32>
    %60 = tpu.concatenate %58, %59 in 0 : vector<56x128xf32>, vector<8x128xf32> -> vector<64x128xf32>
    %61 = arith.truncf %60 : vector<64x128xf32> to vector<64x128xbf16>
    %c7 = arith.constant 7 : index
    %c0_19 = arith.constant 0 : index
    %c0_20 = arith.constant 0 : index
    %62 = vector.load %arg4[%c7, %c0_19, %c0_20] : memref<9x64x1xbf16, #tpu.memory_space<vmem>>, vector<1x64x1xbf16>
    %63 = vector.shape_cast %62 : vector<1x64x1xbf16> to vector<64x1xbf16>
    %64 = vector.broadcast %63 : vector<64x1xbf16> to vector<64x128xbf16>
    %65 = arith.mulf %61, %64 : vector<64x128xbf16>
    %66 = vector.extract_strided_slice %8 {offsets = [9, 0], sizes = [55, 128], strides = [1, 1]} : vector<64x128xf32> to vector<55x128xf32>
    %67 = vector.extract_strided_slice %8 {offsets = [0, 0], sizes = [9, 128], strides = [1, 1]} : vector<64x128xf32> to vector<9x128xf32>
    %68 = tpu.concatenate %66, %67 in 0 : vector<55x128xf32>, vector<9x128xf32> -> vector<64x128xf32>
    %69 = arith.truncf %68 : vector<64x128xf32> to vector<64x128xbf16>
    %c8 = arith.constant 8 : index
    %c0_21 = arith.constant 0 : index
    %c0_22 = arith.constant 0 : index
    %70 = vector.load %arg4[%c8, %c0_21, %c0_22] : memref<9x64x1xbf16, #tpu.memory_space<vmem>>, vector<1x64x1xbf16>
    %71 = vector.shape_cast %70 : vector<1x64x1xbf16> to vector<64x1xbf16>
    %72 = vector.broadcast %71 : vector<64x1xbf16> to vector<64x128xbf16>
    %73 = arith.mulf %69, %72 : vector<64x128xbf16>
    %74 = tpu.concatenate %16, %24, %32, %40, %41, %49, %57, %65, %73 in 1 : vector<64x128xbf16>, vector<64x128xbf16>, vector<64x128xbf16>, vector<64x128xbf16>, vector<64x128xbf16>, vector<64x128xbf16>, vector<64x128xbf16>, vector<64x128xbf16>, vector<64x128xbf16> -> vector<64x1152xbf16>
    %c0_23 = arith.constant 0 : index
    %c0_24 = arith.constant 0 : index
    %75 = vector.load %arg5[%c0_23, %c0_24] : memref<1152x128xbf16, #tpu.memory_space<vmem>>, vector<1152x128xbf16>
    %cst = arith.constant dense<0.000000e+00> : vector<64x128xf32>
    %76 = tpu.matmul %74, %75, %cst {dimension_numbers = #tpu.dot_dimension_numbers<[1], [0], [0], [1], [0, 0, 1, 1], [], []>} : vector<64x1152xbf16>, vector<1152x128xbf16>, vector<64x128xf32> -> vector<64x128xf32>
    %c0_25 = arith.constant 0 : index
    %c0_26 = arith.constant 0 : index
    %77 = vector.load %arg6[%c0_25, %c0_26] : memref<1x128xf32, #tpu.memory_space<vmem>>, vector<1x128xf32>
    %78 = vector.broadcast %77 : vector<1x128xf32> to vector<64x128xf32>
    %79 = arith.addf %76, %78 : vector<64x128xf32>
    %cst_27 = arith.constant dense<0.000000e+00> : vector<128xf32>
    %80 = vector.multi_reduction <add>, %79, %cst_27 [0] : vector<64x128xf32> to vector<128xf32>
    %81 = vector.shape_cast %80 : vector<128xf32> to vector<1x128xf32>
    %cst_28 = arith.constant 1.562500e-02 : f32
    %82 = vector.broadcast %cst_28 : f32 to vector<1x128xf32>
    %83 = arith.mulf %81, %82 : vector<1x128xf32>
    %84 = vector.broadcast %83 : vector<1x128xf32> to vector<64x128xf32>
    %85 = arith.subf %79, %84 : vector<64x128xf32>
    %86 = arith.mulf %85, %85 : vector<64x128xf32>
    %cst_29 = arith.constant dense<0.000000e+00> : vector<128xf32>
    %87 = vector.multi_reduction <add>, %86, %cst_29 [0] : vector<64x128xf32> to vector<128xf32>
    %88 = vector.shape_cast %87 : vector<128xf32> to vector<1x128xf32>
    %89 = tpu.concatenate %81, %88 in 0 : vector<1x128xf32>, vector<1x128xf32> -> vector<2x128xf32>
    %c0_30 = arith.constant 0 : index
    %c0_31 = arith.constant 0 : index
    %c0_32 = arith.constant 0 : index
    %90 = vector.load %arg8[%c0_30, %c0_31, %c0_32] : memref<1x2x128xf32, #tpu.memory_space<vmem>>, vector<1x2x128xf32>
    %91 = vector.shape_cast %90 : vector<1x2x128xf32> to vector<2x128xf32>
    %92 = vector.shape_cast %89 : vector<2x128xf32> to vector<1x2x128xf32>
    tpu.vector_store %arg8[%c0_30, %c0_31, %c0_32], %92 {strides = array<i32>} : memref<1x2x128xf32, #tpu.memory_space<vmem>>, vector<1x2x128xf32>,
    %93 = arith.truncf %79 : vector<64x128xf32> to vector<64x128xbf16>
    %c0_33 = arith.constant 0 : index
    %c0_34 = arith.constant 0 : index
    %c0_35 = arith.constant 0 : index
    %94 = vector.load %arg7[%c0_33, %c0_34, %c0_35] : memref<1x64x128xbf16, #tpu.memory_space<vmem>>, vector<1x64x128xbf16>
    %95 = vector.shape_cast %94 : vector<1x64x128xbf16> to vector<64x128xbf16>
    %96 = vector.shape_cast %93 : vector<64x128xbf16> to vector<1x64x128xbf16>
    tpu.vector_store %arg7[%c0_33, %c0_34, %c0_35], %96 {strides = array<i32>} : memref<1x64x128xbf16, #tpu.memory_space<vmem>>, vector<1x64x128xbf16>,
    return
  }
  func.func @transform_0(%arg0: i32) -> (i32, i32, i32) {
    %c0_i32 = arith.constant 0 : i32
    %c0_i32_0 = arith.constant 0 : i32
    %c0_i32_1 = arith.constant 0 : i32
    return %arg0, %c0_i32, %c0_i32_0 : i32, i32, i32
  }
  func.func @transform_1(%arg0: i32) -> (i32, i32) {
    %c0_i32 = arith.constant 0 : i32
    %c0_i32_0 = arith.constant 0 : i32
    %c0_i32_1 = arith.constant 0 : i32
    return %c0_i32, %c0_i32_0 : i32, i32
  }
  func.func @transform_2(%arg0: i32) -> (i32, i32) {
    %c0_i32 = arith.constant 0 : i32
    %c0_i32_0 = arith.constant 0 : i32
    %c0_i32_1 = arith.constant 0 : i32
    return %c0_i32, %c0_i32_0 : i32, i32
  }
  func.func @transform_3(%arg0: i32) -> (i32, i32, i32) {
    %c0_i32 = arith.constant 0 : i32
    %c0_i32_0 = arith.constant 0 : i32
    %c0_i32_1 = arith.constant 0 : i32
    %c0_i32_2 = arith.constant 0 : i32
    return %c0_i32, %c0_i32_0, %c0_i32_1 : i32, i32, i32
  }
  func.func @transform_4(%arg0: i32) -> (i32, i32) {
    %c0_i32 = arith.constant 0 : i32
    %c0_i32_0 = arith.constant 0 : i32
    %c0_i32_1 = arith.constant 0 : i32
    return %c0_i32, %c0_i32_0 : i32, i32
  }
  func.func @transform_5(%arg0: i32) -> (i32, i32) {
    %c0_i32 = arith.constant 0 : i32
    %c0_i32_0 = arith.constant 0 : i32
    %c0_i32_1 = arith.constant 0 : i32
    return %c0_i32, %c0_i32_0 : i32, i32
  }
  func.func @transform_6(%arg0: i32) -> (i32, i32, i32) {
    %c0_i32 = arith.constant 0 : i32
    %c0_i32_0 = arith.constant 0 : i32
    %c0_i32_1 = arith.constant 0 : i32
    return %arg0, %c0_i32, %c0_i32_0 : i32, i32, i32
  }
  func.func @transform_7(%arg0: i32) -> (i32, i32, i32) {
    %c0_i32 = arith.constant 0 : i32
    %c0_i32_0 = arith.constant 0 : i32
    %c0_i32_1 = arith.constant 0 : i32
    return %arg0, %c0_i32, %c0_i32_0 : i32, i32, i32
  }
}

module attributes {stable_mosaic.version = 11 : i64} {
  func.func @_stage3_kernel(%arg0: i32, %arg1: i32, %arg2: memref<1x64x128xf32, #tpu.memory_space<vmem>>, %arg3: memref<1x64x128xbf16, #tpu.memory_space<vmem>>, %arg4: memref<1x128xf32, #tpu.memory_space<vmem>>, %arg5: memref<128x128xbf16, #tpu.memory_space<vmem>>, %arg6: memref<1x128xf32, #tpu.memory_space<vmem>>, %arg7: memref<1x64x128xf32, #tpu.memory_space<vmem>>) attributes {dimension_semantics = [#tpu.dimension_semantics<parallel>, #tpu.dimension_semantics<parallel>], iteration_bounds = array<i64: 2, 1>, scalar_prefetch = 0 : i64, scratch_operands = 0 : i64, tpu.core_type = #tpu.core_type<tc>, window_params = [{transform_indices = @transform_0, window_bounds = array<i64: 1, 64, 128>}, {transform_indices = @transform_1, window_bounds = array<i64: 1, 64, 128>}, {pipeline_mode = #tpu.pipeline_mode<synchronous>, transform_indices = @transform_2, window_bounds = array<i64: 1, 128>}, {pipeline_mode = #tpu.pipeline_mode<synchronous>, transform_indices = @transform_3, window_bounds = array<i64: 128, 128>}, {pipeline_mode = #tpu.pipeline_mode<synchronous>, transform_indices = @transform_4, window_bounds = array<i64: 1, 128>}, {transform_indices = @transform_5, window_bounds = array<i64: 1, 64, 128>}]} {
    %c0 = arith.constant 0 : index
    %c0_0 = arith.constant 0 : index
    %c0_1 = arith.constant 0 : index
    %0 = vector.load %arg3[%c0, %c0_0, %c0_1] : memref<1x64x128xbf16, #tpu.memory_space<vmem>>, vector<1x64x128xbf16>
    %1 = vector.shape_cast %0 : vector<1x64x128xbf16> to vector<64x128xbf16>
    %2 = arith.extf %1 : vector<64x128xbf16> to vector<64x128xf32>
    %c0_2 = arith.constant 0 : index
    %c0_3 = arith.constant 0 : index
    %3 = vector.load %arg4[%c0_2, %c0_3] : memref<1x128xf32, #tpu.memory_space<vmem>>, vector<1x128xf32>
    %4 = vector.broadcast %3 : vector<1x128xf32> to vector<64x128xf32>
    %5 = arith.mulf %2, %4 : vector<64x128xf32>
    %6 = arith.truncf %5 : vector<64x128xf32> to vector<64x128xbf16>
    %c0_4 = arith.constant 0 : index
    %c0_5 = arith.constant 0 : index
    %7 = vector.load %arg5[%c0_4, %c0_5] : memref<128x128xbf16, #tpu.memory_space<vmem>>, vector<128x128xbf16>
    %cst = arith.constant dense<0.000000e+00> : vector<64x128xf32>
    %8 = tpu.matmul %6, %7, %cst {dimension_numbers = #tpu.dot_dimension_numbers<[1], [0], [0], [1], [0, 0, 1, 1], [], []>} : vector<64x128xbf16>, vector<128x128xbf16>, vector<64x128xf32> -> vector<64x128xf32>
    %c0_6 = arith.constant 0 : index
    %c0_7 = arith.constant 0 : index
    %9 = vector.load %arg6[%c0_6, %c0_7] : memref<1x128xf32, #tpu.memory_space<vmem>>, vector<1x128xf32>
    %10 = vector.broadcast %9 : vector<1x128xf32> to vector<64x128xf32>
    %11 = arith.addf %8, %10 : vector<64x128xf32>
    %c0_8 = arith.constant 0 : index
    %c0_9 = arith.constant 0 : index
    %c0_10 = arith.constant 0 : index
    %12 = vector.load %arg2[%c0_8, %c0_9, %c0_10] : memref<1x64x128xf32, #tpu.memory_space<vmem>>, vector<1x64x128xf32>
    %13 = vector.shape_cast %12 : vector<1x64x128xf32> to vector<64x128xf32>
    %14 = arith.addf %13, %11 : vector<64x128xf32>
    %c0_11 = arith.constant 0 : index
    %c0_12 = arith.constant 0 : index
    %c0_13 = arith.constant 0 : index
    %15 = vector.load %arg7[%c0_11, %c0_12, %c0_13] : memref<1x64x128xf32, #tpu.memory_space<vmem>>, vector<1x64x128xf32>
    %16 = vector.shape_cast %15 : vector<1x64x128xf32> to vector<64x128xf32>
    %17 = vector.shape_cast %14 : vector<64x128xf32> to vector<1x64x128xf32>
    tpu.vector_store %arg7[%c0_11, %c0_12, %c0_13], %17 {strides = array<i32>} : memref<1x64x128xf32, #tpu.memory_space<vmem>>, vector<1x64x128xf32>,
    return
  }
  func.func @transform_0(%arg0: i32, %arg1: i32) -> (i32, i32, i32) {
    %c0_i32 = arith.constant 0 : i32
    %c0_i32_0 = arith.constant 0 : i32
    return %arg0, %arg1, %c0_i32 : i32, i32, i32
  }
  func.func @transform_1(%arg0: i32, %arg1: i32) -> (i32, i32, i32) {
    %c0_i32 = arith.constant 0 : i32
    %c0_i32_0 = arith.constant 0 : i32
    return %arg0, %arg1, %c0_i32 : i32, i32, i32
  }
  func.func @transform_2(%arg0: i32, %arg1: i32) -> (i32, i32) {
    %c0_i32 = arith.constant 0 : i32
    %c0_i32_0 = arith.constant 0 : i32
    %c0_i32_1 = arith.constant 0 : i32
    return %c0_i32, %c0_i32_0 : i32, i32
  }
  func.func @transform_3(%arg0: i32, %arg1: i32) -> (i32, i32) {
    %c0_i32 = arith.constant 0 : i32
    %c0_i32_0 = arith.constant 0 : i32
    %c0_i32_1 = arith.constant 0 : i32
    return %c0_i32, %c0_i32_0 : i32, i32
  }
  func.func @transform_4(%arg0: i32, %arg1: i32) -> (i32, i32) {
    %c0_i32 = arith.constant 0 : i32
    %c0_i32_0 = arith.constant 0 : i32
    %c0_i32_1 = arith.constant 0 : i32
    return %c0_i32, %c0_i32_0 : i32, i32
  }
  func.func @transform_5(%arg0: i32, %arg1: i32) -> (i32, i32, i32) {
    %c0_i32 = arith.constant 0 : i32
    %c0_i32_0 = arith.constant 0 : i32
    return %arg0, %arg1, %c0_i32 : i32, i32, i32
  }
}

</mosaic_0001>

<llo_original>
// kernel: bottleneck_pallas.3
$region0: #{bottleneck_pallas.3}
  #allocation0 [shape = 'u32[]', space=smem, size = 0x4, offset = 0x4, fixed_abs, tag = 'smem constant byte address 0x4 - core index']
  #allocation1 [shape = 'u32[144,128]{1,0:T(1,128)}', space=vmem, size = 0x12000, scoped, tag = 'internal scratch']
  %s0 = inlined_call_operand.vmem [shape: f32[2,64,128], index: 0, kind: input, shape index: {}]
  %s1 = inlined_call_operand.vmem [shape: f32[1,128], index: 1, kind: input, shape index: {}]
  %s2 = inlined_call_operand.vmem [shape: bf16[128,128], index: 2, kind: input, shape index: {}]
  %s3 = inlined_call_operand.vmem [shape: f32[1,128], index: 3, kind: input, shape index: {}]
  %s4 = inlined_call_operand.vmem [shape: bf16[2,64,128], index: 4, kind: output, shape index: {0}]
  %s5 = inlined_call_operand.vmem [shape: f32[2,1,2,128], index: 5, kind: output, shape index: {1}]
  %6 = xla_tuple %s4, %s5
  %s7 = sld [smem:[#allocation0]]
  $region57: #{bottleneck_pallas.3} parent=0
    _
  %s9 = ssub.s32 1, %s7
  %s10 = scalar_select 0, %s9, %s7
  loop: start=0, step=1, limit=4
  $region2: #{bottleneck_pallas.3} parent=0 // loop_pre_header
    _
  $region3: #{bottleneck_pallas.3} parent=0 // loop_header
    %s12 = sphi 0, %s16
    %p13 = scmp.ge.s32.totalorder %s12, 4
    %s19 = sphi 0, %s31
    %s20 = sphi 0, %s27
    %s21 = sphi 0, %s19
    %s22 = sphi 0, %s20
    %s23 = sphi 0, %s21
    %s24 = sphi 0, %s22
    %s36 = sphi 0, %s38
    %s39 = sphi 0, %s36
    %s40 = sphi 0, %s39
    %s56 = sphi 0, %s40
    %s60 = sphi 0, %s60
    %s62 = sphi 0, %s60
    %s63 = sphi 0, %s62
    %s77 = sphi 0, %s63
    %s81 = sphi 0, %s81
    %s83 = sphi 0, %s81
    %s84 = sphi 0, %s83
    %s98 = sphi 0, %s84
    %s102 = sphi 0, %s102
    %s104 = sphi 0, %s102
    %s105 = sphi 0, %s104
    %s119 = sphi 0, %s105
    %s127 = sphi 0, %s129
    %s130 = sphi 0, %s127
    %s131 = sphi 0, %s130
    %s147 = sphi 0, %s131
    %s155 = sphi 0, %s157
    %s158 = sphi 0, %s155
    %s159 = sphi 0, %s158
    %s175 = sphi 0, %s159
  $region4: #{bottleneck_pallas.3} parent=0 // loop_header_branch
    %15 = sbr.rel (%p13) target = $region8
  $region5: #{bottleneck_pallas.3} parent=0 // loop_body
    %s17 = ssub.s32 %s12, 1
    %s18 = ssub.s32 %s12, 2
    %s25 = sadd.s32 1, %s20
    %p26 = scmp.ge.s32.totalorder %s25, 1
    %s27 = scalar_select %p26, 0, %s25
    %s28 = sadd.s32 1, %s19
    %s29 = scalar_select %p26, %s28, %s19
    %p30 = scmp.ge.s32.totalorder %s29, 2
    %s31 = scalar_select %p30, 0, %s29
    %s32 = ssub.s32 %s19, %s31
    %s33 = ssub.s32 %s20, %s27
    %s34 = sor.u32 %s32, %s33
    %p35 = scmp.eq.s32.totalorder %s34, 0
    %s37 = sadd.s32 %s36, 1
    %s38 = scalar_select %p35, %s36, %s37
    %p41 = pneg %p35
    %p42 = scmp.eq.s32.totalorder %s12, 1
    %p43 = por %p41, %p42
    %p44 = scmp.ne.s32.totalorder %s36, %s39
    %p45 = scmp.eq.s32.totalorder %s12, 0
    %p46 = por %p44, %p45
    %p47 = scmp.ne.s32.totalorder %s36, %s39
    %p48 = scmp.eq.s32.totalorder %s17, 1
    %p49 = por %p47, %p48
    %p50 = scmp.ne.s32.totalorder %s39, %s40
    %p51 = scmp.eq.s32.totalorder %s17, 0
    %p52 = por %p50, %p51
    %p53 = scmp.ne.s32.totalorder %s39, %s40
    %p54 = scmp.eq.s32.totalorder %s18, 1
    %p55 = por %p53, %p54
    %p57 = scmp.ne.s32.totalorder %s40, %s56
    %p58 = scmp.eq.s32.totalorder %s18, 0
    %p59 = por %p57, %p58
    %s61 = sadd.s32 %s60, 1
    %p64 = scmp.eq.s32.totalorder %s12, 1
    %p65 = scmp.ne.s32.totalorder %s60, %s62
    %p66 = scmp.eq.s32.totalorder %s12, 0
    %p67 = por %p65, %p66
    %p68 = scmp.ne.s32.totalorder %s60, %s62
    %p69 = scmp.eq.s32.totalorder %s17, 1
    %p70 = por %p68, %p69
    %p71 = scmp.ne.s32.totalorder %s62, %s63
    %p72 = scmp.eq.s32.totalorder %s17, 0
    %p73 = por %p71, %p72
    %p74 = scmp.ne.s32.totalorder %s62, %s63
    %p75 = scmp.eq.s32.totalorder %s18, 1
    %p76 = por %p74, %p75
    %p78 = scmp.ne.s32.totalorder %s63, %s77
    %p79 = scmp.eq.s32.totalorder %s18, 0
    %p80 = por %p78, %p79
    %s82 = sadd.s32 %s81, 1
    %p85 = scmp.eq.s32.totalorder %s12, 1
    %p86 = scmp.ne.s32.totalorder %s81, %s83
    %p87 = scmp.eq.s32.totalorder %s12, 0
    %p88 = por %p86, %p87
    %p89 = scmp.ne.s32.totalorder %s81, %s83
    %p90 = scmp.eq.s32.totalorder %s17, 1
    %p91 = por %p89, %p90
    %p92 = scmp.ne.s32.totalorder %s83, %s84
    %p93 = scmp.eq.s32.totalorder %s17, 0
    %p94 = por %p92, %p93
    %p95 = scmp.ne.s32.totalorder %s83, %s84
    %p96 = scmp.eq.s32.totalorder %s18, 1
    %p97 = por %p95, %p96
    %p99 = scmp.ne.s32.totalorder %s84, %s98
    %p100 = scmp.eq.s32.totalorder %s18, 0
    %p101 = por %p99, %p100
    %s103 = sadd.s32 %s102, 1
    %p106 = scmp.eq.s32.totalorder %s12, 1
    %p107 = scmp.ne.s32.totalorder %s102, %s104
    %p108 = scmp.eq.s32.totalorder %s12, 0
    %p109 = por %p107, %p108
    %p110 = scmp.ne.s32.totalorder %s102, %s104
    %p111 = scmp.eq.s32.totalorder %s17, 1
    %p112 = por %p110, %p111
    %p113 = scmp.ne.s32.totalorder %s104, %s105
    %p114 = scmp.eq.s32.totalorder %s17, 0
    %p115 = por %p113, %p114
    %p116 = scmp.ne.s32.totalorder %s104, %s105
    %p117 = scmp.eq.s32.totalorder %s18, 1
    %p118 = por %p116, %p117
    %p120 = scmp.ne.s32.totalorder %s105, %s119
    %p121 = scmp.eq.s32.totalorder %s18, 0
    %p122 = por %p120, %p121
    %s123 = ssub.s32 %s19, %s31
    %s124 = ssub.s32 %s20, %s27
    %s125 = sor.u32 %s123, %s124
    %p126 = scmp.eq.s32.totalorder %s125, 0
    %s128 = sadd.s32 %s127, 1
    %s129 = scalar_select %p126, %s127, %s128
    %p132 = pneg %p126
    %p133 = scmp.eq.s32.totalorder %s12, 1
    %p134 = por %p132, %p133
    %p135 = scmp.ne.s32.totalorder %s127, %s130
    %p136 = scmp.eq.s32.totalorder %s12, 0
    %p137 = por %p135, %p136
    %p138 = scmp.ne.s32.totalorder %s127, %s130
    %p139 = scmp.eq.s32.totalorder %s17, 1
    %p140 = por %p138, %p139
    %p141 = scmp.ne.s32.totalorder %s130, %s131
    %p142 = scmp.eq.s32.totalorder %s17, 0
    %p143 = por %p141, %p142
    %p144 = scmp.ne.s32.totalorder %s130, %s131
    %p145 = scmp.eq.s32.totalorder %s18, 1
    %p146 = por %p144, %p145
    %p148 = scmp.ne.s32.totalorder %s131, %s147
    %p149 = scmp.eq.s32.totalorder %s18, 0
    %p150 = por %p148, %p149
    %s151 = ssub.s32 %s19, %s31
    %s152 = ssub.s32 %s20, %s27
    %s153 = sor.u32 %s151, %s152
    %p154 = scmp.eq.s32.totalorder %s153, 0
    %s156 = sadd.s32 %s155, 1
    %s157 = scalar_select %p154, %s155, %s156
    %p160 = pneg %p154
    %p161 = scmp.eq.s32.totalorder %s12, 1
    %p162 = por %p160, %p161
    %p163 = scmp.ne.s32.totalorder %s155, %s158
    %p164 = scmp.eq.s32.totalorder %s12, 0
    %p165 = por %p163, %p164
    %p166 = scmp.ne.s32.totalorder %s155, %s158
    %p167 = scmp.eq.s32.totalorder %s17, 1
    %p168 = por %p166, %p167
    %p169 = scmp.ne.s32.totalorder %s158, %s159
    %p170 = scmp.eq.s32.totalorder %s17, 0
    %p171 = por %p169, %p170
    %p172 = scmp.ne.s32.totalorder %s158, %s159
    %p173 = scmp.eq.s32.totalorder %s18, 1
    %p174 = por %p172, %p173
    %p176 = scmp.ne.s32.totalorder %s159, %s175
    %p177 = scmp.eq.s32.totalorder %s18, 0
    %p178 = por %p176, %p177
    %p179 = scmp.le.s32.totalorder 1, %s12
    %p180 = scmp.lt.s32.totalorder %s12, 3
    %p181 = pnand %p179, %p180
    %p182 = pneg %p181
    // Predicated region
    $region9: #{bottleneck_pallas.3} parent=5 // pred_check
      _
    $region10: #{bottleneck_pallas.3} parent=5 // pred_check_branch
      %184 = sbr.rel (%p181) target = $region12
    $region11: #{bottleneck_pallas.3} parent=5 // pred_region
      %s185 = ssub.s32 %s12, 1
      // Predicated region
      $region13: #{bottleneck_pallas.3} parent=11 // pred_check
        %p186 = pneg %p73
      $region14: #{bottleneck_pallas.3} parent=11 // pred_check_branch
        %188 = sbr.rel (%p186) target = $region16
      $region15: #{bottleneck_pallas.3} parent=11 // pred_region
        _
      $region16: #{bottleneck_pallas.3} parent=11 // pred_fallthru
        _
      // Predicated region
      $region17: #{bottleneck_pallas.3} parent=11 // pred_check
        %p189 = pneg %p94
      $region18: #{bottleneck_pallas.3} parent=11 // pred_check_branch
        %191 = sbr.rel (%p189) target = $region20
      $region19: #{bottleneck_pallas.3} parent=11 // pred_region
        _
      $region20: #{bottleneck_pallas.3} parent=11 // pred_fallthru
        _
      // Predicated region
      $region21: #{bottleneck_pallas.3} parent=11 // pred_check
        %p192 = pneg %p115
      $region22: #{bottleneck_pallas.3} parent=11 // pred_check_branch
        %194 = sbr.rel (%p192) target = $region24
      $region23: #{bottleneck_pallas.3} parent=11 // pred_region
        _
      $region24: #{bottleneck_pallas.3} parent=11 // pred_fallthru
        _
    $region12: #{bottleneck_pallas.3} parent=5 // pred_fallthru
      _
    %p195 = scmp.lt.s32.totalorder %s12, 2
    // Predicated region
    $region25: #{bottleneck_pallas.3} parent=5 // pred_check
      %p196 = pneg %p195
    $region26: #{bottleneck_pallas.3} parent=5 // pred_check_branch
      %198 = sbr.rel (%p196) target = $region28
    $region27: #{bottleneck_pallas.3} parent=5 // pred_region
      // Predicated region
      $region29: #{bottleneck_pallas.3} parent=27 // pred_check
        %p199 = pneg %p46
      $region30: #{bottleneck_pallas.3} parent=27 // pred_check_branch
        %201 = sbr.rel (%p199) target = $region32
      $region31: #{bottleneck_pallas.3} parent=27 // pred_region
        %s202 = smul.u32 8, %s20
        %p203 = scmp.lt.s32.totalorder %s19, 1
        %s204 = scalar_select %p203, %s19, 1
        %p205 = scmp.lt.s32.totalorder %s202, 7
        %s206 = scalar_select %p205, %s202, 7
        %s207 = smul.addr %s204, 8
        %s208 = sadd.s32 %s206, %s207
        %s209 = smul.addr %s208, 8
        %s210 = scalar_lea.vmem %s0, %s209
        %s211 = smul.u32 8, %s20
      $region32: #{bottleneck_pallas.3} parent=27 // pred_fallthru
        _
    $region28: #{bottleneck_pallas.3} parent=5 // pred_fallthru
      _
    %p212 = scmp.le.s32.totalorder 1, %s12
    %p213 = scmp.lt.s32.totalorder %s12, 3
    %p214 = pnand %p212, %p213
    %p215 = pneg %p214
    // Predicated region
    $region33: #{bottleneck_pallas.3} parent=5 // pred_check
      _
    $region34: #{bottleneck_pallas.3} parent=5 // pred_check_branch
      %217 = sbr.rel (%p214) target = $region36
    $region35: #{bottleneck_pallas.3} parent=5 // pred_region
      %s218 = ssub.s32 %s12, 1
      %s219 = smul.u32 8, %s22
      %p220 = scmp.lt.s32.totalorder %s21, 1
      %s221 = scalar_select %p220, %s21, 1
      %p222 = scmp.lt.s32.totalorder %s219, 7
      %s223 = scalar_select %p222, %s219, 7
      %s224 = smul.addr %s221, 8
      %s225 = sadd.s32 %s223, %s224
      %s226 = smul.addr %s225, 8
      %s227 = scalar_lea.vmem %s0, %s226
      %p228 = pneg %p52
      %p229 = pneg %p49
      %p230 = pneg %p73
      %p231 = pneg %p70
      %p232 = pneg %p94
      %p233 = pneg %p91
      %p234 = pneg %p115
      %p235 = pneg %p112
      %p236 = pneg %p143
      %p237 = pneg %p140
      %s238 = smul.u32 8, %s22
      %p239 = scmp.lt.s32.totalorder %s21, 1
      %s240 = scalar_select %p239, %s21, 1
      %p241 = scmp.lt.s32.totalorder %s238, 7
      %s242 = scalar_select %p241, %s238, 7
      %s243 = smul.addr %s240, 8
      %s244 = sadd.s32 %s242, %s243
      %s245 = smul.addr %s244, 4
      %s246 = scalar_lea.vmem %s4, %s245
      %p247 = pneg %p171
      %p248 = pneg %p168
      %p249 = scmp.lt.s32.totalorder %s21, 1
      %s250 = scalar_select %p249, %s21, 1
      %p251 = scmp.lt.s32.totalorder %s22, 0
      %s252 = scalar_select %p251, %s22, 0
      %s253 = sadd.s32 %s252, %s250
      %s254 = smul.addr %s253, 2
      %s255 = scalar_lea.vmem %s5, %s254
      %s256 = smul.u32 8, %s22
      %p257 = scmp.lt.s32.totalorder %s21, 1
      %s258 = scalar_select %p257, %s21, 1
      %p259 = scmp.lt.s32.totalorder %s256, 7
      %s260 = scalar_select %p259, %s256, 7
      %s261 = smul.addr %s258, 8
      %s262 = sadd.s32 %s260, %s261
      %s263 = smul.addr %s262, 8
      %s264 = scalar_lea.vmem %s0, %s263
      %s265 = smul.u32 8, %s22
      %s266 = smul.u32 8, %s22
      %p267 = scmp.lt.s32.totalorder %s21, 1
      %s268 = scalar_select %p267, %s21, 1
      %p269 = scmp.lt.s32.totalorder %s266, 7
      %s270 = scalar_select %p269, %s266, 7
      %s271 = smul.addr %s268, 8
      %s272 = sadd.s32 %s270, %s271
      %s273 = smul.addr %s272, 4
      %s274 = scalar_lea.vmem %s4, %s273
      %s275 = smul.u32 8, %s22
      %p276 = scmp.lt.s32.totalorder %s21, 1
      %s277 = scalar_select %p276, %s21, 1
      %p278 = scmp.lt.s32.totalorder %s22, 0
      %s279 = scalar_select %p278, %s22, 0
      %s280 = sadd.s32 %s279, %s277
      %s281 = smul.addr %s280, 2
      %s282 = scalar_lea.vmem %s5, %s281
      %v284 = vld [vmem:[%s264] sm:$0xff]
      %v285 = vld [vmem:[%s264 + $0x8] sm:$0xff]
      %v286 = vld [vmem:[%s264 + $0x10] sm:$0xff]
      %v287 = vld [vmem:[%s264 + $0x18] sm:$0xff]
      %v288 = vld [vmem:[%s264 + $0x20] sm:$0xff]
      %v289 = vld [vmem:[%s264 + $0x28] sm:$0xff]
      %v290 = vld [vmem:[%s264 + $0x30] sm:$0xff]
      %v291 = vld [vmem:[%s264 + $0x38] sm:$0xff]
      %v292 = vld [vmem:[%s1] sm:$0x1]
      %v294 = vlaneseq
      %v295 = vshrl.u32 %v294, 7
      %v296 = vsub.s32 0, %v295
      %v297 = vrot.slane %v292, %v296
      %v299 = vmul.f32 %v284, %v297
      %v300 = vmul.f32 %v285, %v297
      %v301 = vmul.f32 %v286, %v297
      %v302 = vmul.f32 %v287, %v297
      %v303 = vmul.f32 %v288, %v297
      %v304 = vmul.f32 %v289, %v297
      %v305 = vmul.f32 %v290, %v297
      %v306 = vmul.f32 %v291, %v297
      %v307 = vpack.c.bf16 %v300, %v299
      %v308 = vpack.c.bf16 %v302, %v301
      %v309 = vpack.c.bf16 %v304, %v303
      %v310 = vpack.c.bf16 %v306, %v305
      %v311 = vld [vmem:[%s2] sm:$0xf]
      %v312 = vld [vmem:[%s2 + $0x4] sm:$0xf]
      %v313 = vld [vmem:[%s2 + $0x8] sm:$0xf]
      %v314 = vld [vmem:[%s2 + $0xc] sm:$0xf]
      %v315 = vld [vmem:[%s2 + $0x10] sm:$0xf]
      %v316 = vld [vmem:[%s2 + $0x14] sm:$0xf]
      %v317 = vld [vmem:[%s2 + $0x18] sm:$0xf]
      %v318 = vld [vmem:[%s2 + $0x1c] sm:$0xf]
      %v319 = vld [vmem:[%s2 + $0x20] sm:$0xf]
      %v320 = vld [vmem:[%s2 + $0x24] sm:$0xf]
      %v321 = vld [vmem:[%s2 + $0x28] sm:$0xf]
      %v322 = vld [vmem:[%s2 + $0x2c] sm:$0xf]
      %v323 = vld [vmem:[%s2 + $0x30] sm:$0xf]
      %v324 = vld [vmem:[%s2 + $0x34] sm:$0xf]
      %v325 = vld [vmem:[%s2 + $0x38] sm:$0xf]
      %v326 = vld [vmem:[%s2 + $0x3c] sm:$0xf]
      %v327 = vld [vmem:[%s3] sm:$0x1]
      %v329 = vlaneseq
      %v330 = vshrl.u32 %v329, 7
      %v331 = vsub.s32 0, %v330
      %v332 = vrot.slane %v327, %v331
      %v350 = vunpack.c.l.b16 %v311
      %v351 = vunpack.c.l.b16 %v312
      %v352 = vunpack.c.l.b16 %v313
      %v353 = vunpack.c.l.b16 %v314
      %v354 = vunpack.c.l.b16 %v315
      %v355 = vunpack.c.l.b16 %v316
      %v356 = vunpack.c.l.b16 %v317
      %v357 = vunpack.c.l.b16 %v318
      %v358 = vunpack.c.l.b16 %v319
      %v359 = vunpack.c.l.b16 %v320
      %v360 = vunpack.c.l.b16 %v321
      %v361 = vunpack.c.l.b16 %v322
      %v362 = vunpack.c.l.b16 %v323
      %v363 = vunpack.c.l.b16 %v324
      %v364 = vunpack.c.l.b16 %v325
      %v365 = vunpack.c.l.b16 %v326
      %v366 = vpack.c.b16 %v351, %v350
      %v367 = vpack.c.b16 %v353, %v352
      %v368 = vpack.c.b16 %v355, %v354
      %v369 = vpack.c.b16 %v357, %v356
      %v370 = vpack.c.b16 %v359, %v358
      %v371 = vpack.c.b16 %v361, %v360
      %v372 = vpack.c.b16 %v363, %v362
      %v373 = vpack.c.b16 %v365, %v364
      %382 = vmatprep.subr.bf16.mxu0 0
      %383 = vmatpush1.bf16.msra.mxu0 %v373
      %384 = vmatprep.subr.bf16.mxu0 0
      %385 = vmatpush1.bf16.msra.mxu0 %v372
      %386 = vmatprep.subr.bf16.mxu0 0
      %387 = vmatpush1.bf16.msra.mxu0 %v371
      %388 = vmatprep.subr.bf16.mxu0 0
      %389 = vmatpush1.bf16.msra.mxu0 %v370
      %390 = vmatprep.subr.bf16.mxu0 0
      %391 = vmatpush1.bf16.msra.mxu0 %v369
      %392 = vmatprep.subr.bf16.mxu0 0
      %393 = vmatpush1.bf16.msra.mxu0 %v368
      %394 = vmatprep.subr.bf16.mxu0 0
      %395 = vmatpush1.bf16.msra.mxu0 %v367
      %396 = vmatprep.subr.bf16.mxu0 0
      %397 = vmatpush1.bf16.msra.mxu0 %v366
      %398 = vmatprep.subr.bf16.mxu0 0
      %399 = vmatpush2.bf16.msra.mxu0 0
      %400 = vmatprep.subr.bf16.mxu0 0
      %401 = vmatpush2.bf16.msra.mxu0 0
      %402 = vmatprep.subr.bf16.mxu0 0
      %403 = vmatpush2.bf16.msra.mxu0 0
      %404 = vmatprep.subr.bf16.mxu0 0
      %405 = vmatpush2.bf16.msra.mxu0 0
      %406 = vmatprep.subr.bf16.mxu0 0
      %407 = vmatpush2.bf16.msra.mxu0 0
      %408 = vmatprep.subr.bf16.mxu0 0
      %409 = vmatpush2.bf16.msra.mxu0 0
      %410 = vmatprep.subr.bf16.mxu0 0
      %411 = vmatpush2.bf16.msra.mxu0 0
      %412 = vmatprep.subr.bf16.mxu0 0
      %413 = vmatpush2.bf16.msra.mxu0 0
      %414 = vmatprep.mubr.bf16.mxu0 0
      %415 = vmatmul.mubr.bf16.gmra.mxu0 %v307
      %v416 = vpop.f32.mrf.mxu0
      %v417 = vadd.f32 %v332, %v416
      %v418 = vpop.f32.mrf.mxu0
      %v419 = vpop.f32.mrf.mxu0
      %v420 = vadd.f32 %v332, %v419
      %v421 = vpop.f32.mrf.mxu0
      %422 = vmatprep.mubr.bf16.mxu0 0
      %423 = vmatmul.mubr.bf16.gmra.mxu0 %v308
      %v424 = vpop.f32.mrf.mxu0
      %v425 = vadd.f32 %v332, %v424
      %v426 = vpop.f32.mrf.mxu0
      %v427 = vpop.f32.mrf.mxu0
      %v428 = vadd.f32 %v332, %v427
      %v429 = vpop.f32.mrf.mxu0
      %430 = vmatprep.mubr.bf16.mxu0 0
      %431 = vmatmul.mubr.bf16.gmra.mxu0 %v309
      %v432 = vpop.f32.mrf.mxu0
      %v433 = vadd.f32 %v332, %v432
      %v434 = vpop.f32.mrf.mxu0
      %v435 = vpop.f32.mrf.mxu0
      %v436 = vadd.f32 %v332, %v435
      %v437 = vpop.f32.mrf.mxu0
      %438 = vmatprep.mubr.bf16.mxu0 0
      %439 = vmatmul.mubr.bf16.gmra.mxu0 %v310
      %v440 = vpop.f32.mrf.mxu0
      %v441 = vadd.f32 %v332, %v440
      %v442 = vpop.f32.mrf.mxu0
      %v443 = vpop.f32.mrf.mxu0
      %v444 = vadd.f32 %v332, %v443
      %v445 = vpop.f32.mrf.mxu0
      %446 = vdwg.mxu0
      %v447 = vadd.f32 %v417, %v420
      %v448 = vadd.f32 %v447, %v425
      %v449 = vadd.f32 %v448, %v428
      %v450 = vadd.f32 %v449, %v433
      %v451 = vadd.f32 %v450, %v436
      %v452 = vadd.f32 %v451, %v441
      %v453 = vadd.f32 %v452, %v444
      %v454 = vrot.slane %v453, 4
      %v455 = vadd.f32 %v453, %v454
      %v456 = vrot.slane %v455, 2
      %v457 = vadd.f32 %v455, %v456
      %v458 = vrot.slane %v457, 1
      %v459 = vadd.f32 %v457, %v458
      %v460 = vmul.f32 %v459, 0.015625
      %v461 = vsub.f32 %v417, %v460
      %v462 = vsub.f32 %v420, %v460
      %v463 = vsub.f32 %v425, %v460
      %v464 = vsub.f32 %v428, %v460
      %v465 = vsub.f32 %v433, %v460
      %v466 = vsub.f32 %v436, %v460
      %v467 = vsub.f32 %v441, %v460
      %v468 = vsub.f32 %v444, %v460
      %v469 = vmul.f32 %v461, %v461
      %v470 = vmul.f32 %v462, %v462
      %v471 = vmul.f32 %v463, %v463
      %v472 = vmul.f32 %v464, %v464
      %v473 = vmul.f32 %v465, %v465
      %v474 = vmul.f32 %v466, %v466
      %v475 = vmul.f32 %v467, %v467
      %v476 = vmul.f32 %v468, %v468
      %v477 = vadd.f32 %v469, %v470
      %v478 = vadd.f32 %v477, %v471
      %v479 = vadd.f32 %v478, %v472
      %v480 = vadd.f32 %v479, %v473
      %v481 = vadd.f32 %v480, %v474
      %v482 = vadd.f32 %v481, %v475
      %v483 = vadd.f32 %v482, %v476
      %v484 = vrot.slane %v483, 4
      %v485 = vadd.f32 %v483, %v484
      %v486 = vrot.slane %v485, 2
      %v487 = vadd.f32 %v485, %v486
      %v488 = vrot.slane %v487, 1
      %v489 = vadd.f32 %v487, %v488
      %vm490 = vcmask 1040384
      %v491 = vsel %vm490, %v459, %v489
      %492 = vst [vmem:[%s282] sm:$0x3] %v491
      %v493 = vpack.c.bf16 %v420, %v417
      %v494 = vpack.c.bf16 %v428, %v425
      %v495 = vpack.c.bf16 %v436, %v433
      %v496 = vpack.c.bf16 %v444, %v441
      %v501 = vunpack.c.l.b16 %v493
      %v502 = vunpack.c.h.b16 %v493
      %v503 = vunpack.c.l.b16 %v494
      %v504 = vunpack.c.h.b16 %v494
      %v505 = vunpack.c.l.b16 %v495
      %v506 = vunpack.c.h.b16 %v495
      %v507 = vunpack.c.l.b16 %v496
      %v508 = vunpack.c.h.b16 %v496
      %v509 = vpack.c.b16 %v501, %v501
      %v510 = vpack.c.b16 %v502, %v502
      %v511 = vpack.c.b16 %v503, %v503
      %v512 = vpack.c.b16 %v504, %v504
      %v513 = vpack.c.b16 %v505, %v505
      %v514 = vpack.c.b16 %v506, %v506
      %v515 = vpack.c.b16 %v507, %v507
      %v516 = vpack.c.b16 %v508, %v508
      %525 = vst [vmem:[%s274] sm:$0xf] %v509
      %526 = vst [vmem:[%s274 + $0x4] sm:$0xf] %v510
      %527 = vst [vmem:[%s274 + $0x8] sm:$0xf] %v511
      %528 = vst [vmem:[%s274 + $0xc] sm:$0xf] %v512
      %529 = vst [vmem:[%s274 + $0x10] sm:$0xf] %v513
      %530 = vst [vmem:[%s274 + $0x14] sm:$0xf] %v514
      %531 = vst [vmem:[%s274 + $0x18] sm:$0xf] %v515
      %532 = vst [vmem:[%s274 + $0x1c] sm:$0xf] %v516
      %s533 = smul.u32 8, %s22
      %p534 = scmp.lt.s32.totalorder %s21, 1
      %s535 = scalar_select %p534, %s21, 1
      %p536 = scmp.lt.s32.totalorder %s533, 7
      %s537 = scalar_select %p536, %s533, 7
      %s538 = smul.addr %s535, 8
      %s539 = sadd.s32 %s537, %s538
      %s540 = smul.addr %s539, 4
      %s541 = scalar_lea.vmem %s4, %s540
      %p542 = scmp.lt.s32.totalorder %s21, 1
      %s543 = scalar_select %p542, %s21, 1
      %p544 = scmp.lt.s32.totalorder %s22, 0
      %s545 = scalar_select %p544, %s22, 0
      %s546 = sadd.s32 %s545, %s543
      %s547 = smul.addr %s546, 2
      %s548 = scalar_lea.vmem %s5, %s547
      // Predicated region
      $region37: #{bottleneck_pallas.3} parent=35 // pred_check
        %p549 = pneg %p140
      $region38: #{bottleneck_pallas.3} parent=35 // pred_check_branch
        %551 = sbr.rel (%p549) target = $region40
      $region39: #{bottleneck_pallas.3} parent=35 // pred_region
        %s552 = smul.u32 8, %s22
      $region40: #{bottleneck_pallas.3} parent=35 // pred_fallthru
        _
      // Predicated region
      $region41: #{bottleneck_pallas.3} parent=35 // pred_check
        %p553 = pneg %p168
      $region42: #{bottleneck_pallas.3} parent=35 // pred_check_branch
        %555 = sbr.rel (%p553) target = $region44
      $region43: #{bottleneck_pallas.3} parent=35 // pred_region
        _
      $region44: #{bottleneck_pallas.3} parent=35 // pred_fallthru
        _
    $region36: #{bottleneck_pallas.3} parent=5 // pred_fallthru
      _
    %p556 = scmp.le.s32.totalorder 2, %s12
    // Predicated region
    $region45: #{bottleneck_pallas.3} parent=5 // pred_check
      %p557 = pneg %p556
    $region46: #{bottleneck_pallas.3} parent=5 // pred_check_branch
      %559 = sbr.rel (%p557) target = $region48
    $region47: #{bottleneck_pallas.3} parent=5 // pred_region
      %s560 = ssub.s32 %s12, 2
      // Predicated region
      $region49: #{bottleneck_pallas.3} parent=47 // pred_check
        %p561 = pneg %p146
      $region50: #{bottleneck_pallas.3} parent=47 // pred_check_branch
        %563 = sbr.rel (%p561) target = $region52
      $region51: #{bottleneck_pallas.3} parent=47 // pred_region
        %s564 = smul.u32 8, %s24
        %p565 = scmp.lt.s32.totalorder %s23, 1
        %s566 = scalar_select %p565, %s23, 1
        %p567 = scmp.lt.s32.totalorder %s564, 7
        %s568 = scalar_select %p567, %s564, 7
        %s569 = smul.addr %s566, 8
        %s570 = sadd.s32 %s568, %s569
        %s571 = smul.addr %s570, 4
        %s572 = scalar_lea.vmem %s4, %s571
      $region52: #{bottleneck_pallas.3} parent=47 // pred_fallthru
        _
      // Predicated region
      $region53: #{bottleneck_pallas.3} parent=47 // pred_check
        %p573 = pneg %p174
      $region54: #{bottleneck_pallas.3} parent=47 // pred_check_branch
        %575 = sbr.rel (%p573) target = $region56
      $region55: #{bottleneck_pallas.3} parent=47 // pred_region
        %p576 = scmp.lt.s32.totalorder %s23, 1
        %s577 = scalar_select %p576, %s23, 1
        %p578 = scmp.lt.s32.totalorder %s24, 0
        %s579 = scalar_select %p578, %s24, 0
        %s580 = sadd.s32 %s579, %s577
        %s581 = smul.addr %s580, 2
        %s582 = scalar_lea.vmem %s5, %s581
      $region56: #{bottleneck_pallas.3} parent=47 // pred_fallthru
        _
    $region48: #{bottleneck_pallas.3} parent=5 // pred_fallthru
      _
  $region6: #{bottleneck_pallas.3} parent=0 // loop_footer
    %s16 = sadd.s32 1, %s12
  $region7: #{bottleneck_pallas.3} parent=0 // loop_footer_branch
    %11 = sbr.rel target = $region3
  $region8: #{bottleneck_pallas.3} parent=0 // loop_exit
    _

// kernel: bottleneck_pallas.5
$region0: #{bottleneck_pallas.5}
  #allocation0 [shape = 'u32[]', space=smem, size = 0x4, offset = 0x4, fixed_abs, tag = 'smem constant byte address 0x4 - core index']
  #allocation1 [shape = 'u32[144,128]{1,0:T(1,128)}', space=vmem, size = 0x12000, scoped, tag = 'internal scratch']
  %s0 = inlined_call_operand.vmem [shape: f32[2,64,128], index: 0, kind: input, shape index: {}, may-alias: {0,5}]
  %s1 = inlined_call_operand.vmem [shape: bf16[2,64,128], index: 1, kind: input, shape index: {}]
  %s2 = inlined_call_operand.vmem [shape: f32[1,128], index: 2, kind: input, shape index: {}]
  %s3 = inlined_call_operand.vmem [shape: bf16[128,128], index: 3, kind: input, shape index: {}]
  %s4 = inlined_call_operand.vmem [shape: f32[1,128], index: 4, kind: input, shape index: {}]
  %s5 = inlined_call_operand.vmem [shape: f32[2,64,128], index: 5, kind: output, shape index: {}, may-alias: {0,5}]
  %s6 = sld [smem:[#allocation0]]
  $region53: #{bottleneck_pallas.5} parent=0
    _
  %s8 = ssub.s32 1, %s6
  %s9 = scalar_select 0, %s8, %s6
  loop: start=0, step=1, limit=4
  $region2: #{bottleneck_pallas.5} parent=0 // loop_pre_header
    _
  $region3: #{bottleneck_pallas.5} parent=0 // loop_header
    %s11 = sphi 0, %s15
    %p12 = scmp.ge.s32.totalorder %s11, 4
    %s18 = sphi 0, %s30
    %s19 = sphi 0, %s26
    %s20 = sphi 0, %s18
    %s21 = sphi 0, %s19
    %s22 = sphi 0, %s20
    %s23 = sphi 0, %s21
    %s35 = sphi 0, %s37
    %s38 = sphi 0, %s35
    %s39 = sphi 0, %s38
    %s55 = sphi 0, %s39
    %s63 = sphi 0, %s65
    %s66 = sphi 0, %s63
    %s67 = sphi 0, %s66
    %s83 = sphi 0, %s67
    %s87 = sphi 0, %s87
    %s89 = sphi 0, %s87
    %s90 = sphi 0, %s89
    %s104 = sphi 0, %s90
    %s108 = sphi 0, %s108
    %s110 = sphi 0, %s108
    %s111 = sphi 0, %s110
    %s125 = sphi 0, %s111
    %s129 = sphi 0, %s129
    %s131 = sphi 0, %s129
    %s132 = sphi 0, %s131
    %s146 = sphi 0, %s132
    %s154 = sphi 0, %s156
    %s157 = sphi 0, %s154
    %s158 = sphi 0, %s157
    %s174 = sphi 0, %s158
  $region4: #{bottleneck_pallas.5} parent=0 // loop_header_branch
    %14 = sbr.rel (%p12) target = $region8
  $region5: #{bottleneck_pallas.5} parent=0 // loop_body
    %s16 = ssub.s32 %s11, 1
    %s17 = ssub.s32 %s11, 2
    %s24 = sadd.s32 1, %s19
    %p25 = scmp.ge.s32.totalorder %s24, 1
    %s26 = scalar_select %p25, 0, %s24
    %s27 = sadd.s32 1, %s18
    %s28 = scalar_select %p25, %s27, %s18
    %p29 = scmp.ge.s32.totalorder %s28, 2
    %s30 = scalar_select %p29, 0, %s28
    %s31 = ssub.s32 %s18, %s30
    %s32 = ssub.s32 %s19, %s26
    %s33 = sor.u32 %s31, %s32
    %p34 = scmp.eq.s32.totalorder %s33, 0
    %s36 = sadd.s32 %s35, 1
    %s37 = scalar_select %p34, %s35, %s36
    %p40 = pneg %p34
    %p41 = scmp.eq.s32.totalorder %s11, 1
    %p42 = por %p40, %p41
    %p43 = scmp.ne.s32.totalorder %s35, %s38
    %p44 = scmp.eq.s32.totalorder %s11, 0
    %p45 = por %p43, %p44
    %p46 = scmp.ne.s32.totalorder %s35, %s38
    %p47 = scmp.eq.s32.totalorder %s16, 1
    %p48 = por %p46, %p47
    %p49 = scmp.ne.s32.totalorder %s38, %s39
    %p50 = scmp.eq.s32.totalorder %s16, 0
    %p51 = por %p49, %p50
    %p52 = scmp.ne.s32.totalorder %s38, %s39
    %p53 = scmp.eq.s32.totalorder %s17, 1
    %p54 = por %p52, %p53
    %p56 = scmp.ne.s32.totalorder %s39, %s55
    %p57 = scmp.eq.s32.totalorder %s17, 0
    %p58 = por %p56, %p57
    %s59 = ssub.s32 %s18, %s30
    %s60 = ssub.s32 %s19, %s26
    %s61 = sor.u32 %s59, %s60
    %p62 = scmp.eq.s32.totalorder %s61, 0
    %s64 = sadd.s32 %s63, 1
    %s65 = scalar_select %p62, %s63, %s64
    %p68 = pneg %p62
    %p69 = scmp.eq.s32.totalorder %s11, 1
    %p70 = por %p68, %p69
    %p71 = scmp.ne.s32.totalorder %s63, %s66
    %p72 = scmp.eq.s32.totalorder %s11, 0
    %p73 = por %p71, %p72
    %p74 = scmp.ne.s32.totalorder %s63, %s66
    %p75 = scmp.eq.s32.totalorder %s16, 1
    %p76 = por %p74, %p75
    %p77 = scmp.ne.s32.totalorder %s66, %s67
    %p78 = scmp.eq.s32.totalorder %s16, 0
    %p79 = por %p77, %p78
    %p80 = scmp.ne.s32.totalorder %s66, %s67
    %p81 = scmp.eq.s32.totalorder %s17, 1
    %p82 = por %p80, %p81
    %p84 = scmp.ne.s32.totalorder %s67, %s83
    %p85 = scmp.eq.s32.totalorder %s17, 0
    %p86 = por %p84, %p85
    %s88 = sadd.s32 %s87, 1
    %p91 = scmp.eq.s32.totalorder %s11, 1
    %p92 = scmp.ne.s32.totalorder %s87, %s89
    %p93 = scmp.eq.s32.totalorder %s11, 0
    %p94 = por %p92, %p93
    %p95 = scmp.ne.s32.totalorder %s87, %s89
    %p96 = scmp.eq.s32.totalorder %s16, 1
    %p97 = por %p95, %p96
    %p98 = scmp.ne.s32.totalorder %s89, %s90
    %p99 = scmp.eq.s32.totalorder %s16, 0
    %p100 = por %p98, %p99
    %p101 = scmp.ne.s32.totalorder %s89, %s90
    %p102 = scmp.eq.s32.totalorder %s17, 1
    %p103 = por %p101, %p102
    %p105 = scmp.ne.s32.totalorder %s90, %s104
    %p106 = scmp.eq.s32.totalorder %s17, 0
    %p107 = por %p105, %p106
    %s109 = sadd.s32 %s108, 1
    %p112 = scmp.eq.s32.totalorder %s11, 1
    %p113 = scmp.ne.s32.totalorder %s108, %s110
    %p114 = scmp.eq.s32.totalorder %s11, 0
    %p115 = por %p113, %p114
    %p116 = scmp.ne.s32.totalorder %s108, %s110
    %p117 = scmp.eq.s32.totalorder %s16, 1
    %p118 = por %p116, %p117
    %p119 = scmp.ne.s32.totalorder %s110, %s111
    %p120 = scmp.eq.s32.totalorder %s16, 0
    %p121 = por %p119, %p120
    %p122 = scmp.ne.s32.totalorder %s110, %s111
    %p123 = scmp.eq.s32.totalorder %s17, 1
    %p124 = por %p122, %p123
    %p126 = scmp.ne.s32.totalorder %s111, %s125
    %p127 = scmp.eq.s32.totalorder %s17, 0
    %p128 = por %p126, %p127
    %s130 = sadd.s32 %s129, 1
    %p133 = scmp.eq.s32.totalorder %s11, 1
    %p134 = scmp.ne.s32.totalorder %s129, %s131
    %p135 = scmp.eq.s32.totalorder %s11, 0
    %p136 = por %p134, %p135
    %p137 = scmp.ne.s32.totalorder %s129, %s131
    %p138 = scmp.eq.s32.totalorder %s16, 1
    %p139 = por %p137, %p138
    %p140 = scmp.ne.s32.totalorder %s131, %s132
    %p141 = scmp.eq.s32.totalorder %s16, 0
    %p142 = por %p140, %p141
    %p143 = scmp.ne.s32.totalorder %s131, %s132
    %p144 = scmp.eq.s32.totalorder %s17, 1
    %p145 = por %p143, %p144
    %p147 = scmp.ne.s32.totalorder %s132, %s146
    %p148 = scmp.eq.s32.totalorder %s17, 0
    %p149 = por %p147, %p148
    %s150 = ssub.s32 %s18, %s30
    %s151 = ssub.s32 %s19, %s26
    %s152 = sor.u32 %s150, %s151
    %p153 = scmp.eq.s32.totalorder %s152, 0
    %s155 = sadd.s32 %s154, 1
    %s156 = scalar_select %p153, %s154, %s155
    %p159 = pneg %p153
    %p160 = scmp.eq.s32.totalorder %s11, 1
    %p161 = por %p159, %p160
    %p162 = scmp.ne.s32.totalorder %s154, %s157
    %p163 = scmp.eq.s32.totalorder %s11, 0
    %p164 = por %p162, %p163
    %p165 = scmp.ne.s32.totalorder %s154, %s157
    %p166 = scmp.eq.s32.totalorder %s16, 1
    %p167 = por %p165, %p166
    %p168 = scmp.ne.s32.totalorder %s157, %s158
    %p169 = scmp.eq.s32.totalorder %s16, 0
    %p170 = por %p168, %p169
    %p171 = scmp.ne.s32.totalorder %s157, %s158
    %p172 = scmp.eq.s32.totalorder %s17, 1
    %p173 = por %p171, %p172
    %p175 = scmp.ne.s32.totalorder %s158, %s174
    %p176 = scmp.eq.s32.totalorder %s17, 0
    %p177 = por %p175, %p176
    %p178 = scmp.le.s32.totalorder 1, %s11
    %p179 = scmp.lt.s32.totalorder %s11, 3
    %p180 = pnand %p178, %p179
    %p181 = pneg %p180
    // Predicated region
    $region9: #{bottleneck_pallas.5} parent=5 // pred_check
      _
    $region10: #{bottleneck_pallas.5} parent=5 // pred_check_branch
      %183 = sbr.rel (%p180) target = $region12
    $region11: #{bottleneck_pallas.5} parent=5 // pred_region
      %s184 = ssub.s32 %s11, 1
      // Predicated region
      $region13: #{bottleneck_pallas.5} parent=11 // pred_check
        %p185 = pneg %p100
      $region14: #{bottleneck_pallas.5} parent=11 // pred_check_branch
        %187 = sbr.rel (%p185) target = $region16
      $region15: #{bottleneck_pallas.5} parent=11 // pred_region
        _
      $region16: #{bottleneck_pallas.5} parent=11 // pred_fallthru
        _
      // Predicated region
      $region17: #{bottleneck_pallas.5} parent=11 // pred_check
        %p188 = pneg %p121
      $region18: #{bottleneck_pallas.5} parent=11 // pred_check_branch
        %190 = sbr.rel (%p188) target = $region20
      $region19: #{bottleneck_pallas.5} parent=11 // pred_region
        _
      $region20: #{bottleneck_pallas.5} parent=11 // pred_fallthru
        _
      // Predicated region
      $region21: #{bottleneck_pallas.5} parent=11 // pred_check
        %p191 = pneg %p142
      $region22: #{bottleneck_pallas.5} parent=11 // pred_check_branch
        %193 = sbr.rel (%p191) target = $region24
      $region23: #{bottleneck_pallas.5} parent=11 // pred_region
        _
      $region24: #{bottleneck_pallas.5} parent=11 // pred_fallthru
        _
    $region12: #{bottleneck_pallas.5} parent=5 // pred_fallthru
      _
    %p194 = scmp.lt.s32.totalorder %s11, 2
    // Predicated region
    $region25: #{bottleneck_pallas.5} parent=5 // pred_check
      %p195 = pneg %p194
    $region26: #{bottleneck_pallas.5} parent=5 // pred_check_branch
      %197 = sbr.rel (%p195) target = $region28
    $region27: #{bottleneck_pallas.5} parent=5 // pred_region
      // Predicated region
      $region29: #{bottleneck_pallas.5} parent=27 // pred_check
        %p198 = pneg %p45
      $region30: #{bottleneck_pallas.5} parent=27 // pred_check_branch
        %200 = sbr.rel (%p198) target = $region32
      $region31: #{bottleneck_pallas.5} parent=27 // pred_region
        %s201 = smul.u32 8, %s19
        %p202 = scmp.lt.s32.totalorder %s18, 1
        %s203 = scalar_select %p202, %s18, 1
        %p204 = scmp.lt.s32.totalorder %s201, 7
        %s205 = scalar_select %p204, %s201, 7
        %s206 = smul.addr %s203, 8
        %s207 = sadd.s32 %s205, %s206
        %s208 = smul.addr %s207, 8
        %s209 = scalar_lea.vmem %s0, %s208
        %s210 = smul.u32 8, %s19
      $region32: #{bottleneck_pallas.5} parent=27 // pred_fallthru
        _
      // Predicated region
      $region33: #{bottleneck_pallas.5} parent=27 // pred_check
        %p211 = pneg %p73
      $region34: #{bottleneck_pallas.5} parent=27 // pred_check_branch
        %213 = sbr.rel (%p211) target = $region36
      $region35: #{bottleneck_pallas.5} parent=27 // pred_region
        %s214 = smul.u32 8, %s19
        %p215 = scmp.lt.s32.totalorder %s18, 1
        %s216 = scalar_select %p215, %s18, 1
        %p217 = scmp.lt.s32.totalorder %s214, 7
        %s218 = scalar_select %p217, %s214, 7
        %s219 = smul.addr %s216, 8
        %s220 = sadd.s32 %s218, %s219
        %s221 = smul.addr %s220, 4
        %s222 = scalar_lea.vmem %s1, %s221
        %s223 = smul.u32 8, %s19
      $region36: #{bottleneck_pallas.5} parent=27 // pred_fallthru
        _
    $region28: #{bottleneck_pallas.5} parent=5 // pred_fallthru
      _
    %p224 = scmp.le.s32.totalorder 1, %s11
    %p225 = scmp.lt.s32.totalorder %s11, 3
    %p226 = pnand %p224, %p225
    %p227 = pneg %p226
    // Predicated region
    $region37: #{bottleneck_pallas.5} parent=5 // pred_check
      _
    $region38: #{bottleneck_pallas.5} parent=5 // pred_check_branch
      %229 = sbr.rel (%p226) target = $region40
    $region39: #{bottleneck_pallas.5} parent=5 // pred_region
      %s230 = ssub.s32 %s11, 1
      %s231 = smul.u32 8, %s21
      %p232 = scmp.lt.s32.totalorder %s20, 1
      %s233 = scalar_select %p232, %s20, 1
      %p234 = scmp.lt.s32.totalorder %s231, 7
      %s235 = scalar_select %p234, %s231, 7
      %s236 = smul.addr %s233, 8
      %s237 = sadd.s32 %s235, %s236
      %s238 = smul.addr %s237, 8
      %s239 = scalar_lea.vmem %s0, %s238
      %p240 = pneg %p51
      %p241 = pneg %p48
      %s242 = smul.u32 8, %s21
      %p243 = scmp.lt.s32.totalorder %s20, 1
      %s244 = scalar_select %p243, %s20, 1
      %p245 = scmp.lt.s32.totalorder %s242, 7
      %s246 = scalar_select %p245, %s242, 7
      %s247 = smul.addr %s244, 8
      %s248 = sadd.s32 %s246, %s247
      %s249 = smul.addr %s248, 4
      %s250 = scalar_lea.vmem %s1, %s249
      %p251 = pneg %p79
      %p252 = pneg %p76
      %p253 = pneg %p100
      %p254 = pneg %p97
      %p255 = pneg %p121
      %p256 = pneg %p118
      %p257 = pneg %p142
      %p258 = pneg %p139
      %p259 = pneg %p170
      %p260 = pneg %p167
      %s261 = smul.u32 8, %s21
      %p262 = scmp.lt.s32.totalorder %s20, 1
      %s263 = scalar_select %p262, %s20, 1
      %p264 = scmp.lt.s32.totalorder %s261, 7
      %s265 = scalar_select %p264, %s261, 7
      %s266 = smul.addr %s263, 8
      %s267 = sadd.s32 %s265, %s266
      %s268 = smul.addr %s267, 8
      %s269 = scalar_lea.vmem %s5, %s268
      %s270 = smul.u32 8, %s21
      %p271 = scmp.lt.s32.totalorder %s20, 1
      %s272 = scalar_select %p271, %s20, 1
      %p273 = scmp.lt.s32.totalorder %s270, 7
      %s274 = scalar_select %p273, %s270, 7
      %s275 = smul.addr %s272, 8
      %s276 = sadd.s32 %s274, %s275
      %s277 = smul.addr %s276, 8
      %s278 = scalar_lea.vmem %s0, %s277
      %s279 = smul.u32 8, %s21
      %s280 = smul.u32 8, %s21
      %p281 = scmp.lt.s32.totalorder %s20, 1
      %s282 = scalar_select %p281, %s20, 1
      %p283 = scmp.lt.s32.totalorder %s280, 7
      %s284 = scalar_select %p283, %s280, 7
      %s285 = smul.addr %s282, 8
      %s286 = sadd.s32 %s284, %s285
      %s287 = smul.addr %s286, 4
      %s288 = scalar_lea.vmem %s1, %s287
      %s289 = smul.u32 8, %s21
      %s290 = smul.u32 8, %s21
      %p291 = scmp.lt.s32.totalorder %s20, 1
      %s292 = scalar_select %p291, %s20, 1
      %p293 = scmp.lt.s32.totalorder %s290, 7
      %s294 = scalar_select %p293, %s290, 7
      %s295 = smul.addr %s292, 8
      %s296 = sadd.s32 %s294, %s295
      %s297 = smul.addr %s296, 8
      %s298 = scalar_lea.vmem %s5, %s297
      %s299 = smul.u32 8, %s21
      %v301 = vld [vmem:[%s288] sm:$0xf]
      %v302 = vld [vmem:[%s288 + $0x4] sm:$0xf]
      %v303 = vld [vmem:[%s288 + $0x8] sm:$0xf]
      %v304 = vld [vmem:[%s288 + $0xc] sm:$0xf]
      %v305 = vld [vmem:[%s288 + $0x10] sm:$0xf]
      %v306 = vld [vmem:[%s288 + $0x14] sm:$0xf]
      %v307 = vld [vmem:[%s288 + $0x18] sm:$0xf]
      %v308 = vld [vmem:[%s288 + $0x1c] sm:$0xf]
      %v309 = vunpack.c.l.bf16 %v301
      %v310 = vunpack.c.l.bf16 %v302
      %v311 = vunpack.c.l.bf16 %v303
      %v312 = vunpack.c.l.bf16 %v304
      %v313 = vunpack.c.l.bf16 %v305
      %v314 = vunpack.c.l.bf16 %v306
      %v315 = vunpack.c.l.bf16 %v307
      %v316 = vunpack.c.l.bf16 %v308
      %v317 = vld [vmem:[%s2] sm:$0x1]
      %v319 = vlaneseq
      %v320 = vshrl.u32 %v319, 7
      %v321 = vsub.s32 0, %v320
      %v322 = vrot.slane %v317, %v321
      %v324 = vmul.f32 %v309, %v322
      %v325 = vmul.f32 %v310, %v322
      %v326 = vmul.f32 %v311, %v322
      %v327 = vmul.f32 %v312, %v322
      %v328 = vmul.f32 %v313, %v322
      %v329 = vmul.f32 %v314, %v322
      %v330 = vmul.f32 %v315, %v322
      %v331 = vmul.f32 %v316, %v322
      %v332 = vpack.c.bf16 %v325, %v324
      %v333 = vpack.c.bf16 %v327, %v326
      %v334 = vpack.c.bf16 %v329, %v328
      %v335 = vpack.c.bf16 %v331, %v330
      %v336 = vld [vmem:[%s3] sm:$0xf]
      %v337 = vld [vmem:[%s3 + $0x4] sm:$0xf]
      %v338 = vld [vmem:[%s3 + $0x8] sm:$0xf]
      %v339 = vld [vmem:[%s3 + $0xc] sm:$0xf]
      %v340 = vld [vmem:[%s3 + $0x10] sm:$0xf]
      %v341 = vld [vmem:[%s3 + $0x14] sm:$0xf]
      %v342 = vld [vmem:[%s3 + $0x18] sm:$0xf]
      %v343 = vld [vmem:[%s3 + $0x1c] sm:$0xf]
      %v344 = vld [vmem:[%s3 + $0x20] sm:$0xf]
      %v345 = vld [vmem:[%s3 + $0x24] sm:$0xf]
      %v346 = vld [vmem:[%s3 + $0x28] sm:$0xf]
      %v347 = vld [vmem:[%s3 + $0x2c] sm:$0xf]
      %v348 = vld [vmem:[%s3 + $0x30] sm:$0xf]
      %v349 = vld [vmem:[%s3 + $0x34] sm:$0xf]
      %v350 = vld [vmem:[%s3 + $0x38] sm:$0xf]
      %v351 = vld [vmem:[%s3 + $0x3c] sm:$0xf]
      %v352 = vld [vmem:[%s4] sm:$0x1]
      %v354 = vlaneseq
      %v355 = vshrl.u32 %v354, 7
      %v356 = vsub.s32 0, %v355
      %v357 = vrot.slane %v352, %v356
      %v375 = vunpack.c.l.b16 %v336
      %v376 = vunpack.c.l.b16 %v337
      %v377 = vunpack.c.l.b16 %v338
      %v378 = vunpack.c.l.b16 %v339
      %v379 = vunpack.c.l.b16 %v340
      %v380 = vunpack.c.l.b16 %v341
      %v381 = vunpack.c.l.b16 %v342
      %v382 = vunpack.c.l.b16 %v343
      %v383 = vunpack.c.l.b16 %v344
      %v384 = vunpack.c.l.b16 %v345
      %v385 = vunpack.c.l.b16 %v346
      %v386 = vunpack.c.l.b16 %v347
      %v387 = vunpack.c.l.b16 %v348
      %v388 = vunpack.c.l.b16 %v349
      %v389 = vunpack.c.l.b16 %v350
      %v390 = vunpack.c.l.b16 %v351
      %v391 = vpack.c.b16 %v376, %v375
      %v392 = vpack.c.b16 %v378, %v377
      %v393 = vpack.c.b16 %v380, %v379
      %v394 = vpack.c.b16 %v382, %v381
      %v395 = vpack.c.b16 %v384, %v383
      %v396 = vpack.c.b16 %v386, %v385
      %v397 = vpack.c.b16 %v388, %v387
      %v398 = vpack.c.b16 %v390, %v389
      %407 = vmatprep.subr.bf16.mxu0 0
      %408 = vmatpush1.bf16.msra.mxu0 %v398
      %409 = vmatprep.subr.bf16.mxu0 0
      %410 = vmatpush1.bf16.msra.mxu0 %v397
      %411 = vmatprep.subr.bf16.mxu0 0
      %412 = vmatpush1.bf16.msra.mxu0 %v396
      %413 = vmatprep.subr.bf16.mxu0 0
      %414 = vmatpush1.bf16.msra.mxu0 %v395
      %415 = vmatprep.subr.bf16.mxu0 0
      %416 = vmatpush1.bf16.msra.mxu0 %v394
      %417 = vmatprep.subr.bf16.mxu0 0
      %418 = vmatpush1.bf16.msra.mxu0 %v393
      %419 = vmatprep.subr.bf16.mxu0 0
      %420 = vmatpush1.bf16.msra.mxu0 %v392
      %421 = vmatprep.subr.bf16.mxu0 0
      %422 = vmatpush1.bf16.msra.mxu0 %v391
      %423 = vmatprep.subr.bf16.mxu0 0
      %424 = vmatpush2.bf16.msra.mxu0 0
      %425 = vmatprep.subr.bf16.mxu0 0
      %426 = vmatpush2.bf16.msra.mxu0 0
      %427 = vmatprep.subr.bf16.mxu0 0
      %428 = vmatpush2.bf16.msra.mxu0 0
      %429 = vmatprep.subr.bf16.mxu0 0
      %430 = vmatpush2.bf16.msra.mxu0 0
      %431 = vmatprep.subr.bf16.mxu0 0
      %432 = vmatpush2.bf16.msra.mxu0 0
      %433 = vmatprep.subr.bf16.mxu0 0
      %434 = vmatpush2.bf16.msra.mxu0 0
      %435 = vmatprep.subr.bf16.mxu0 0
      %436 = vmatpush2.bf16.msra.mxu0 0
      %437 = vmatprep.subr.bf16.mxu0 0
      %438 = vmatpush2.bf16.msra.mxu0 0
      %439 = vmatprep.mubr.bf16.mxu0 0
      %440 = vmatmul.mubr.bf16.gmra.mxu0 %v332
      %v441 = vpop.f32.mrf.mxu0
      %v442 = vadd.f32 %v357, %v441
      %v443 = vpop.f32.mrf.mxu0
      %v444 = vpop.f32.mrf.mxu0
      %v445 = vadd.f32 %v357, %v444
      %v446 = vpop.f32.mrf.mxu0
      %447 = vmatprep.mubr.bf16.mxu0 0
      %448 = vmatmul.mubr.bf16.gmra.mxu0 %v333
      %v449 = vpop.f32.mrf.mxu0
      %v450 = vadd.f32 %v357, %v449
      %v451 = vpop.f32.mrf.mxu0
      %v452 = vpop.f32.mrf.mxu0
      %v453 = vadd.f32 %v357, %v452
      %v454 = vpop.f32.mrf.mxu0
      %455 = vmatprep.mubr.bf16.mxu0 0
      %456 = vmatmul.mubr.bf16.gmra.mxu0 %v334
      %v457 = vpop.f32.mrf.mxu0
      %v458 = vadd.f32 %v357, %v457
      %v459 = vpop.f32.mrf.mxu0
      %v460 = vpop.f32.mrf.mxu0
      %v461 = vadd.f32 %v357, %v460
      %v462 = vpop.f32.mrf.mxu0
      %463 = vmatprep.mubr.bf16.mxu0 0
      %464 = vmatmul.mubr.bf16.gmra.mxu0 %v335
      %v465 = vpop.f32.mrf.mxu0
      %v466 = vadd.f32 %v357, %v465
      %v467 = vpop.f32.mrf.mxu0
      %v468 = vpop.f32.mrf.mxu0
      %v469 = vadd.f32 %v357, %v468
      %v470 = vpop.f32.mrf.mxu0
      %471 = vdwg.mxu0
      %v472 = vld [vmem:[%s278] sm:$0xff]
      %v473 = vld [vmem:[%s278 + $0x8] sm:$0xff]
      %v474 = vld [vmem:[%s278 + $0x10] sm:$0xff]
      %v475 = vld [vmem:[%s278 + $0x18] sm:$0xff]
      %v476 = vld [vmem:[%s278 + $0x20] sm:$0xff]
      %v477 = vld [vmem:[%s278 + $0x28] sm:$0xff]
      %v478 = vld [vmem:[%s278 + $0x30] sm:$0xff]
      %v479 = vld [vmem:[%s278 + $0x38] sm:$0xff]
      %v480 = vadd.f32 %v472, %v442
      %v481 = vadd.f32 %v473, %v445
      %v482 = vadd.f32 %v474, %v450
      %v483 = vadd.f32 %v475, %v453
      %v484 = vadd.f32 %v476, %v458
      %v485 = vadd.f32 %v477, %v461
      %v486 = vadd.f32 %v478, %v466
      %v487 = vadd.f32 %v479, %v469
      %488 = vst [vmem:[%s298] sm:$0xff] %v480
      %489 = vst [vmem:[%s298 + $0x8] sm:$0xff] %v481
      %490 = vst [vmem:[%s298 + $0x10] sm:$0xff] %v482
      %491 = vst [vmem:[%s298 + $0x18] sm:$0xff] %v483
      %492 = vst [vmem:[%s298 + $0x20] sm:$0xff] %v484
      %493 = vst [vmem:[%s298 + $0x28] sm:$0xff] %v485
      %494 = vst [vmem:[%s298 + $0x30] sm:$0xff] %v486
      %495 = vst [vmem:[%s298 + $0x38] sm:$0xff] %v487
      %s496 = smul.u32 8, %s21
      %p497 = scmp.lt.s32.totalorder %s20, 1
      %s498 = scalar_select %p497, %s20, 1
      %p499 = scmp.lt.s32.totalorder %s496, 7
      %s500 = scalar_select %p499, %s496, 7
      %s501 = smul.addr %s498, 8
      %s502 = sadd.s32 %s500, %s501
      %s503 = smul.addr %s502, 8
      %s504 = scalar_lea.vmem %s5, %s503
      // Predicated region
      $region41: #{bottleneck_pallas.5} parent=39 // pred_check
        %p505 = pneg %p167
      $region42: #{bottleneck_pallas.5} parent=39 // pred_check_branch
        %507 = sbr.rel (%p505) target = $region44
      $region43: #{bottleneck_pallas.5} parent=39 // pred_region
        %s508 = smul.u32 8, %s21
      $region44: #{bottleneck_pallas.5} parent=39 // pred_fallthru
        _
    $region40: #{bottleneck_pallas.5} parent=5 // pred_fallthru
      _
    %p509 = scmp.le.s32.totalorder 2, %s11
    // Predicated region
    $region45: #{bottleneck_pallas.5} parent=5 // pred_check
      %p510 = pneg %p509
    $region46: #{bottleneck_pallas.5} parent=5 // pred_check_branch
      %512 = sbr.rel (%p510) target = $region48
    $region47: #{bottleneck_pallas.5} parent=5 // pred_region
      %s513 = ssub.s32 %s11, 2
      // Predicated region
      $region49: #{bottleneck_pallas.5} parent=47 // pred_check
        %p514 = pneg %p173
      $region50: #{bottleneck_pallas.5} parent=47 // pred_check_branch
        %516 = sbr.rel (%p514) target = $region52
      $region51: #{bottleneck_pallas.5} parent=47 // pred_region
        %s517 = smul.u32 8, %s23
        %p518 = scmp.lt.s32.totalorder %s22, 1
        %s519 = scalar_select %p518, %s22, 1
        %p520 = scmp.lt.s32.totalorder %s517, 7
        %s521 = scalar_select %p520, %s517, 7
        %s522 = smul.addr %s519, 8
        %s523 = sadd.s32 %s521, %s522
        %s524 = smul.addr %s523, 8
        %s525 = scalar_lea.vmem %s5, %s524
      $region52: #{bottleneck_pallas.5} parent=47 // pred_fallthru
        _
    $region48: #{bottleneck_pallas.5} parent=5 // pred_fallthru
      _
  $region6: #{bottleneck_pallas.5} parent=0 // loop_footer
    %s15 = sadd.s32 1, %s11
  $region7: #{bottleneck_pallas.5} parent=0 // loop_footer_branch
    %10 = sbr.rel target = $region3
  $region8: #{bottleneck_pallas.5} parent=0 // loop_exit
    _

// kernel: bottleneck_pallas.4
$region0: #{bottleneck_pallas.4}
  #allocation0 [shape = 'u32[]', space=smem, size = 0x4, offset = 0x4, fixed_abs, tag = 'smem constant byte address 0x4 - core index']
  #allocation1 [shape = 'u32[144,128]{1,0:T(1,128)}', space=vmem, size = 0x12000, scoped, tag = 'internal scratch']
  %s0 = inlined_call_operand.vmem [shape: bf16[2,64,128], index: 0, kind: input, shape index: {}]
  %s1 = inlined_call_operand.vmem [shape: f32[1,128], index: 1, kind: input, shape index: {}]
  %s2 = inlined_call_operand.vmem [shape: f32[1,128], index: 2, kind: input, shape index: {}]
  %s3 = inlined_call_operand.vmem [shape: bf16[9,64,1], index: 3, kind: input, shape index: {}]
  %s4 = inlined_call_operand.vmem [shape: bf16[1152,128], index: 4, kind: input, shape index: {}]
  %s5 = inlined_call_operand.vmem [shape: f32[1,128], index: 5, kind: input, shape index: {}]
  %s6 = inlined_call_operand.vmem [shape: bf16[2,64,128], index: 6, kind: output, shape index: {0}]
  %s7 = inlined_call_operand.vmem [shape: f32[2,2,128], index: 7, kind: output, shape index: {1}]
  %8 = xla_tuple %s6, %s7
  %s9 = sld [smem:[#allocation0]]
  $region65: #{bottleneck_pallas.4} parent=0
    _
  %s11 = ssub.s32 1, %s9
  %s12 = scalar_select 0, %s11, %s9
  loop: start=0, step=1, limit=4
  $region2: #{bottleneck_pallas.4} parent=0 // loop_pre_header
    _
  $region3: #{bottleneck_pallas.4} parent=0 // loop_header
    %s14 = sphi 0, %s18
    %p15 = scmp.ge.s32.totalorder %s14, 4
    %s24 = sphi 0, %s26
    %s27 = sphi 0, %s24
    %s28 = sphi 0, %s27
    %s44 = sphi 0, %s28
    %s48 = sphi 0, %s48
    %s50 = sphi 0, %s48
    %s51 = sphi 0, %s50
    %s65 = sphi 0, %s51
    %s69 = sphi 0, %s69
    %s71 = sphi 0, %s69
    %s72 = sphi 0, %s71
    %s86 = sphi 0, %s72
    %s90 = sphi 0, %s90
    %s92 = sphi 0, %s90
    %s93 = sphi 0, %s92
    %s107 = sphi 0, %s93
    %s111 = sphi 0, %s111
    %s113 = sphi 0, %s111
    %s114 = sphi 0, %s113
    %s128 = sphi 0, %s114
    %s132 = sphi 0, %s132
    %s134 = sphi 0, %s132
    %s135 = sphi 0, %s134
    %s149 = sphi 0, %s135
    %s155 = sphi 0, %s157
    %s158 = sphi 0, %s155
    %s159 = sphi 0, %s158
    %s175 = sphi 0, %s159
    %s181 = sphi 0, %s183
    %s184 = sphi 0, %s181
    %s185 = sphi 0, %s184
    %s201 = sphi 0, %s185
  $region4: #{bottleneck_pallas.4} parent=0 // loop_header_branch
    %17 = sbr.rel (%p15) target = $region8
  $region5: #{bottleneck_pallas.4} parent=0 // loop_body
    %s19 = ssub.s32 %s14, 1
    %s20 = ssub.s32 %s14, 2
    %s21 = sadd.s32 %s14, 1
    %s22 = ssub.s32 %s14, %s21
    %p23 = scmp.eq.s32.totalorder %s22, 0
    %s25 = sadd.s32 %s24, 1
    %s26 = scalar_select %p23, %s24, %s25
    %p29 = pneg %p23
    %p30 = scmp.eq.s32.totalorder %s14, 1
    %p31 = por %p29, %p30
    %p32 = scmp.ne.s32.totalorder %s24, %s27
    %p33 = scmp.eq.s32.totalorder %s14, 0
    %p34 = por %p32, %p33
    %p35 = scmp.ne.s32.totalorder %s24, %s27
    %p36 = scmp.eq.s32.totalorder %s19, 1
    %p37 = por %p35, %p36
    %p38 = scmp.ne.s32.totalorder %s27, %s28
    %p39 = scmp.eq.s32.totalorder %s19, 0
    %p40 = por %p38, %p39
    %p41 = scmp.ne.s32.totalorder %s27, %s28
    %p42 = scmp.eq.s32.totalorder %s20, 1
    %p43 = por %p41, %p42
    %p45 = scmp.ne.s32.totalorder %s28, %s44
    %p46 = scmp.eq.s32.totalorder %s20, 0
    %p47 = por %p45, %p46
    %s49 = sadd.s32 %s48, 1
    %p52 = scmp.eq.s32.totalorder %s14, 1
    %p53 = scmp.ne.s32.totalorder %s48, %s50
    %p54 = scmp.eq.s32.totalorder %s14, 0
    %p55 = por %p53, %p54
    %p56 = scmp.ne.s32.totalorder %s48, %s50
    %p57 = scmp.eq.s32.totalorder %s19, 1
    %p58 = por %p56, %p57
    %p59 = scmp.ne.s32.totalorder %s50, %s51
    %p60 = scmp.eq.s32.totalorder %s19, 0
    %p61 = por %p59, %p60
    %p62 = scmp.ne.s32.totalorder %s50, %s51
    %p63 = scmp.eq.s32.totalorder %s20, 1
    %p64 = por %p62, %p63
    %p66 = scmp.ne.s32.totalorder %s51, %s65
    %p67 = scmp.eq.s32.totalorder %s20, 0
    %p68 = por %p66, %p67
    %s70 = sadd.s32 %s69, 1
    %p73 = scmp.eq.s32.totalorder %s14, 1
    %p74 = scmp.ne.s32.totalorder %s69, %s71
    %p75 = scmp.eq.s32.totalorder %s14, 0
    %p76 = por %p74, %p75
    %p77 = scmp.ne.s32.totalorder %s69, %s71
    %p78 = scmp.eq.s32.totalorder %s19, 1
    %p79 = por %p77, %p78
    %p80 = scmp.ne.s32.totalorder %s71, %s72
    %p81 = scmp.eq.s32.totalorder %s19, 0
    %p82 = por %p80, %p81
    %p83 = scmp.ne.s32.totalorder %s71, %s72
    %p84 = scmp.eq.s32.totalorder %s20, 1
    %p85 = por %p83, %p84
    %p87 = scmp.ne.s32.totalorder %s72, %s86
    %p88 = scmp.eq.s32.totalorder %s20, 0
    %p89 = por %p87, %p88
    %s91 = sadd.s32 %s90, 1
    %p94 = scmp.eq.s32.totalorder %s14, 1
    %p95 = scmp.ne.s32.totalorder %s90, %s92
    %p96 = scmp.eq.s32.totalorder %s14, 0
    %p97 = por %p95, %p96
    %p98 = scmp.ne.s32.totalorder %s90, %s92
    %p99 = scmp.eq.s32.totalorder %s19, 1
    %p100 = por %p98, %p99
    %p101 = scmp.ne.s32.totalorder %s92, %s93
    %p102 = scmp.eq.s32.totalorder %s19, 0
    %p103 = por %p101, %p102
    %p104 = scmp.ne.s32.totalorder %s92, %s93
    %p105 = scmp.eq.s32.totalorder %s20, 1
    %p106 = por %p104, %p105
    %p108 = scmp.ne.s32.totalorder %s93, %s107
    %p109 = scmp.eq.s32.totalorder %s20, 0
    %p110 = por %p108, %p109
    %s112 = sadd.s32 %s111, 1
    %p115 = scmp.eq.s32.totalorder %s14, 1
    %p116 = scmp.ne.s32.totalorder %s111, %s113
    %p117 = scmp.eq.s32.totalorder %s14, 0
    %p118 = por %p116, %p117
    %p119 = scmp.ne.s32.totalorder %s111, %s113
    %p120 = scmp.eq.s32.totalorder %s19, 1
    %p121 = por %p119, %p120
    %p122 = scmp.ne.s32.totalorder %s113, %s114
    %p123 = scmp.eq.s32.totalorder %s19, 0
    %p124 = por %p122, %p123
    %p125 = scmp.ne.s32.totalorder %s113, %s114
    %p126 = scmp.eq.s32.totalorder %s20, 1
    %p127 = por %p125, %p126
    %p129 = scmp.ne.s32.totalorder %s114, %s128
    %p130 = scmp.eq.s32.totalorder %s20, 0
    %p131 = por %p129, %p130
    %s133 = sadd.s32 %s132, 1
    %p136 = scmp.eq.s32.totalorder %s14, 1
    %p137 = scmp.ne.s32.totalorder %s132, %s134
    %p138 = scmp.eq.s32.totalorder %s14, 0
    %p139 = por %p137, %p138
    %p140 = scmp.ne.s32.totalorder %s132, %s134
    %p141 = scmp.eq.s32.totalorder %s19, 1
    %p142 = por %p140, %p141
    %p143 = scmp.ne.s32.totalorder %s134, %s135
    %p144 = scmp.eq.s32.totalorder %s19, 0
    %p145 = por %p143, %p144
    %p146 = scmp.ne.s32.totalorder %s134, %s135
    %p147 = scmp.eq.s32.totalorder %s20, 1
    %p148 = por %p146, %p147
    %p150 = scmp.ne.s32.totalorder %s135, %s149
    %p151 = scmp.eq.s32.totalorder %s20, 0
    %p152 = por %p150, %p151
    %s153 = ssub.s32 %s14, %s21
    %p154 = scmp.eq.s32.totalorder %s153, 0
    %s156 = sadd.s32 %s155, 1
    %s157 = scalar_select %p154, %s155, %s156
    %p160 = pneg %p154
    %p161 = scmp.eq.s32.totalorder %s14, 1
    %p162 = por %p160, %p161
    %p163 = scmp.ne.s32.totalorder %s155, %s158
    %p164 = scmp.eq.s32.totalorder %s14, 0
    %p165 = por %p163, %p164
    %p166 = scmp.ne.s32.totalorder %s155, %s158
    %p167 = scmp.eq.s32.totalorder %s19, 1
    %p168 = por %p166, %p167
    %p169 = scmp.ne.s32.totalorder %s158, %s159
    %p170 = scmp.eq.s32.totalorder %s19, 0
    %p171 = por %p169, %p170
    %p172 = scmp.ne.s32.totalorder %s158, %s159
    %p173 = scmp.eq.s32.totalorder %s20, 1
    %p174 = por %p172, %p173
    %p176 = scmp.ne.s32.totalorder %s159, %s175
    %p177 = scmp.eq.s32.totalorder %s20, 0
    %p178 = por %p176, %p177
    %s179 = ssub.s32 %s14, %s21
    %p180 = scmp.eq.s32.totalorder %s179, 0
    %s182 = sadd.s32 %s181, 1
    %s183 = scalar_select %p180, %s181, %s182
    %p186 = pneg %p180
    %p187 = scmp.eq.s32.totalorder %s14, 1
    %p188 = por %p186, %p187
    %p189 = scmp.ne.s32.totalorder %s181, %s184
    %p190 = scmp.eq.s32.totalorder %s14, 0
    %p191 = por %p189, %p190
    %p192 = scmp.ne.s32.totalorder %s181, %s184
    %p193 = scmp.eq.s32.totalorder %s19, 1
    %p194 = por %p192, %p193
    %p195 = scmp.ne.s32.totalorder %s184, %s185
    %p196 = scmp.eq.s32.totalorder %s19, 0
    %p197 = por %p195, %p196
    %p198 = scmp.ne.s32.totalorder %s184, %s185
    %p199 = scmp.eq.s32.totalorder %s20, 1
    %p200 = por %p198, %p199
    %p202 = scmp.ne.s32.totalorder %s185, %s201
    %p203 = scmp.eq.s32.totalorder %s20, 0
    %p204 = por %p202, %p203
    %p205 = scmp.le.s32.totalorder 1, %s14
    %p206 = scmp.lt.s32.totalorder %s14, 3
    %p207 = pnand %p205, %p206
    %p208 = pneg %p207
    // Predicated region
    $region9: #{bottleneck_pallas.4} parent=5 // pred_check
      _
    $region10: #{bottleneck_pallas.4} parent=5 // pred_check_branch
      %210 = sbr.rel (%p207) target = $region12
    $region11: #{bottleneck_pallas.4} parent=5 // pred_region
      %s211 = ssub.s32 %s14, 1
      // Predicated region
      $region13: #{bottleneck_pallas.4} parent=11 // pred_check
        %p212 = pneg %p61
      $region14: #{bottleneck_pallas.4} parent=11 // pred_check_branch
        %214 = sbr.rel (%p212) target = $region16
      $region15: #{bottleneck_pallas.4} parent=11 // pred_region
        _
      $region16: #{bottleneck_pallas.4} parent=11 // pred_fallthru
        _
      // Predicated region
      $region17: #{bottleneck_pallas.4} parent=11 // pred_check
        %p215 = pneg %p82
      $region18: #{bottleneck_pallas.4} parent=11 // pred_check_branch
        %217 = sbr.rel (%p215) target = $region20
      $region19: #{bottleneck_pallas.4} parent=11 // pred_region
        _
      $region20: #{bottleneck_pallas.4} parent=11 // pred_fallthru
        _
      // Predicated region
      $region21: #{bottleneck_pallas.4} parent=11 // pred_check
        %p218 = pneg %p103
      $region22: #{bottleneck_pallas.4} parent=11 // pred_check_branch
        %220 = sbr.rel (%p218) target = $region24
      $region23: #{bottleneck_pallas.4} parent=11 // pred_region
        _
      $region24: #{bottleneck_pallas.4} parent=11 // pred_fallthru
        _
      // Predicated region
      $region25: #{bottleneck_pallas.4} parent=11 // pred_check
        %p221 = pneg %p124
      $region26: #{bottleneck_pallas.4} parent=11 // pred_check_branch
        %223 = sbr.rel (%p221) target = $region28
      $region27: #{bottleneck_pallas.4} parent=11 // pred_region
        _
      $region28: #{bottleneck_pallas.4} parent=11 // pred_fallthru
        _
      // Predicated region
      $region29: #{bottleneck_pallas.4} parent=11 // pred_check
        %p224 = pneg %p145
      $region30: #{bottleneck_pallas.4} parent=11 // pred_check_branch
        %226 = sbr.rel (%p224) target = $region32
      $region31: #{bottleneck_pallas.4} parent=11 // pred_region
        _
      $region32: #{bottleneck_pallas.4} parent=11 // pred_fallthru
        _
    $region12: #{bottleneck_pallas.4} parent=5 // pred_fallthru
      _
    %p227 = scmp.lt.s32.totalorder %s14, 2
    // Predicated region
    $region33: #{bottleneck_pallas.4} parent=5 // pred_check
      %p228 = pneg %p227
    $region34: #{bottleneck_pallas.4} parent=5 // pred_check_branch
      %230 = sbr.rel (%p228) target = $region36
    $region35: #{bottleneck_pallas.4} parent=5 // pred_region
      // Predicated region
      $region37: #{bottleneck_pallas.4} parent=35 // pred_check
        %p231 = pneg %p34
      $region38: #{bottleneck_pallas.4} parent=35 // pred_check_branch
        %233 = sbr.rel (%p231) target = $region40
      $region39: #{bottleneck_pallas.4} parent=35 // pred_region
        %p234 = scmp.lt.s32.totalorder %s14, 1
        %s235 = scalar_select %p234, %s14, 1
        %s236 = smul.addr %s235, 8
        %s237 = smul.addr %s236, 4
        %s238 = scalar_lea.vmem %s0, %s237
      $region40: #{bottleneck_pallas.4} parent=35 // pred_fallthru
        _
    $region36: #{bottleneck_pallas.4} parent=5 // pred_fallthru
      _
    %p239 = scmp.le.s32.totalorder 1, %s14
    %p240 = scmp.lt.s32.totalorder %s14, 3
    %p241 = pnand %p239, %p240
    %p242 = pneg %p241
    // Predicated region
    $region41: #{bottleneck_pallas.4} parent=5 // pred_check
      _
    $region42: #{bottleneck_pallas.4} parent=5 // pred_check_branch
      %244 = sbr.rel (%p241) target = $region44
    $region43: #{bottleneck_pallas.4} parent=5 // pred_region
      %s245 = ssub.s32 %s14, 1
      %p246 = scmp.lt.s32.totalorder %s19, 1
      %s247 = scalar_select %p246, %s19, 1
      %s248 = smul.addr %s247, 8
      %s249 = smul.addr %s248, 4
      %s250 = scalar_lea.vmem %s0, %s249
      %p251 = pneg %p40
      %p252 = pneg %p37
      %p253 = pneg %p61
      %p254 = pneg %p58
      %p255 = pneg %p82
      %p256 = pneg %p79
      %p257 = pneg %p103
      %p258 = pneg %p100
      %p259 = pneg %p124
      %p260 = pneg %p121
      %p261 = pneg %p145
      %p262 = pneg %p142
      %p263 = pneg %p171
      %p264 = pneg %p168
      %p265 = scmp.lt.s32.totalorder %s19, 1
      %s266 = scalar_select %p265, %s19, 1
      %s267 = smul.addr %s266, 8
      %s268 = smul.addr %s267, 4
      %s269 = scalar_lea.vmem %s6, %s268
      %p270 = pneg %p197
      %p271 = pneg %p194
      %p272 = scmp.lt.s32.totalorder %s19, 1
      %s273 = scalar_select %p272, %s19, 1
      %s274 = smul.addr %s273, 2
      %s275 = scalar_lea.vmem %s7, %s274
      %p276 = scmp.lt.s32.totalorder %s19, 1
      %s277 = scalar_select %p276, %s19, 1
      %s278 = smul.addr %s277, 8
      %s279 = smul.addr %s278, 4
      %s280 = scalar_lea.vmem %s0, %s279
      %p281 = scmp.lt.s32.totalorder %s19, 1
      %s282 = scalar_select %p281, %s19, 1
      %s283 = smul.addr %s282, 8
      %s284 = smul.addr %s283, 4
      %s285 = scalar_lea.vmem %s6, %s284
      %p286 = scmp.lt.s32.totalorder %s19, 1
      %s287 = scalar_select %p286, %s19, 1
      %s288 = smul.addr %s287, 2
      %s289 = scalar_lea.vmem %s7, %s288
      %v291 = vld [vmem:[%s280] sm:$0xf]
      %v292 = vld [vmem:[%s280 + $0x4] sm:$0xf]
      %v293 = vld [vmem:[%s280 + $0x8] sm:$0xf]
      %v294 = vld [vmem:[%s280 + $0xc] sm:$0xf]
      %v295 = vld [vmem:[%s280 + $0x10] sm:$0xf]
      %v296 = vld [vmem:[%s280 + $0x14] sm:$0xf]
      %v297 = vld [vmem:[%s280 + $0x18] sm:$0xf]
      %v298 = vld [vmem:[%s280 + $0x1c] sm:$0xf]
      %v299 = vunpack.c.l.bf16 %v291
      %v300 = vunpack.c.l.bf16 %v292
      %v301 = vunpack.c.l.bf16 %v293
      %v302 = vunpack.c.l.bf16 %v294
      %v303 = vunpack.c.l.bf16 %v295
      %v304 = vunpack.c.l.bf16 %v296
      %v305 = vunpack.c.l.bf16 %v297
      %v306 = vunpack.c.l.bf16 %v298
      %v307 = vld [vmem:[%s1] sm:$0x1]
      %v309 = vlaneseq
      %v310 = vshrl.u32 %v309, 7
      %v311 = vsub.s32 0, %v310
      %v312 = vrot.slane %v307, %v311
      %v314 = vmul.f32 %v299, %v312
      %v315 = vmul.f32 %v300, %v312
      %v316 = vmul.f32 %v301, %v312
      %v317 = vmul.f32 %v302, %v312
      %v318 = vmul.f32 %v303, %v312
      %v319 = vmul.f32 %v304, %v312
      %v320 = vmul.f32 %v305, %v312
      %v321 = vmul.f32 %v306, %v312
      %v322 = vld [vmem:[%s2] sm:$0x1]
      %v324 = vlaneseq
      %v325 = vshrl.u32 %v324, 7
      %v326 = vsub.s32 0, %v325
      %v327 = vrot.slane %v322, %v326
      %v329 = vadd.f32 %v314, %v327
      %v330 = vadd.f32 %v315, %v327
      %v331 = vadd.f32 %v316, %v327
      %v332 = vadd.f32 %v317, %v327
      %v333 = vadd.f32 %v318, %v327
      %v334 = vadd.f32 %v319, %v327
      %v335 = vadd.f32 %v320, %v327
      %v336 = vadd.f32 %v321, %v327
      %vm339 = vcmask 1040384
      %v340 = vrot.slane %v335, 7
      %v341 = vrot.slane %v336, 7
      %v342 = vsel %vm339, %v340, %v341
      %v351 = vrot.slane %v329, 7
      %v352 = vrot.slane %v330, 7
      %v353 = vsel %vm339, %v351, %v352
      %v354 = vrot.slane %v331, 7
      %v355 = vsel %vm339, %v352, %v354
      %v356 = vrot.slane %v332, 7
      %v357 = vsel %vm339, %v354, %v356
      %v358 = vrot.slane %v333, 7
      %v359 = vsel %vm339, %v356, %v358
      %v360 = vrot.slane %v334, 7
      %v361 = vsel %vm339, %v358, %v360
      %v362 = vsel %vm339, %v360, %v340
      %v370 = vsel %vm339, %v341, %v351
      %v371 = vpack.c.bf16 %v370, %v342
      %v372 = vpack.c.bf16 %v355, %v353
      %v373 = vpack.c.bf16 %v359, %v357
      %v374 = vpack.c.bf16 %v362, %v361
      %v375 = vld [vmem:[%s3] sm:$0xf]
      %v376 = vld [vmem:[%s3 + $0x4] sm:$0xf]
      %v377 = vld [vmem:[%s3 + $0x8] sm:$0xf]
      %v378 = vld [vmem:[%s3 + $0xc] sm:$0xf]
      %v379 = vld [vmem:[%s3 + $0x10] sm:$0xf]
      %v380 = vld [vmem:[%s3 + $0x14] sm:$0xf]
      %v381 = vld [vmem:[%s3 + $0x18] sm:$0xf]
      %v382 = vld [vmem:[%s3 + $0x1c] sm:$0xf]
      %384 = vset.pattern.permute.xlu0 0
      %385 = vperm.xlu0 %384, %v375
      %v386 = vpop.permute.xlu0 %385
      %v389 = vunpack.c.l.s4 839922192
      %v390 = vunpack.c.0.s8 %v389
      %v391 = vlaneseq
      %v392 = vshrl.u32 %v391, 7
      %v393 = vsub.s32 %v390, %v392
      %v394 = vrot.slane %v386, %v393
      %396 = vset.pattern.permute.xlu0 0
      %397 = vperm.xlu0 %396, %v376
      %v398 = vpop.permute.xlu0 %397
      %v401 = vunpack.c.l.s4 839922192
      %v402 = vunpack.c.0.s8 %v401
      %v403 = vlaneseq
      %v404 = vshrl.u32 %v403, 7
      %v405 = vsub.s32 %v402, %v404
      %v406 = vrot.slane %v398, %v405
      %408 = vset.pattern.permute.xlu0 0
      %409 = vperm.xlu0 %408, %v377
      %v410 = vpop.permute.xlu0 %409
      %v413 = vunpack.c.l.s4 839922192
      %v414 = vunpack.c.0.s8 %v413
      %v415 = vlaneseq
      %v416 = vshrl.u32 %v415, 7
      %v417 = vsub.s32 %v414, %v416
      %v418 = vrot.slane %v410, %v417
      %420 = vset.pattern.permute.xlu0 0
      %421 = vperm.xlu0 %420, %v378
      %v422 = vpop.permute.xlu0 %421
      %v425 = vunpack.c.l.s4 839922192
      %v426 = vunpack.c.0.s8 %v425
      %v427 = vlaneseq
      %v428 = vshrl.u32 %v427, 7
      %v429 = vsub.s32 %v426, %v428
      %v430 = vrot.slane %v422, %v429
      %432 = vset.pattern.permute.xlu0 0
      %433 = vperm.xlu0 %432, %v379
      %v434 = vpop.permute.xlu0 %433
      %v437 = vunpack.c.l.s4 839922192
      %v438 = vunpack.c.0.s8 %v437
      %v439 = vlaneseq
      %v440 = vshrl.u32 %v439, 7
      %v441 = vsub.s32 %v438, %v440
      %v442 = vrot.slane %v434, %v441
      %444 = vset.pattern.permute.xlu0 0
      %445 = vperm.xlu0 %444, %v380
      %v446 = vpop.permute.xlu0 %445
      %v449 = vunpack.c.l.s4 839922192
      %v450 = vunpack.c.0.s8 %v449
      %v451 = vlaneseq
      %v452 = vshrl.u32 %v451, 7
      %v453 = vsub.s32 %v450, %v452
      %v454 = vrot.slane %v446, %v453
      %456 = vset.pattern.permute.xlu0 0
      %457 = vperm.xlu0 %456, %v381
      %v458 = vpop.permute.xlu0 %457
      %v461 = vunpack.c.l.s4 839922192
      %v462 = vunpack.c.0.s8 %v461
      %v463 = vlaneseq
      %v464 = vshrl.u32 %v463, 7
      %v465 = vsub.s32 %v462, %v464
      %v466 = vrot.slane %v458, %v465
      %468 = vset.pattern.permute.xlu0 0
      %469 = vperm.xlu0 %468, %v382
      %v470 = vpop.permute.xlu0 %469
      %v473 = vunpack.c.l.s4 839922192
      %v474 = vunpack.c.0.s8 %v473
      %v475 = vlaneseq
      %v476 = vshrl.u32 %v475, 7
      %v477 = vsub.s32 %v474, %v476
      %v478 = vrot.slane %v470, %v477
      %v487 = vunpack.c.l.b16 %v394
      %v488 = vunpack.c.l.b16 %v406
      %v489 = vunpack.c.l.b16 %v418
      %v490 = vunpack.c.l.b16 %v430
      %v491 = vunpack.c.l.b16 %v442
      %v492 = vunpack.c.l.b16 %v454
      %v493 = vunpack.c.l.b16 %v466
      %v494 = vunpack.c.l.b16 %v478
      %v495 = vpack.c.b16 %v488, %v487
      %v496 = vpack.c.b16 %v490, %v489
      %v497 = vpack.c.b16 %v492, %v491
      %v498 = vpack.c.b16 %v494, %v493
      %v503 = vmul.bf16 %v371, %v495
      %v504 = vmul.bf16 %v372, %v496
      %v505 = vmul.bf16 %v373, %v497
      %v506 = vmul.bf16 %v374, %v498
      %v507 = vpack.c.bf16 %v329, %v336
      %v508 = vpack.c.bf16 %v331, %v330
      %v509 = vpack.c.bf16 %v333, %v332
      %v510 = vpack.c.bf16 %v335, %v334
      %s511 = scalar_lea.vmem %s3, 32
      %v512 = vld [vmem:[%s511] sm:$0xf]
      %v513 = vld [vmem:[%s511 + $0x4] sm:$0xf]
      %v514 = vld [vmem:[%s511 + $0x8] sm:$0xf]
      %v515 = vld [vmem:[%s511 + $0xc] sm:$0xf]
      %v516 = vld [vmem:[%s511 + $0x10] sm:$0xf]
      %v517 = vld [vmem:[%s511 + $0x14] sm:$0xf]
      %v518 = vld [vmem:[%s511 + $0x18] sm:$0xf]
      %v519 = vld [vmem:[%s511 + $0x1c] sm:$0xf]
      %521 = vset.pattern.permute.xlu0 0
      %522 = vperm.xlu0 %521, %v512
      %v523 = vpop.permute.xlu0 %522
      %v526 = vunpack.c.l.s4 839922192
      %v527 = vunpack.c.0.s8 %v526
      %v528 = vlaneseq
      %v529 = vshrl.u32 %v528, 7
      %v530 = vsub.s32 %v527, %v529
      %v531 = vrot.slane %v523, %v530
      %533 = vset.pattern.permute.xlu0 0
      %534 = vperm.xlu0 %533, %v513
      %v535 = vpop.permute.xlu0 %534
      %v538 = vunpack.c.l.s4 839922192
      %v539 = vunpack.c.0.s8 %v538
      %v540 = vlaneseq
      %v541 = vshrl.u32 %v540, 7
      %v542 = vsub.s32 %v539, %v541
      %v543 = vrot.slane %v535, %v542
      %545 = vset.pattern.permute.xlu0 0
      %546 = vperm.xlu0 %545, %v514
      %v547 = vpop.permute.xlu0 %546
      %v550 = vunpack.c.l.s4 839922192
      %v551 = vunpack.c.0.s8 %v550
      %v552 = vlaneseq
      %v553 = vshrl.u32 %v552, 7
      %v554 = vsub.s32 %v551, %v553
      %v555 = vrot.slane %v547, %v554
      %557 = vset.pattern.permute.xlu0 0
      %558 = vperm.xlu0 %557, %v515
      %v559 = vpop.permute.xlu0 %558
      %v562 = vunpack.c.l.s4 839922192
      %v563 = vunpack.c.0.s8 %v562
      %v564 = vlaneseq
      %v565 = vshrl.u32 %v564, 7
      %v566 = vsub.s32 %v563, %v565
      %v567 = vrot.slane %v559, %v566
      %569 = vset.pattern.permute.xlu0 0
      %570 = vperm.xlu0 %569, %v516
      %v571 = vpop.permute.xlu0 %570
      %v574 = vunpack.c.l.s4 839922192
      %v575 = vunpack.c.0.s8 %v574
      %v576 = vlaneseq
      %v577 = vshrl.u32 %v576, 7
      %v578 = vsub.s32 %v575, %v577
      %v579 = vrot.slane %v571, %v578
      %581 = vset.pattern.permute.xlu0 0
      %582 = vperm.xlu0 %581, %v517
      %v583 = vpop.permute.xlu0 %582
      %v586 = vunpack.c.l.s4 839922192
      %v587 = vunpack.c.0.s8 %v586
      %v588 = vlaneseq
      %v589 = vshrl.u32 %v588, 7
      %v590 = vsub.s32 %v587, %v589
      %v591 = vrot.slane %v583, %v590
      %593 = vset.pattern.permute.xlu0 0
      %594 = vperm.xlu0 %593, %v518
      %v595 = vpop.permute.xlu0 %594
      %v598 = vunpack.c.l.s4 839922192
      %v599 = vunpack.c.0.s8 %v598
      %v600 = vlaneseq
      %v601 = vshrl.u32 %v600, 7
      %v602 = vsub.s32 %v599, %v601
      %v603 = vrot.slane %v595, %v602
      %605 = vset.pattern.permute.xlu0 0
      %606 = vperm.xlu0 %605, %v519
      %v607 = vpop.permute.xlu0 %606
      %v610 = vunpack.c.l.s4 839922192
      %v611 = vunpack.c.0.s8 %v610
      %v612 = vlaneseq
      %v613 = vshrl.u32 %v612, 7
      %v614 = vsub.s32 %v611, %v613
      %v615 = vrot.slane %v607, %v614
      %v624 = vunpack.c.l.b16 %v531
      %v625 = vunpack.c.l.b16 %v543
      %v626 = vunpack.c.l.b16 %v555
      %v627 = vunpack.c.l.b16 %v567
      %v628 = vunpack.c.l.b16 %v579
      %v629 = vunpack.c.l.b16 %v591
      %v630 = vunpack.c.l.b16 %v603
      %v631 = vunpack.c.l.b16 %v615
      %v632 = vpack.c.b16 %v625, %v624
      %v633 = vpack.c.b16 %v627, %v626
      %v634 = vpack.c.b16 %v629, %v628
      %v635 = vpack.c.b16 %v631, %v630
      %v640 = vmul.bf16 %v507, %v632
      %v641 = vmul.bf16 %v508, %v633
      %v642 = vmul.bf16 %v509, %v634
      %v643 = vmul.bf16 %v510, %v635
      %v644 = vrot.slane %v336, 1
      %vm646 = vcmask 1046528
      %v647 = vrot.slane %v329, 1
      %v648 = vrot.slane %v330, 1
      %v649 = vsel %vm646, %v647, %v648
      %v650 = vrot.slane %v331, 1
      %v651 = vsel %vm646, %v648, %v650
      %v652 = vrot.slane %v332, 1
      %v653 = vsel %vm646, %v650, %v652
      %v654 = vrot.slane %v333, 1
      %v655 = vsel %vm646, %v652, %v654
      %v656 = vrot.slane %v334, 1
      %v657 = vsel %vm646, %v654, %v656
      %v658 = vrot.slane %v335, 1
      %v659 = vsel %vm646, %v656, %v658
      %v660 = vsel %vm646, %v658, %v644
      %v669 = vsel %vm646, %v644, %v647
      %v670 = vpack.c.bf16 %v649, %v669
      %v671 = vpack.c.bf16 %v653, %v651
      %v672 = vpack.c.bf16 %v657, %v655
      %v673 = vpack.c.bf16 %v660, %v659
      %s674 = scalar_lea.vmem %s3, 64
      %v675 = vld [vmem:[%s674] sm:$0xf]
      %v676 = vld [vmem:[%s674 + $0x4] sm:$0xf]
      %v677 = vld [vmem:[%s674 + $0x8] sm:$0xf]
      %v678 = vld [vmem:[%s674 + $0xc] sm:$0xf]
      %v679 = vld [vmem:[%s674 + $0x10] sm:$0xf]
      %v680 = vld [vmem:[%s674 + $0x14] sm:$0xf]
      %v681 = vld [vmem:[%s674 + $0x18] sm:$0xf]
      %v682 = vld [vmem:[%s674 + $0x1c] sm:$0xf]
      %684 = vset.pattern.permute.xlu0 0
      %685 = vperm.xlu0 %684, %v675
      %v686 = vpop.permute.xlu0 %685
      %v689 = vunpack.c.l.s4 839922192
      %v690 = vunpack.c.0.s8 %v689
      %v691 = vlaneseq
      %v692 = vshrl.u32 %v691, 7
      %v693 = vsub.s32 %v690, %v692
      %v694 = vrot.slane %v686, %v693
      %696 = vset.pattern.permute.xlu0 0
      %697 = vperm.xlu0 %696, %v676
      %v698 = vpop.permute.xlu0 %697
      %v701 = vunpack.c.l.s4 839922192
      %v702 = vunpack.c.0.s8 %v701
      %v703 = vlaneseq
      %v704 = vshrl.u32 %v703, 7
      %v705 = vsub.s32 %v702, %v704
      %v706 = vrot.slane %v698, %v705
      %708 = vset.pattern.permute.xlu0 0
      %709 = vperm.xlu0 %708, %v677
      %v710 = vpop.permute.xlu0 %709
      %v713 = vunpack.c.l.s4 839922192
      %v714 = vunpack.c.0.s8 %v713
      %v715 = vlaneseq
      %v716 = vshrl.u32 %v715, 7
      %v717 = vsub.s32 %v714, %v716
      %v718 = vrot.slane %v710, %v717
      %720 = vset.pattern.permute.xlu0 0
      %721 = vperm.xlu0 %720, %v678
      %v722 = vpop.permute.xlu0 %721
      %v725 = vunpack.c.l.s4 839922192
      %v726 = vunpack.c.0.s8 %v725
      %v727 = vlaneseq
      %v728 = vshrl.u32 %v727, 7
      %v729 = vsub.s32 %v726, %v728
      %v730 = vrot.slane %v722, %v729
      %732 = vset.pattern.permute.xlu0 0
      %733 = vperm.xlu0 %732, %v679
      %v734 = vpop.permute.xlu0 %733
      %v737 = vunpack.c.l.s4 839922192
      %v738 = vunpack.c.0.s8 %v737
      %v739 = vlaneseq
      %v740 = vshrl.u32 %v739, 7
      %v741 = vsub.s32 %v738, %v740
      %v742 = vrot.slane %v734, %v741
      %744 = vset.pattern.permute.xlu0 0
      %745 = vperm.xlu0 %744, %v680
      %v746 = vpop.permute.xlu0 %745
      %v749 = vunpack.c.l.s4 839922192
      %v750 = vunpack.c.0.s8 %v749
      %v751 = vlaneseq
      %v752 = vshrl.u32 %v751, 7
      %v753 = vsub.s32 %v750, %v752
      %v754 = vrot.slane %v746, %v753
      %756 = vset.pattern.permute.xlu0 0
      %757 = vperm.xlu0 %756, %v681
      %v758 = vpop.permute.xlu0 %757
      %v761 = vunpack.c.l.s4 839922192
      %v762 = vunpack.c.0.s8 %v761
      %v763 = vlaneseq
      %v764 = vshrl.u32 %v763, 7
      %v765 = vsub.s32 %v762, %v764
      %v766 = vrot.slane %v758, %v765
      %768 = vset.pattern.permute.xlu0 0
      %769 = vperm.xlu0 %768, %v682
      %v770 = vpop.permute.xlu0 %769
      %v773 = vunpack.c.l.s4 839922192
      %v774 = vunpack.c.0.s8 %v773
      %v775 = vlaneseq
      %v776 = vshrl.u32 %v775, 7
      %v777 = vsub.s32 %v774, %v776
      %v778 = vrot.slane %v770, %v777
      %v787 = vunpack.c.l.b16 %v694
      %v788 = vunpack.c.l.b16 %v706
      %v789 = vunpack.c.l.b16 %v718
      %v790 = vunpack.c.l.b16 %v730
      %v791 = vunpack.c.l.b16 %v742
      %v792 = vunpack.c.l.b16 %v754
      %v793 = vunpack.c.l.b16 %v766
      %v794 = vunpack.c.l.b16 %v778
      %v795 = vpack.c.b16 %v788, %v787
      %v796 = vpack.c.b16 %v790, %v789
      %v797 = vpack.c.b16 %v792, %v791
      %v798 = vpack.c.b16 %v794, %v793
      %v803 = vmul.bf16 %v670, %v795
      %v804 = vmul.bf16 %v671, %v796
      %v805 = vmul.bf16 %v672, %v797
      %v806 = vmul.bf16 %v673, %v798
      %v807 = vpack.c.bf16 %v353, %v370
      %v808 = vpack.c.bf16 %v357, %v355
      %v809 = vpack.c.bf16 %v361, %v359
      %v810 = vpack.c.bf16 %v342, %v362
      %s811 = scalar_lea.vmem %s3, 96
      %v812 = vld [vmem:[%s811] sm:$0xf]
      %v813 = vld [vmem:[%s811 + $0x4] sm:$0xf]
      %v814 = vld [vmem:[%s811 + $0x8] sm:$0xf]
      %v815 = vld [vmem:[%s811 + $0xc] sm:$0xf]
      %v816 = vld [vmem:[%s811 + $0x10] sm:$0xf]
      %v817 = vld [vmem:[%s811 + $0x14] sm:$0xf]
      %v818 = vld [vmem:[%s811 + $0x18] sm:$0xf]
      %v819 = vld [vmem:[%s811 + $0x1c] sm:$0xf]
      %821 = vset.pattern.permute.xlu0 0
      %822 = vperm.xlu0 %821, %v812
      %v823 = vpop.permute.xlu0 %822
      %v826 = vunpack.c.l.s4 839922192
      %v827 = vunpack.c.0.s8 %v826
      %v828 = vlaneseq
      %v829 = vshrl.u32 %v828, 7
      %v830 = vsub.s32 %v827, %v829
      %v831 = vrot.slane %v823, %v830
      %833 = vset.pattern.permute.xlu0 0
      %834 = vperm.xlu0 %833, %v813
      %v835 = vpop.permute.xlu0 %834
      %v838 = vunpack.c.l.s4 839922192
      %v839 = vunpack.c.0.s8 %v838
      %v840 = vlaneseq
      %v841 = vshrl.u32 %v840, 7
      %v842 = vsub.s32 %v839, %v841
      %v843 = vrot.slane %v835, %v842
      %845 = vset.pattern.permute.xlu0 0
      %846 = vperm.xlu0 %845, %v814
      %v847 = vpop.permute.xlu0 %846
      %v850 = vunpack.c.l.s4 839922192
      %v851 = vunpack.c.0.s8 %v850
      %v852 = vlaneseq
      %v853 = vshrl.u32 %v852, 7
      %v854 = vsub.s32 %v851, %v853
      %v855 = vrot.slane %v847, %v854
      %857 = vset.pattern.permute.xlu0 0
      %858 = vperm.xlu0 %857, %v815
      %v859 = vpop.permute.xlu0 %858
      %v862 = vunpack.c.l.s4 839922192
      %v863 = vunpack.c.0.s8 %v862
      %v864 = vlaneseq
      %v865 = vshrl.u32 %v864, 7
      %v866 = vsub.s32 %v863, %v865
      %v867 = vrot.slane %v859, %v866
      %869 = vset.pattern.permute.xlu0 0
      %870 = vperm.xlu0 %869, %v816
      %v871 = vpop.permute.xlu0 %870
      %v874 = vunpack.c.l.s4 839922192
      %v875 = vunpack.c.0.s8 %v874
      %v876 = vlaneseq
      %v877 = vshrl.u32 %v876, 7
      %v878 = vsub.s32 %v875, %v877
      %v879 = vrot.slane %v871, %v878
      %881 = vset.pattern.permute.xlu0 0
      %882 = vperm.xlu0 %881, %v817
      %v883 = vpop.permute.xlu0 %882
      %v886 = vunpack.c.l.s4 839922192
      %v887 = vunpack.c.0.s8 %v886
      %v888 = vlaneseq
      %v889 = vshrl.u32 %v888, 7
      %v890 = vsub.s32 %v887, %v889
      %v891 = vrot.slane %v883, %v890
      %893 = vset.pattern.permute.xlu0 0
      %894 = vperm.xlu0 %893, %v818
      %v895 = vpop.permute.xlu0 %894
      %v898 = vunpack.c.l.s4 839922192
      %v899 = vunpack.c.0.s8 %v898
      %v900 = vlaneseq
      %v901 = vshrl.u32 %v900, 7
      %v902 = vsub.s32 %v899, %v901
      %v903 = vrot.slane %v895, %v902
      %905 = vset.pattern.permute.xlu0 0
      %906 = vperm.xlu0 %905, %v819
      %v907 = vpop.permute.xlu0 %906
      %v910 = vunpack.c.l.s4 839922192
      %v911 = vunpack.c.0.s8 %v910
      %v912 = vlaneseq
      %v913 = vshrl.u32 %v912, 7
      %v914 = vsub.s32 %v911, %v913
      %v915 = vrot.slane %v907, %v914
      %v924 = vunpack.c.l.b16 %v831
      %v925 = vunpack.c.l.b16 %v843
      %v926 = vunpack.c.l.b16 %v855
      %v927 = vunpack.c.l.b16 %v867
      %v928 = vunpack.c.l.b16 %v879
      %v929 = vunpack.c.l.b16 %v891
      %v930 = vunpack.c.l.b16 %v903
      %v931 = vunpack.c.l.b16 %v915
      %v932 = vpack.c.b16 %v925, %v924
      %v933 = vpack.c.b16 %v927, %v926
      %v934 = vpack.c.b16 %v929, %v928
      %v935 = vpack.c.b16 %v931, %v930
      %v940 = vmul.bf16 %v807, %v932
      %v941 = vmul.bf16 %v808, %v933
      %v942 = vmul.bf16 %v809, %v934
      %v943 = vmul.bf16 %v810, %v935
      %v944 = vpack.c.bf16 %v330, %v329
      %v945 = vpack.c.bf16 %v332, %v331
      %v946 = vpack.c.bf16 %v334, %v333
      %v947 = vpack.c.bf16 %v336, %v335
      %v948 = vpack.c.bf16 %v651, %v649
      %v949 = vpack.c.bf16 %v655, %v653
      %v950 = vpack.c.bf16 %v659, %v657
      %v951 = vpack.c.bf16 %v669, %v660
      %s952 = scalar_lea.vmem %s3, 160
      %v953 = vld [vmem:[%s952] sm:$0xf]
      %v954 = vld [vmem:[%s952 + $0x4] sm:$0xf]
      %v955 = vld [vmem:[%s952 + $0x8] sm:$0xf]
      %v956 = vld [vmem:[%s952 + $0xc] sm:$0xf]
      %v957 = vld [vmem:[%s952 + $0x10] sm:$0xf]
      %v958 = vld [vmem:[%s952 + $0x14] sm:$0xf]
      %v959 = vld [vmem:[%s952 + $0x18] sm:$0xf]
      %v960 = vld [vmem:[%s952 + $0x1c] sm:$0xf]
      %962 = vset.pattern.permute.xlu0 0
      %963 = vperm.xlu0 %962, %v953
      %v964 = vpop.permute.xlu0 %963
      %v967 = vunpack.c.l.s4 839922192
      %v968 = vunpack.c.0.s8 %v967
      %v969 = vlaneseq
      %v970 = vshrl.u32 %v969, 7
      %v971 = vsub.s32 %v968, %v970
      %v972 = vrot.slane %v964, %v971
      %974 = vset.pattern.permute.xlu0 0
      %975 = vperm.xlu0 %974, %v954
      %v976 = vpop.permute.xlu0 %975
      %v979 = vunpack.c.l.s4 839922192
      %v980 = vunpack.c.0.s8 %v979
      %v981 = vlaneseq
      %v982 = vshrl.u32 %v981, 7
      %v983 = vsub.s32 %v980, %v982
      %v984 = vrot.slane %v976, %v983
      %986 = vset.pattern.permute.xlu0 0
      %987 = vperm.xlu0 %986, %v955
      %v988 = vpop.permute.xlu0 %987
      %v991 = vunpack.c.l.s4 839922192
      %v992 = vunpack.c.0.s8 %v991
      %v993 = vlaneseq
      %v994 = vshrl.u32 %v993, 7
      %v995 = vsub.s32 %v992, %v994
      %v996 = vrot.slane %v988, %v995
      %998 = vset.pattern.permute.xlu0 0
      %999 = vperm.xlu0 %998, %v956
      %v1000 = vpop.permute.xlu0 %999
      %v1003 = vunpack.c.l.s4 839922192
      %v1004 = vunpack.c.0.s8 %v1003
      %v1005 = vlaneseq
      %v1006 = vshrl.u32 %v1005, 7
      %v1007 = vsub.s32 %v1004, %v1006
      %v1008 = vrot.slane %v1000, %v1007
      %1010 = vset.pattern.permute.xlu0 0
      %1011 = vperm.xlu0 %1010, %v957
      %v1012 = vpop.permute.xlu0 %1011
      %v1015 = vunpack.c.l.s4 839922192
      %v1016 = vunpack.c.0.s8 %v1015
      %v1017 = vlaneseq
      %v1018 = vshrl.u32 %v1017, 7
      %v1019 = vsub.s32 %v1016, %v1018
      %v1020 = vrot.slane %v1012, %v1019
      %1022 = vset.pattern.permute.xlu0 0
      %1023 = vperm.xlu0 %1022, %v958
      %v1024 = vpop.permute.xlu0 %1023
      %v1027 = vunpack.c.l.s4 839922192
      %v1028 = vunpack.c.0.s8 %v1027
      %v1029 = vlaneseq
      %v1030 = vshrl.u32 %v1029, 7
      %v1031 = vsub.s32 %v1028, %v1030
      %v1032 = vrot.slane %v1024, %v1031
      %1034 = vset.pattern.permute.xlu0 0
      %1035 = vperm.xlu0 %1034, %v959
      %v1036 = vpop.permute.xlu0 %1035
      %v1039 = vunpack.c.l.s4 839922192
      %v1040 = vunpack.c.0.s8 %v1039
      %v1041 = vlaneseq
      %v1042 = vshrl.u32 %v1041, 7
      %v1043 = vsub.s32 %v1040, %v1042
      %v1044 = vrot.slane %v1036, %v1043
      %1046 = vset.pattern.permute.xlu0 0
      %1047 = vperm.xlu0 %1046, %v960
      %v1048 = vpop.permute.xlu0 %1047
      %v1051 = vunpack.c.l.s4 839922192
      %v1052 = vunpack.c.0.s8 %v1051
      %v1053 = vlaneseq
      %v1054 = vshrl.u32 %v1053, 7
      %v1055 = vsub.s32 %v1052, %v1054
      %v1056 = vrot.slane %v1048, %v1055
      %v1065 = vunpack.c.l.b16 %v972
      %v1066 = vunpack.c.l.b16 %v984
      %v1067 = vunpack.c.l.b16 %v996
      %v1068 = vunpack.c.l.b16 %v1008
      %v1069 = vunpack.c.l.b16 %v1020
      %v1070 = vunpack.c.l.b16 %v1032
      %v1071 = vunpack.c.l.b16 %v1044
      %v1072 = vunpack.c.l.b16 %v1056
      %v1073 = vpack.c.b16 %v1066, %v1065
      %v1074 = vpack.c.b16 %v1068, %v1067
      %v1075 = vpack.c.b16 %v1070, %v1069
      %v1076 = vpack.c.b16 %v1072, %v1071
      %v1081 = vmul.bf16 %v948, %v1073
      %v1082 = vmul.bf16 %v949, %v1074
      %v1083 = vmul.bf16 %v950, %v1075
      %v1084 = vmul.bf16 %v951, %v1076
      %s1085 = scalar_lea.vmem %s3, 192
      %v1086 = vld [vmem:[%s1085] sm:$0xf]
      %v1087 = vld [vmem:[%s1085 + $0x4] sm:$0xf]
      %v1088 = vld [vmem:[%s1085 + $0x8] sm:$0xf]
      %v1089 = vld [vmem:[%s1085 + $0xc] sm:$0xf]
      %v1090 = vld [vmem:[%s1085 + $0x10] sm:$0xf]
      %v1091 = vld [vmem:[%s1085 + $0x14] sm:$0xf]
      %v1092 = vld [vmem:[%s1085 + $0x18] sm:$0xf]
      %v1093 = vld [vmem:[%s1085 + $0x1c] sm:$0xf]
      %1095 = vset.pattern.permute.xlu0 0
      %1096 = vperm.xlu0 %1095, %v1086
      %v1097 = vpop.permute.xlu0 %1096
      %v1100 = vunpack.c.l.s4 839922192
      %v1101 = vunpack.c.0.s8 %v1100
      %v1102 = vlaneseq
      %v1103 = vshrl.u32 %v1102, 7
      %v1104 = vsub.s32 %v1101, %v1103
      %v1105 = vrot.slane %v1097, %v1104
      %1107 = vset.pattern.permute.xlu0 0
      %1108 = vperm.xlu0 %1107, %v1087
      %v1109 = vpop.permute.xlu0 %1108
      %v1112 = vunpack.c.l.s4 839922192
      %v1113 = vunpack.c.0.s8 %v1112
      %v1114 = vlaneseq
      %v1115 = vshrl.u32 %v1114, 7
      %v1116 = vsub.s32 %v1113, %v1115
      %v1117 = vrot.slane %v1109, %v1116
      %1119 = vset.pattern.permute.xlu0 0
      %1120 = vperm.xlu0 %1119, %v1088
      %v1121 = vpop.permute.xlu0 %1120
      %v1124 = vunpack.c.l.s4 839922192
      %v1125 = vunpack.c.0.s8 %v1124
      %v1126 = vlaneseq
      %v1127 = vshrl.u32 %v1126, 7
      %v1128 = vsub.s32 %v1125, %v1127
      %v1129 = vrot.slane %v1121, %v1128
      %1131 = vset.pattern.permute.xlu0 0
      %1132 = vperm.xlu0 %1131, %v1089
      %v1133 = vpop.permute.xlu0 %1132
      %v1136 = vunpack.c.l.s4 839922192
      %v1137 = vunpack.c.0.s8 %v1136
      %v1138 = vlaneseq
      %v1139 = vshrl.u32 %v1138, 7
      %v1140 = vsub.s32 %v1137, %v1139
      %v1141 = vrot.slane %v1133, %v1140
      %1143 = vset.pattern.permute.xlu0 0
      %1144 = vperm.xlu0 %1143, %v1090
      %v1145 = vpop.permute.xlu0 %1144
      %v1148 = vunpack.c.l.s4 839922192
      %v1149 = vunpack.c.0.s8 %v1148
      %v1150 = vlaneseq
      %v1151 = vshrl.u32 %v1150, 7
      %v1152 = vsub.s32 %v1149, %v1151
      %v1153 = vrot.slane %v1145, %v1152
      %1155 = vset.pattern.permute.xlu0 0
      %1156 = vperm.xlu0 %1155, %v1091
      %v1157 = vpop.permute.xlu0 %1156
      %v1160 = vunpack.c.l.s4 839922192
      %v1161 = vunpack.c.0.s8 %v1160
      %v1162 = vlaneseq
      %v1163 = vshrl.u32 %v1162, 7
      %v1164 = vsub.s32 %v1161, %v1163
      %v1165 = vrot.slane %v1157, %v1164
      %1167 = vset.pattern.permute.xlu0 0
      %1168 = vperm.xlu0 %1167, %v1092
      %v1169 = vpop.permute.xlu0 %1168
      %v1172 = vunpack.c.l.s4 839922192
      %v1173 = vunpack.c.0.s8 %v1172
      %v1174 = vlaneseq
      %v1175 = vshrl.u32 %v1174, 7
      %v1176 = vsub.s32 %v1173, %v1175
      %v1177 = vrot.slane %v1169, %v1176
      %1179 = vset.pattern.permute.xlu0 0
      %1180 = vperm.xlu0 %1179, %v1093
      %v1181 = vpop.permute.xlu0 %1180
      %v1184 = vunpack.c.l.s4 839922192
      %v1185 = vunpack.c.0.s8 %v1184
      %v1186 = vlaneseq
      %v1187 = vshrl.u32 %v1186, 7
      %v1188 = vsub.s32 %v1185, %v1187
      %v1189 = vrot.slane %v1181, %v1188
      %v1198 = vunpack.c.l.b16 %v1105
      %v1199 = vunpack.c.l.b16 %v1117
      %v1200 = vunpack.c.l.b16 %v1129
      %v1201 = vunpack.c.l.b16 %v1141
      %v1202 = vunpack.c.l.b16 %v1153
      %v1203 = vunpack.c.l.b16 %v1165
      %v1204 = vunpack.c.l.b16 %v1177
      %v1205 = vunpack.c.l.b16 %v1189
      %v1206 = vpack.c.b16 %v1199, %v1198
      %v1207 = vpack.c.b16 %v1201, %v1200
      %v1208 = vpack.c.b16 %v1203, %v1202
      %v1209 = vpack.c.b16 %v1205, %v1204
      %v1214 = vmul.bf16 %v372, %v1206
      %v1215 = vmul.bf16 %v373, %v1207
      %v1216 = vmul.bf16 %v374, %v1208
      %v1217 = vmul.bf16 %v371, %v1209
      %s1218 = scalar_lea.vmem %s3, 224
      %v1219 = vld [vmem:[%s1218] sm:$0xf]
      %v1220 = vld [vmem:[%s1218 + $0x4] sm:$0xf]
      %v1221 = vld [vmem:[%s1218 + $0x8] sm:$0xf]
      %v1222 = vld [vmem:[%s1218 + $0xc] sm:$0xf]
      %v1223 = vld [vmem:[%s1218 + $0x10] sm:$0xf]
      %v1224 = vld [vmem:[%s1218 + $0x14] sm:$0xf]
      %v1225 = vld [vmem:[%s1218 + $0x18] sm:$0xf]
      %v1226 = vld [vmem:[%s1218 + $0x1c] sm:$0xf]
      %1228 = vset.pattern.permute.xlu0 0
      %1229 = vperm.xlu0 %1228, %v1219
      %v1230 = vpop.permute.xlu0 %1229
      %v1233 = vunpack.c.l.s4 839922192
      %v1234 = vunpack.c.0.s8 %v1233
      %v1235 = vlaneseq
      %v1236 = vshrl.u32 %v1235, 7
      %v1237 = vsub.s32 %v1234, %v1236
      %v1238 = vrot.slane %v1230, %v1237
      %1240 = vset.pattern.permute.xlu0 0
      %1241 = vperm.xlu0 %1240, %v1220
      %v1242 = vpop.permute.xlu0 %1241
      %v1245 = vunpack.c.l.s4 839922192
      %v1246 = vunpack.c.0.s8 %v1245
      %v1247 = vlaneseq
      %v1248 = vshrl.u32 %v1247, 7
      %v1249 = vsub.s32 %v1246, %v1248
      %v1250 = vrot.slane %v1242, %v1249
      %1252 = vset.pattern.permute.xlu0 0
      %1253 = vperm.xlu0 %1252, %v1221
      %v1254 = vpop.permute.xlu0 %1253
      %v1257 = vunpack.c.l.s4 839922192
      %v1258 = vunpack.c.0.s8 %v1257
      %v1259 = vlaneseq
      %v1260 = vshrl.u32 %v1259, 7
      %v1261 = vsub.s32 %v1258, %v1260
      %v1262 = vrot.slane %v1254, %v1261
      %1264 = vset.pattern.permute.xlu0 0
      %1265 = vperm.xlu0 %1264, %v1222
      %v1266 = vpop.permute.xlu0 %1265
      %v1269 = vunpack.c.l.s4 839922192
      %v1270 = vunpack.c.0.s8 %v1269
      %v1271 = vlaneseq
      %v1272 = vshrl.u32 %v1271, 7
      %v1273 = vsub.s32 %v1270, %v1272
      %v1274 = vrot.slane %v1266, %v1273
      %1276 = vset.pattern.permute.xlu0 0
      %1277 = vperm.xlu0 %1276, %v1223
      %v1278 = vpop.permute.xlu0 %1277
      %v1281 = vunpack.c.l.s4 839922192
      %v1282 = vunpack.c.0.s8 %v1281
      %v1283 = vlaneseq
      %v1284 = vshrl.u32 %v1283, 7
      %v1285 = vsub.s32 %v1282, %v1284
      %v1286 = vrot.slane %v1278, %v1285
      %1288 = vset.pattern.permute.xlu0 0
      %1289 = vperm.xlu0 %1288, %v1224
      %v1290 = vpop.permute.xlu0 %1289
      %v1293 = vunpack.c.l.s4 839922192
      %v1294 = vunpack.c.0.s8 %v1293
      %v1295 = vlaneseq
      %v1296 = vshrl.u32 %v1295, 7
      %v1297 = vsub.s32 %v1294, %v1296
      %v1298 = vrot.slane %v1290, %v1297
      %1300 = vset.pattern.permute.xlu0 0
      %1301 = vperm.xlu0 %1300, %v1225
      %v1302 = vpop.permute.xlu0 %1301
      %v1305 = vunpack.c.l.s4 839922192
      %v1306 = vunpack.c.0.s8 %v1305
      %v1307 = vlaneseq
      %v1308 = vshrl.u32 %v1307, 7
      %v1309 = vsub.s32 %v1306, %v1308
      %v1310 = vrot.slane %v1302, %v1309
      %1312 = vset.pattern.permute.xlu0 0
      %1313 = vperm.xlu0 %1312, %v1226
      %v1314 = vpop.permute.xlu0 %1313
      %v1317 = vunpack.c.l.s4 839922192
      %v1318 = vunpack.c.0.s8 %v1317
      %v1319 = vlaneseq
      %v1320 = vshrl.u32 %v1319, 7
      %v1321 = vsub.s32 %v1318, %v1320
      %v1322 = vrot.slane %v1314, %v1321
      %v1331 = vunpack.c.l.b16 %v1238
      %v1332 = vunpack.c.l.b16 %v1250
      %v1333 = vunpack.c.l.b16 %v1262
      %v1334 = vunpack.c.l.b16 %v1274
      %v1335 = vunpack.c.l.b16 %v1286
      %v1336 = vunpack.c.l.b16 %v1298
      %v1337 = vunpack.c.l.b16 %v1310
      %v1338 = vunpack.c.l.b16 %v1322
      %v1339 = vpack.c.b16 %v1332, %v1331
      %v1340 = vpack.c.b16 %v1334, %v1333
      %v1341 = vpack.c.b16 %v1336, %v1335
      %v1342 = vpack.c.b16 %v1338, %v1337
      %v1347 = vmul.bf16 %v508, %v1339
      %v1348 = vmul.bf16 %v509, %v1340
      %v1349 = vmul.bf16 %v510, %v1341
      %v1350 = vmul.bf16 %v507, %v1342
      %s1351 = scalar_lea.vmem %s3, 256
      %v1352 = vld [vmem:[%s1351] sm:$0xf]
      %v1353 = vld [vmem:[%s1351 + $0x4] sm:$0xf]
      %v1354 = vld [vmem:[%s1351 + $0x8] sm:$0xf]
      %v1355 = vld [vmem:[%s1351 + $0xc] sm:$0xf]
      %v1356 = vld [vmem:[%s1351 + $0x10] sm:$0xf]
      %v1357 = vld [vmem:[%s1351 + $0x14] sm:$0xf]
      %v1358 = vld [vmem:[%s1351 + $0x18] sm:$0xf]
      %v1359 = vld [vmem:[%s1351 + $0x1c] sm:$0xf]
      %1361 = vset.pattern.permute.xlu0 0
      %1362 = vperm.xlu0 %1361, %v1352
      %v1363 = vpop.permute.xlu0 %1362
      %v1366 = vunpack.c.l.s4 839922192
      %v1367 = vunpack.c.0.s8 %v1366
      %v1368 = vlaneseq
      %v1369 = vshrl.u32 %v1368, 7
      %v1370 = vsub.s32 %v1367, %v1369
      %v1371 = vrot.slane %v1363, %v1370
      %1373 = vset.pattern.permute.xlu0 0
      %1374 = vperm.xlu0 %1373, %v1353
      %v1375 = vpop.permute.xlu0 %1374
      %v1378 = vunpack.c.l.s4 839922192
      %v1379 = vunpack.c.0.s8 %v1378
      %v1380 = vlaneseq
      %v1381 = vshrl.u32 %v1380, 7
      %v1382 = vsub.s32 %v1379, %v1381
      %v1383 = vrot.slane %v1375, %v1382
      %1385 = vset.pattern.permute.xlu0 0
      %1386 = vperm.xlu0 %1385, %v1354
      %v1387 = vpop.permute.xlu0 %1386
      %v1390 = vunpack.c.l.s4 839922192
      %v1391 = vunpack.c.0.s8 %v1390
      %v1392 = vlaneseq
      %v1393 = vshrl.u32 %v1392, 7
      %v1394 = vsub.s32 %v1391, %v1393
      %v1395 = vrot.slane %v1387, %v1394
      %1397 = vset.pattern.permute.xlu0 0
      %1398 = vperm.xlu0 %1397, %v1355
      %v1399 = vpop.permute.xlu0 %1398
      %v1402 = vunpack.c.l.s4 839922192
      %v1403 = vunpack.c.0.s8 %v1402
      %v1404 = vlaneseq
      %v1405 = vshrl.u32 %v1404, 7
      %v1406 = vsub.s32 %v1403, %v1405
      %v1407 = vrot.slane %v1399, %v1406
      %1409 = vset.pattern.permute.xlu0 0
      %1410 = vperm.xlu0 %1409, %v1356
      %v1411 = vpop.permute.xlu0 %1410
      %v1414 = vunpack.c.l.s4 839922192
      %v1415 = vunpack.c.0.s8 %v1414
      %v1416 = vlaneseq
      %v1417 = vshrl.u32 %v1416, 7
      %v1418 = vsub.s32 %v1415, %v1417
      %v1419 = vrot.slane %v1411, %v1418
      %1421 = vset.pattern.permute.xlu0 0
      %1422 = vperm.xlu0 %1421, %v1357
      %v1423 = vpop.permute.xlu0 %1422
      %v1426 = vunpack.c.l.s4 839922192
      %v1427 = vunpack.c.0.s8 %v1426
      %v1428 = vlaneseq
      %v1429 = vshrl.u32 %v1428, 7
      %v1430 = vsub.s32 %v1427, %v1429
      %v1431 = vrot.slane %v1423, %v1430
      %1433 = vset.pattern.permute.xlu0 0
      %1434 = vperm.xlu0 %1433, %v1358
      %v1435 = vpop.permute.xlu0 %1434
      %v1438 = vunpack.c.l.s4 839922192
      %v1439 = vunpack.c.0.s8 %v1438
      %v1440 = vlaneseq
      %v1441 = vshrl.u32 %v1440, 7
      %v1442 = vsub.s32 %v1439, %v1441
      %v1443 = vrot.slane %v1435, %v1442
      %1445 = vset.pattern.permute.xlu0 0
      %1446 = vperm.xlu0 %1445, %v1359
      %v1447 = vpop.permute.xlu0 %1446
      %v1450 = vunpack.c.l.s4 839922192
      %v1451 = vunpack.c.0.s8 %v1450
      %v1452 = vlaneseq
      %v1453 = vshrl.u32 %v1452, 7
      %v1454 = vsub.s32 %v1451, %v1453
      %v1455 = vrot.slane %v1447, %v1454
      %v1464 = vunpack.c.l.b16 %v1371
      %v1465 = vunpack.c.l.b16 %v1383
      %v1466 = vunpack.c.l.b16 %v1395
      %v1467 = vunpack.c.l.b16 %v1407
      %v1468 = vunpack.c.l.b16 %v1419
      %v1469 = vunpack.c.l.b16 %v1431
      %v1470 = vunpack.c.l.b16 %v1443
      %v1471 = vunpack.c.l.b16 %v1455
      %v1472 = vpack.c.b16 %v1465, %v1464
      %v1473 = vpack.c.b16 %v1467, %v1466
      %v1474 = vpack.c.b16 %v1469, %v1468
      %v1475 = vpack.c.b16 %v1471, %v1470
      %v1480 = vmul.bf16 %v671, %v1472
      %v1481 = vmul.bf16 %v672, %v1473
      %v1482 = vmul.bf16 %v673, %v1474
      %v1483 = vmul.bf16 %v670, %v1475
      %v1484 = vld [vmem:[%s4] sm:$0xf]
      %v1485 = vld [vmem:[%s4 + $0x4] sm:$0xf]
      %v1486 = vld [vmem:[%s4 + $0x8] sm:$0xf]
      %v1487 = vld [vmem:[%s4 + $0xc] sm:$0xf]
      %v1488 = vld [vmem:[%s4 + $0x10] sm:$0xf]
      %v1489 = vld [vmem:[%s4 + $0x14] sm:$0xf]
      %v1490 = vld [vmem:[%s4 + $0x18] sm:$0xf]
      %v1491 = vld [vmem:[%s4 + $0x1c] sm:$0xf]
      %v1492 = vld [vmem:[%s4 + $0x20] sm:$0xf]
      %v1493 = vld [vmem:[%s4 + $0x24] sm:$0xf]
      %v1494 = vld [vmem:[%s4 + $0x28] sm:$0xf]
      %v1495 = vld [vmem:[%s4 + $0x2c] sm:$0xf]
      %v1496 = vld [vmem:[%s4 + $0x30] sm:$0xf]
      %v1497 = vld [vmem:[%s4 + $0x34] sm:$0xf]
      %v1498 = vld [vmem:[%s4 + $0x38] sm:$0xf]
      %v1499 = vld [vmem:[%s4 + $0x3c] sm:$0xf]
      %v1500 = vld [vmem:[%s4 + $0x40] sm:$0xf]
      %v1501 = vld [vmem:[%s4 + $0x44] sm:$0xf]
      %v1502 = vld [vmem:[%s4 + $0x48] sm:$0xf]
      %v1503 = vld [vmem:[%s4 + $0x4c] sm:$0xf]
      %v1504 = vld [vmem:[%s4 + $0x50] sm:$0xf]
      %v1505 = vld [vmem:[%s4 + $0x54] sm:$0xf]
      %v1506 = vld [vmem:[%s4 + $0x58] sm:$0xf]
      %v1507 = vld [vmem:[%s4 + $0x5c] sm:$0xf]
      %v1508 = vld [vmem:[%s4 + $0x60] sm:$0xf]
      %v1509 = vld [vmem:[%s4 + $0x64] sm:$0xf]
      %v1510 = vld [vmem:[%s4 + $0x68] sm:$0xf]
      %v1511 = vld [vmem:[%s4 + $0x6c] sm:$0xf]
      %v1512 = vld [vmem:[%s4 + $0x70] sm:$0xf]
      %v1513 = vld [vmem:[%s4 + $0x74] sm:$0xf]
      %v1514 = vld [vmem:[%s4 + $0x78] sm:$0xf]
      %v1515 = vld [vmem:[%s4 + $0x7c] sm:$0xf]
      %v1516 = vld [vmem:[%s4 + $0x80] sm:$0xf]
      %v1517 = vld [vmem:[%s4 + $0x84] sm:$0xf]
      %v1518 = vld [vmem:[%s4 + $0x88] sm:$0xf]
      %v1519 = vld [vmem:[%s4 + $0x8c] sm:$0xf]
      %v1520 = vld [vmem:[%s4 + $0x90] sm:$0xf]
      %v1521 = vld [vmem:[%s4 + $0x94] sm:$0xf]
      %v1522 = vld [vmem:[%s4 + $0x98] sm:$0xf]
      %v1523 = vld [vmem:[%s4 + $0x9c] sm:$0xf]
      %v1524 = vld [vmem:[%s4 + $0xa0] sm:$0xf]
      %v1525 = vld [vmem:[%s4 + $0xa4] sm:$0xf]
      %v1526 = vld [vmem:[%s4 + $0xa8] sm:$0xf]
      %v1527 = vld [vmem:[%s4 + $0xac] sm:$0xf]
      %v1528 = vld [vmem:[%s4 + $0xb0] sm:$0xf]
      %v1529 = vld [vmem:[%s4 + $0xb4] sm:$0xf]
      %v1530 = vld [vmem:[%s4 + $0xb8] sm:$0xf]
      %v1531 = vld [vmem:[%s4 + $0xbc] sm:$0xf]
      %v1532 = vld [vmem:[%s4 + $0xc0] sm:$0xf]
      %v1533 = vld [vmem:[%s4 + $0xc4] sm:$0xf]
      %v1534 = vld [vmem:[%s4 + $0xc8] sm:$0xf]
      %v1535 = vld [vmem:[%s4 + $0xcc] sm:$0xf]
      %v1536 = vld [vmem:[%s4 + $0xd0] sm:$0xf]
      %v1537 = vld [vmem:[%s4 + $0xd4] sm:$0xf]
      %v1538 = vld [vmem:[%s4 + $0xd8] sm:$0xf]
      %v1539 = vld [vmem:[%s4 + $0xdc] sm:$0xf]
      %v1540 = vld [vmem:[%s4 + $0xe0] sm:$0xf]
      %v1541 = vld [vmem:[%s4 + $0xe4] sm:$0xf]
      %v1542 = vld [vmem:[%s4 + $0xe8] sm:$0xf]
      %v1543 = vld [vmem:[%s4 + $0xec] sm:$0xf]
      %v1544 = vld [vmem:[%s4 + $0xf0] sm:$0xf]
      %v1545 = vld [vmem:[%s4 + $0xf4] sm:$0xf]
      %v1546 = vld [vmem:[%s4 + $0xf8] sm:$0xf]
      %v1547 = vld [vmem:[%s4 + $0xfc] sm:$0xf]
      %v1548 = vld [vmem:[%s4 + $0x100] sm:$0xf]
      %v1549 = vld [vmem:[%s4 + $0x104] sm:$0xf]
      %v1550 = vld [vmem:[%s4 + $0x108] sm:$0xf]
      %v1551 = vld [vmem:[%s4 + $0x10c] sm:$0xf]
      %v1552 = vld [vmem:[%s4 + $0x110] sm:$0xf]
      %v1553 = vld [vmem:[%s4 + $0x114] sm:$0xf]
      %v1554 = vld [vmem:[%s4 + $0x118] sm:$0xf]
      %v1555 = vld [vmem:[%s4 + $0x11c] sm:$0xf]
      %v1556 = vld [vmem:[%s4 + $0x120] sm:$0xf]
      %v1557 = vld [vmem:[%s4 + $0x124] sm:$0xf]
      %v1558 = vld [vmem:[%s4 + $0x128] sm:$0xf]
      %v1559 = vld [vmem:[%s4 + $0x12c] sm:$0xf]
      %v1560 = vld [vmem:[%s4 + $0x130] sm:$0xf]
      %v1561 = vld [vmem:[%s4 + $0x134] sm:$0xf]
      %v1562 = vld [vmem:[%s4 + $0x138] sm:$0xf]
      %v1563 = vld [vmem:[%s4 + $0x13c] sm:$0xf]
      %v1564 = vld [vmem:[%s4 + $0x140] sm:$0xf]
      %v1565 = vld [vmem:[%s4 + $0x144] sm:$0xf]
      %v1566 = vld [vmem:[%s4 + $0x148] sm:$0xf]
      %v1567 = vld [vmem:[%s4 + $0x14c] sm:$0xf]
      %v1568 = vld [vmem:[%s4 + $0x150] sm:$0xf]
      %v1569 = vld [vmem:[%s4 + $0x154] sm:$0xf]
      %v1570 = vld [vmem:[%s4 + $0x158] sm:$0xf]
      %v1571 = vld [vmem:[%s4 + $0x15c] sm:$0xf]
      %v1572 = vld [vmem:[%s4 + $0x160] sm:$0xf]
      %v1573 = vld [vmem:[%s4 + $0x164] sm:$0xf]
      %v1574 = vld [vmem:[%s4 + $0x168] sm:$0xf]
      %v1575 = vld [vmem:[%s4 + $0x16c] sm:$0xf]
      %v1576 = vld [vmem:[%s4 + $0x170] sm:$0xf]
      %v1577 = vld [vmem:[%s4 + $0x174] sm:$0xf]
      %v1578 = vld [vmem:[%s4 + $0x178] sm:$0xf]
      %v1579 = vld [vmem:[%s4 + $0x17c] sm:$0xf]
      %v1580 = vld [vmem:[%s4 + $0x180] sm:$0xf]
      %v1581 = vld [vmem:[%s4 + $0x184] sm:$0xf]
      %v1582 = vld [vmem:[%s4 + $0x188] sm:$0xf]
      %v1583 = vld [vmem:[%s4 + $0x18c] sm:$0xf]
      %v1584 = vld [vmem:[%s4 + $0x190] sm:$0xf]
      %v1585 = vld [vmem:[%s4 + $0x194] sm:$0xf]
      %v1586 = vld [vmem:[%s4 + $0x198] sm:$0xf]
      %v1587 = vld [vmem:[%s4 + $0x19c] sm:$0xf]
      %v1588 = vld [vmem:[%s4 + $0x1a0] sm:$0xf]
      %v1589 = vld [vmem:[%s4 + $0x1a4] sm:$0xf]
      %v1590 = vld [vmem:[%s4 + $0x1a8] sm:$0xf]
      %v1591 = vld [vmem:[%s4 + $0x1ac] sm:$0xf]
      %v1592 = vld [vmem:[%s4 + $0x1b0] sm:$0xf]
      %v1593 = vld [vmem:[%s4 + $0x1b4] sm:$0xf]
      %v1594 = vld [vmem:[%s4 + $0x1b8] sm:$0xf]
      %v1595 = vld [vmem:[%s4 + $0x1bc] sm:$0xf]
      %v1596 = vld [vmem:[%s4 + $0x1c0] sm:$0xf]
      %v1597 = vld [vmem:[%s4 + $0x1c4] sm:$0xf]
      %v1598 = vld [vmem:[%s4 + $0x1c8] sm:$0xf]
      %v1599 = vld [vmem:[%s4 + $0x1cc] sm:$0xf]
      %v1600 = vld [vmem:[%s4 + $0x1d0] sm:$0xf]
      %v1601 = vld [vmem:[%s4 + $0x1d4] sm:$0xf]
      %v1602 = vld [vmem:[%s4 + $0x1d8] sm:$0xf]
      %v1603 = vld [vmem:[%s4 + $0x1dc] sm:$0xf]
      %v1604 = vld [vmem:[%s4 + $0x1e0] sm:$0xf]
      %v1605 = vld [vmem:[%s4 + $0x1e4] sm:$0xf]
      %v1606 = vld [vmem:[%s4 + $0x1e8] sm:$0xf]
      %v1607 = vld [vmem:[%s4 + $0x1ec] sm:$0xf]
      %v1608 = vld [vmem:[%s4 + $0x1f0] sm:$0xf]
      %v1609 = vld [vmem:[%s4 + $0x1f4] sm:$0xf]
      %v1610 = vld [vmem:[%s4 + $0x1f8] sm:$0xf]
      %v1611 = vld [vmem:[%s4 + $0x1fc] sm:$0xf]
      %v1612 = vld [vmem:[%s4 + $0x200] sm:$0xf]
      %v1613 = vld [vmem:[%s4 + $0x204] sm:$0xf]
      %v1614 = vld [vmem:[%s4 + $0x208] sm:$0xf]
      %v1615 = vld [vmem:[%s4 + $0x20c] sm:$0xf]
      %v1616 = vld [vmem:[%s4 + $0x210] sm:$0xf]
      %v1617 = vld [vmem:[%s4 + $0x214] sm:$0xf]
      %v1618 = vld [vmem:[%s4 + $0x218] sm:$0xf]
      %v1619 = vld [vmem:[%s4 + $0x21c] sm:$0xf]
      %v1620 = vld [vmem:[%s4 + $0x220] sm:$0xf]
      %v1621 = vld [vmem:[%s4 + $0x224] sm:$0xf]
      %v1622 = vld [vmem:[%s4 + $0x228] sm:$0xf]
      %v1623 = vld [vmem:[%s4 + $0x22c] sm:$0xf]
      %v1624 = vld [vmem:[%s4 + $0x230] sm:$0xf]
      %v1625 = vld [vmem:[%s4 + $0x234] sm:$0xf]
      %v1626 = vld [vmem:[%s4 + $0x238] sm:$0xf]
      %v1627 = vld [vmem:[%s4 + $0x23c] sm:$0xf]
      %v1628 = vld [vmem:[%s5] sm:$0x1]
      %v1630 = vlaneseq
      %v1631 = vshrl.u32 %v1630, 7
      %v1632 = vsub.s32 0, %v1631
      %v1633 = vrot.slane %v1628, %v1632
      %v1779 = vunpack.c.l.b16 %v1484
      %v1780 = vunpack.c.l.b16 %v1485
      %v1781 = vunpack.c.l.b16 %v1486
      %v1782 = vunpack.c.l.b16 %v1487
      %v1783 = vunpack.c.l.b16 %v1488
      %v1784 = vunpack.c.l.b16 %v1489
      %v1785 = vunpack.c.l.b16 %v1490
      %v1786 = vunpack.c.l.b16 %v1491
      %v1787 = vunpack.c.l.b16 %v1492
      %v1788 = vunpack.c.l.b16 %v1493
      %v1789 = vunpack.c.l.b16 %v1494
      %v1790 = vunpack.c.l.b16 %v1495
      %v1791 = vunpack.c.l.b16 %v1496
      %v1792 = vunpack.c.l.b16 %v1497
      %v1793 = vunpack.c.l.b16 %v1498
      %v1794 = vunpack.c.l.b16 %v1499
      %v1795 = vunpack.c.l.b16 %v1500
      %v1796 = vunpack.c.l.b16 %v1501
      %v1797 = vunpack.c.l.b16 %v1502
      %v1798 = vunpack.c.l.b16 %v1503
      %v1799 = vunpack.c.l.b16 %v1504
      %v1800 = vunpack.c.l.b16 %v1505
      %v1801 = vunpack.c.l.b16 %v1506
      %v1802 = vunpack.c.l.b16 %v1507
      %v1803 = vunpack.c.l.b16 %v1508
      %v1804 = vunpack.c.l.b16 %v1509
      %v1805 = vunpack.c.l.b16 %v1510
      %v1806 = vunpack.c.l.b16 %v1511
      %v1807 = vunpack.c.l.b16 %v1512
      %v1808 = vunpack.c.l.b16 %v1513
      %v1809 = vunpack.c.l.b16 %v1514
      %v1810 = vunpack.c.l.b16 %v1515
      %v1811 = vunpack.c.l.b16 %v1516
      %v1812 = vunpack.c.l.b16 %v1517
      %v1813 = vunpack.c.l.b16 %v1518
      %v1814 = vunpack.c.l.b16 %v1519
      %v1815 = vunpack.c.l.b16 %v1520
      %v1816 = vunpack.c.l.b16 %v1521
      %v1817 = vunpack.c.l.b16 %v1522
      %v1818 = vunpack.c.l.b16 %v1523
      %v1819 = vunpack.c.l.b16 %v1524
      %v1820 = vunpack.c.l.b16 %v1525
      %v1821 = vunpack.c.l.b16 %v1526
      %v1822 = vunpack.c.l.b16 %v1527
      %v1823 = vunpack.c.l.b16 %v1528
      %v1824 = vunpack.c.l.b16 %v1529
      %v1825 = vunpack.c.l.b16 %v1530
      %v1826 = vunpack.c.l.b16 %v1531
      %v1827 = vunpack.c.l.b16 %v1532
      %v1828 = vunpack.c.l.b16 %v1533
      %v1829 = vunpack.c.l.b16 %v1534
      %v1830 = vunpack.c.l.b16 %v1535
      %v1831 = vunpack.c.l.b16 %v1536
      %v1832 = vunpack.c.l.b16 %v1537
      %v1833 = vunpack.c.l.b16 %v1538
      %v1834 = vunpack.c.l.b16 %v1539
      %v1835 = vunpack.c.l.b16 %v1540
      %v1836 = vunpack.c.l.b16 %v1541
      %v1837 = vunpack.c.l.b16 %v1542
      %v1838 = vunpack.c.l.b16 %v1543
      %v1839 = vunpack.c.l.b16 %v1544
      %v1840 = vunpack.c.l.b16 %v1545
      %v1841 = vunpack.c.l.b16 %v1546
      %v1842 = vunpack.c.l.b16 %v1547
      %v1843 = vunpack.c.l.b16 %v1548
      %v1844 = vunpack.c.l.b16 %v1549
      %v1845 = vunpack.c.l.b16 %v1550
      %v1846 = vunpack.c.l.b16 %v1551
      %v1847 = vunpack.c.l.b16 %v1552
      %v1848 = vunpack.c.l.b16 %v1553
      %v1849 = vunpack.c.l.b16 %v1554
      %v1850 = vunpack.c.l.b16 %v1555
      %v1851 = vunpack.c.l.b16 %v1556
      %v1852 = vunpack.c.l.b16 %v1557
      %v1853 = vunpack.c.l.b16 %v1558
      %v1854 = vunpack.c.l.b16 %v1559
      %v1855 = vunpack.c.l.b16 %v1560
      %v1856 = vunpack.c.l.b16 %v1561
      %v1857 = vunpack.c.l.b16 %v1562
      %v1858 = vunpack.c.l.b16 %v1563
      %v1859 = vunpack.c.l.b16 %v1564
      %v1860 = vunpack.c.l.b16 %v1565
      %v1861 = vunpack.c.l.b16 %v1566
      %v1862 = vunpack.c.l.b16 %v1567
      %v1863 = vunpack.c.l.b16 %v1568
      %v1864 = vunpack.c.l.b16 %v1569
      %v1865 = vunpack.c.l.b16 %v1570
      %v1866 = vunpack.c.l.b16 %v1571
      %v1867 = vunpack.c.l.b16 %v1572
      %v1868 = vunpack.c.l.b16 %v1573
      %v1869 = vunpack.c.l.b16 %v1574
      %v1870 = vunpack.c.l.b16 %v1575
      %v1871 = vunpack.c.l.b16 %v1576
      %v1872 = vunpack.c.l.b16 %v1577
      %v1873 = vunpack.c.l.b16 %v1578
      %v1874 = vunpack.c.l.b16 %v1579
      %v1875 = vunpack.c.l.b16 %v1580
      %v1876 = vunpack.c.l.b16 %v1581
      %v1877 = vunpack.c.l.b16 %v1582
      %v1878 = vunpack.c.l.b16 %v1583
      %v1879 = vunpack.c.l.b16 %v1584
      %v1880 = vunpack.c.l.b16 %v1585
      %v1881 = vunpack.c.l.b16 %v1586
      %v1882 = vunpack.c.l.b16 %v1587
      %v1883 = vunpack.c.l.b16 %v1588
      %v1884 = vunpack.c.l.b16 %v1589
      %v1885 = vunpack.c.l.b16 %v1590
      %v1886 = vunpack.c.l.b16 %v1591
      %v1887 = vunpack.c.l.b16 %v1592
      %v1888 = vunpack.c.l.b16 %v1593
      %v1889 = vunpack.c.l.b16 %v1594
      %v1890 = vunpack.c.l.b16 %v1595
      %v1891 = vunpack.c.l.b16 %v1596
      %v1892 = vunpack.c.l.b16 %v1597
      %v1893 = vunpack.c.l.b16 %v1598
      %v1894 = vunpack.c.l.b16 %v1599
      %v1895 = vunpack.c.l.b16 %v1600
      %v1896 = vunpack.c.l.b16 %v1601
      %v1897 = vunpack.c.l.b16 %v1602
      %v1898 = vunpack.c.l.b16 %v1603
      %v1899 = vunpack.c.l.b16 %v1604
      %v1900 = vunpack.c.l.b16 %v1605
      %v1901 = vunpack.c.l.b16 %v1606
      %v1902 = vunpack.c.l.b16 %v1607
      %v1903 = vunpack.c.l.b16 %v1608
      %v1904 = vunpack.c.l.b16 %v1609
      %v1905 = vunpack.c.l.b16 %v1610
      %v1906 = vunpack.c.l.b16 %v1611
      %v1907 = vunpack.c.l.b16 %v1612
      %v1908 = vunpack.c.l.b16 %v1613
      %v1909 = vunpack.c.l.b16 %v1614
      %v1910 = vunpack.c.l.b16 %v1615
      %v1911 = vunpack.c.l.b16 %v1616
      %v1912 = vunpack.c.l.b16 %v1617
      %v1913 = vunpack.c.l.b16 %v1618
      %v1914 = vunpack.c.l.b16 %v1619
      %v1915 = vunpack.c.l.b16 %v1620
      %v1916 = vunpack.c.l.b16 %v1621
      %v1917 = vunpack.c.l.b16 %v1622
      %v1918 = vunpack.c.l.b16 %v1623
      %v1919 = vunpack.c.l.b16 %v1624
      %v1920 = vunpack.c.l.b16 %v1625
      %v1921 = vunpack.c.l.b16 %v1626
      %v1922 = vunpack.c.l.b16 %v1627
      %v1923 = vpack.c.b16 %v1780, %v1779
      %v1924 = vpack.c.b16 %v1782, %v1781
      %v1925 = vpack.c.b16 %v1784, %v1783
      %v1926 = vpack.c.b16 %v1786, %v1785
      %v1927 = vpack.c.b16 %v1788, %v1787
      %v1928 = vpack.c.b16 %v1790, %v1789
      %v1929 = vpack.c.b16 %v1792, %v1791
      %v1930 = vpack.c.b16 %v1794, %v1793
      %v1931 = vpack.c.b16 %v1796, %v1795
      %v1932 = vpack.c.b16 %v1798, %v1797
      %v1933 = vpack.c.b16 %v1800, %v1799
      %v1934 = vpack.c.b16 %v1802, %v1801
      %v1935 = vpack.c.b16 %v1804, %v1803
      %v1936 = vpack.c.b16 %v1806, %v1805
      %v1937 = vpack.c.b16 %v1808, %v1807
      %v1938 = vpack.c.b16 %v1810, %v1809
      %v1939 = vpack.c.b16 %v1812, %v1811
      %v1940 = vpack.c.b16 %v1814, %v1813
      %v1941 = vpack.c.b16 %v1816, %v1815
      %v1942 = vpack.c.b16 %v1818, %v1817
      %v1943 = vpack.c.b16 %v1820, %v1819
      %v1944 = vpack.c.b16 %v1822, %v1821
      %v1945 = vpack.c.b16 %v1824, %v1823
      %v1946 = vpack.c.b16 %v1826, %v1825
      %v1947 = vpack.c.b16 %v1828, %v1827
      %v1948 = vpack.c.b16 %v1830, %v1829
      %v1949 = vpack.c.b16 %v1832, %v1831
      %v1950 = vpack.c.b16 %v1834, %v1833
      %v1951 = vpack.c.b16 %v1836, %v1835
      %v1952 = vpack.c.b16 %v1838, %v1837
      %v1953 = vpack.c.b16 %v1840, %v1839
      %v1954 = vpack.c.b16 %v1842, %v1841
      %v1955 = vpack.c.b16 %v1844, %v1843
      %v1956 = vpack.c.b16 %v1846, %v1845
      %v1957 = vpack.c.b16 %v1848, %v1847
      %v1958 = vpack.c.b16 %v1850, %v1849
      %v1959 = vpack.c.b16 %v1852, %v1851
      %v1960 = vpack.c.b16 %v1854, %v1853
      %v1961 = vpack.c.b16 %v1856, %v1855
      %v1962 = vpack.c.b16 %v1858, %v1857
      %v1963 = vpack.c.b16 %v1860, %v1859
      %v1964 = vpack.c.b16 %v1862, %v1861
      %v1965 = vpack.c.b16 %v1864, %v1863
      %v1966 = vpack.c.b16 %v1866, %v1865
      %v1967 = vpack.c.b16 %v1868, %v1867
      %v1968 = vpack.c.b16 %v1870, %v1869
      %v1969 = vpack.c.b16 %v1872, %v1871
      %v1970 = vpack.c.b16 %v1874, %v1873
      %v1971 = vpack.c.b16 %v1876, %v1875
      %v1972 = vpack.c.b16 %v1878, %v1877
      %v1973 = vpack.c.b16 %v1880, %v1879
      %v1974 = vpack.c.b16 %v1882, %v1881
      %v1975 = vpack.c.b16 %v1884, %v1883
      %v1976 = vpack.c.b16 %v1886, %v1885
      %v1977 = vpack.c.b16 %v1888, %v1887
      %v1978 = vpack.c.b16 %v1890, %v1889
      %v1979 = vpack.c.b16 %v1892, %v1891
      %v1980 = vpack.c.b16 %v1894, %v1893
      %v1981 = vpack.c.b16 %v1896, %v1895
      %v1982 = vpack.c.b16 %v1898, %v1897
      %v1983 = vpack.c.b16 %v1900, %v1899
      %v1984 = vpack.c.b16 %v1902, %v1901
      %v1985 = vpack.c.b16 %v1904, %v1903
      %v1986 = vpack.c.b16 %v1906, %v1905
      %v1987 = vpack.c.b16 %v1908, %v1907
      %v1988 = vpack.c.b16 %v1910, %v1909
      %v1989 = vpack.c.b16 %v1912, %v1911
      %v1990 = vpack.c.b16 %v1914, %v1913
      %v1991 = vpack.c.b16 %v1916, %v1915
      %v1992 = vpack.c.b16 %v1918, %v1917
      %v1993 = vpack.c.b16 %v1920, %v1919
      %v1994 = vpack.c.b16 %v1922, %v1921
      %2067 = vmatprep.subr.bf16.mxu0 0
      %2068 = vmatpush1.bf16.msra.mxu0 %v1930
      %2069 = vmatprep.subr.bf16.mxu0 0
      %2070 = vmatpush1.bf16.msra.mxu0 %v1929
      %2071 = vmatprep.subr.bf16.mxu0 0
      %2072 = vmatpush1.bf16.msra.mxu0 %v1928
      %2073 = vmatprep.subr.bf16.mxu0 0
      %2074 = vmatpush1.bf16.msra.mxu0 %v1927
      %2075 = vmatprep.subr.bf16.mxu0 0
      %2076 = vmatpush1.bf16.msra.mxu0 %v1926
      %2077 = vmatprep.subr.bf16.mxu0 0
      %2078 = vmatpush1.bf16.msra.mxu0 %v1925
      %2079 = vmatprep.subr.bf16.mxu0 0
      %2080 = vmatpush1.bf16.msra.mxu0 %v1924
      %2081 = vmatprep.subr.bf16.mxu0 0
      %2082 = vmatpush1.bf16.msra.mxu0 %v1923
      %2083 = vmatprep.subr.bf16.mxu0 0
      %2084 = vmatpush2.bf16.msra.mxu0 %v1938
      %2085 = vmatprep.subr.bf16.mxu0 0
      %2086 = vmatpush2.bf16.msra.mxu0 %v1937
      %2087 = vmatprep.subr.bf16.mxu0 0
      %2088 = vmatpush2.bf16.msra.mxu0 %v1936
      %2089 = vmatprep.subr.bf16.mxu0 0
      %2090 = vmatpush2.bf16.msra.mxu0 %v1935
      %2091 = vmatprep.subr.bf16.mxu0 0
      %2092 = vmatpush2.bf16.msra.mxu0 %v1934
      %2093 = vmatprep.subr.bf16.mxu0 0
      %2094 = vmatpush2.bf16.msra.mxu0 %v1933
      %2095 = vmatprep.subr.bf16.mxu0 0
      %2096 = vmatpush2.bf16.msra.mxu0 %v1932
      %2097 = vmatprep.subr.bf16.mxu0 0
      %2098 = vmatpush2.bf16.msra.mxu0 %v1931
      %2099 = vmatprep.mubr.bf16.mxu0 %v640
      %2100 = vmatmul.mubr.bf16.gmra.mxu0 %v503
      %v2101 = vpop.f32.mrf.mxu0
      %v2102 = vadd.f32 %v1633, %v2101
      %v2103 = vpop.f32.mrf.mxu0
      %v2104 = vpop.f32.mrf.mxu0
      %v2105 = vadd.f32 %v1633, %v2104
      %v2106 = vpop.f32.mrf.mxu0
      %2107 = vmatprep.mubr.bf16.mxu0 %v641
      %2108 = vmatmul.mubr.bf16.gmra.mxu0 %v504
      %v2109 = vpop.f32.mrf.mxu0
      %v2110 = vadd.f32 %v1633, %v2109
      %v2111 = vpop.f32.mrf.mxu0
      %v2112 = vpop.f32.mrf.mxu0
      %v2113 = vadd.f32 %v1633, %v2112
      %v2114 = vpop.f32.mrf.mxu0
      %2115 = vmatprep.mubr.bf16.mxu0 %v642
      %2116 = vmatmul.mubr.bf16.gmra.mxu0 %v505
      %v2117 = vpop.f32.mrf.mxu0
      %v2118 = vadd.f32 %v1633, %v2117
      %v2119 = vpop.f32.mrf.mxu0
      %v2120 = vpop.f32.mrf.mxu0
      %v2121 = vadd.f32 %v1633, %v2120
      %v2122 = vpop.f32.mrf.mxu0
      %2123 = vmatprep.mubr.bf16.mxu0 %v643
      %2124 = vmatmul.mubr.bf16.gmra.mxu0 %v506
      %v2125 = vpop.f32.mrf.mxu0
      %v2126 = vadd.f32 %v1633, %v2125
      %v2127 = vpop.f32.mrf.mxu0
      %v2128 = vpop.f32.mrf.mxu0
      %v2129 = vadd.f32 %v1633, %v2128
      %v2130 = vpop.f32.mrf.mxu0
      %2131 = vdwg.mxu0
      %2132 = vmatprep.subr.bf16.mxu0 0
      %2133 = vmatpush1.bf16.msra.mxu0 %v1946
      %2134 = vmatprep.subr.bf16.mxu0 0
      %2135 = vmatpush1.bf16.msra.mxu0 %v1945
      %2136 = vmatprep.subr.bf16.mxu0 0
      %2137 = vmatpush1.bf16.msra.mxu0 %v1944
      %2138 = vmatprep.subr.bf16.mxu0 0
      %2139 = vmatpush1.bf16.msra.mxu0 %v1943
      %2140 = vmatprep.subr.bf16.mxu0 0
      %2141 = vmatpush1.bf16.msra.mxu0 %v1942
      %2142 = vmatprep.subr.bf16.mxu0 0
      %2143 = vmatpush1.bf16.msra.mxu0 %v1941
      %2144 = vmatprep.subr.bf16.mxu0 0
      %2145 = vmatpush1.bf16.msra.mxu0 %v1940
      %2146 = vmatprep.subr.bf16.mxu0 0
      %2147 = vmatpush1.bf16.msra.mxu0 %v1939
      %2148 = vmatprep.subr.bf16.mxu0 0
      %2149 = vmatpush2.bf16.msra.mxu0 %v1954
      %2150 = vmatprep.subr.bf16.mxu0 0
      %2151 = vmatpush2.bf16.msra.mxu0 %v1953
      %2152 = vmatprep.subr.bf16.mxu0 0
      %2153 = vmatpush2.bf16.msra.mxu0 %v1952
      %2154 = vmatprep.subr.bf16.mxu0 0
      %2155 = vmatpush2.bf16.msra.mxu0 %v1951
      %2156 = vmatprep.subr.bf16.mxu0 0
      %2157 = vmatpush2.bf16.msra.mxu0 %v1950
      %2158 = vmatprep.subr.bf16.mxu0 0
      %2159 = vmatpush2.bf16.msra.mxu0 %v1949
      %2160 = vmatprep.subr.bf16.mxu0 0
      %2161 = vmatpush2.bf16.msra.mxu0 %v1948
      %2162 = vmatprep.subr.bf16.mxu0 0
      %2163 = vmatpush2.bf16.msra.mxu0 %v1947
      %2164 = vmatprep.mubr.bf16.mxu0 %v940
      %2165 = vmatmul.mubr.bf16.gmra.mxu0 %v803
      %v2166 = vpop.f32.mrf.mxu0
      %v2167 = vadd.f32 %v2102, %v2166
      %v2168 = vpop.f32.mrf.mxu0
      %v2169 = vpop.f32.mrf.mxu0
      %v2170 = vadd.f32 %v2105, %v2169
      %v2171 = vpop.f32.mrf.mxu0
      %2172 = vmatprep.mubr.bf16.mxu0 %v941
      %2173 = vmatmul.mubr.bf16.gmra.mxu0 %v804
      %v2174 = vpop.f32.mrf.mxu0
      %v2175 = vadd.f32 %v2110, %v2174
      %v2176 = vpop.f32.mrf.mxu0
      %v2177 = vpop.f32.mrf.mxu0
      %v2178 = vadd.f32 %v2113, %v2177
      %v2179 = vpop.f32.mrf.mxu0
      %2180 = vmatprep.mubr.bf16.mxu0 %v942
      %2181 = vmatmul.mubr.bf16.gmra.mxu0 %v805
      %v2182 = vpop.f32.mrf.mxu0
      %v2183 = vadd.f32 %v2118, %v2182
      %v2184 = vpop.f32.mrf.mxu0
      %v2185 = vpop.f32.mrf.mxu0
      %v2186 = vadd.f32 %v2121, %v2185
      %v2187 = vpop.f32.mrf.mxu0
      %2188 = vmatprep.mubr.bf16.mxu0 %v943
      %2189 = vmatmul.mubr.bf16.gmra.mxu0 %v806
      %v2190 = vpop.f32.mrf.mxu0
      %v2191 = vadd.f32 %v2126, %v2190
      %v2192 = vpop.f32.mrf.mxu0
      %v2193 = vpop.f32.mrf.mxu0
      %v2194 = vadd.f32 %v2129, %v2193
      %v2195 = vpop.f32.mrf.mxu0
      %2196 = vdwg.mxu0
      %2197 = vmatprep.subr.bf16.mxu0 0
      %2198 = vmatpush1.bf16.msra.mxu0 %v1962
      %2199 = vmatprep.subr.bf16.mxu0 0
      %2200 = vmatpush1.bf16.msra.mxu0 %v1961
      %2201 = vmatprep.subr.bf16.mxu0 0
      %2202 = vmatpush1.bf16.msra.mxu0 %v1960
      %2203 = vmatprep.subr.bf16.mxu0 0
      %2204 = vmatpush1.bf16.msra.mxu0 %v1959
      %2205 = vmatprep.subr.bf16.mxu0 0
      %2206 = vmatpush1.bf16.msra.mxu0 %v1958
      %2207 = vmatprep.subr.bf16.mxu0 0
      %2208 = vmatpush1.bf16.msra.mxu0 %v1957
      %2209 = vmatprep.subr.bf16.mxu0 0
      %2210 = vmatpush1.bf16.msra.mxu0 %v1956
      %2211 = vmatprep.subr.bf16.mxu0 0
      %2212 = vmatpush1.bf16.msra.mxu0 %v1955
      %2213 = vmatprep.subr.bf16.mxu0 0
      %2214 = vmatpush2.bf16.msra.mxu0 %v1970
      %2215 = vmatprep.subr.bf16.mxu0 0
      %2216 = vmatpush2.bf16.msra.mxu0 %v1969
      %2217 = vmatprep.subr.bf16.mxu0 0
      %2218 = vmatpush2.bf16.msra.mxu0 %v1968
      %2219 = vmatprep.subr.bf16.mxu0 0
      %2220 = vmatpush2.bf16.msra.mxu0 %v1967
      %2221 = vmatprep.subr.bf16.mxu0 0
      %2222 = vmatpush2.bf16.msra.mxu0 %v1966
      %2223 = vmatprep.subr.bf16.mxu0 0
      %2224 = vmatpush2.bf16.msra.mxu0 %v1965
      %2225 = vmatprep.subr.bf16.mxu0 0
      %2226 = vmatpush2.bf16.msra.mxu0 %v1964
      %2227 = vmatprep.subr.bf16.mxu0 0
      %2228 = vmatpush2.bf16.msra.mxu0 %v1963
      %2229 = vmatprep.mubr.bf16.mxu0 %v1081
      %2230 = vmatmul.mubr.bf16.gmra.mxu0 %v944
      %v2231 = vpop.f32.mrf.mxu0
      %v2232 = vadd.f32 %v2167, %v2231
      %v2233 = vpop.f32.mrf.mxu0
      %v2234 = vpop.f32.mrf.mxu0
      %v2235 = vadd.f32 %v2170, %v2234
      %v2236 = vpop.f32.mrf.mxu0
      %2237 = vmatprep.mubr.bf16.mxu0 %v1082
      %2238 = vmatmul.mubr.bf16.gmra.mxu0 %v945
      %v2239 = vpop.f32.mrf.mxu0
      %v2240 = vadd.f32 %v2175, %v2239
      %v2241 = vpop.f32.mrf.mxu0
      %v2242 = vpop.f32.mrf.mxu0
      %v2243 = vadd.f32 %v2178, %v2242
      %v2244 = vpop.f32.mrf.mxu0
      %2245 = vmatprep.mubr.bf16.mxu0 %v1083
      %2246 = vmatmul.mubr.bf16.gmra.mxu0 %v946
      %v2247 = vpop.f32.mrf.mxu0
      %v2248 = vadd.f32 %v2183, %v2247
      %v2249 = vpop.f32.mrf.mxu0
      %v2250 = vpop.f32.mrf.mxu0
      %v2251 = vadd.f32 %v2186, %v2250
      %v2252 = vpop.f32.mrf.mxu0
      %2253 = vmatprep.mubr.bf16.mxu0 %v1084
      %2254 = vmatmul.mubr.bf16.gmra.mxu0 %v947
      %v2255 = vpop.f32.mrf.mxu0
      %v2256 = vadd.f32 %v2191, %v2255
      %v2257 = vpop.f32.mrf.mxu0
      %v2258 = vpop.f32.mrf.mxu0
      %v2259 = vadd.f32 %v2194, %v2258
      %v2260 = vpop.f32.mrf.mxu0
      %2261 = vdwg.mxu0
      %2262 = vmatprep.subr.bf16.mxu0 0
      %2263 = vmatpush1.bf16.msra.mxu0 %v1978
      %2264 = vmatprep.subr.bf16.mxu0 0
      %2265 = vmatpush1.bf16.msra.mxu0 %v1977
      %2266 = vmatprep.subr.bf16.mxu0 0
      %2267 = vmatpush1.bf16.msra.mxu0 %v1976
      %2268 = vmatprep.subr.bf16.mxu0 0
      %2269 = vmatpush1.bf16.msra.mxu0 %v1975
      %2270 = vmatprep.subr.bf16.mxu0 0
      %2271 = vmatpush1.bf16.msra.mxu0 %v1974
      %2272 = vmatprep.subr.bf16.mxu0 0
      %2273 = vmatpush1.bf16.msra.mxu0 %v1973
      %2274 = vmatprep.subr.bf16.mxu0 0
      %2275 = vmatpush1.bf16.msra.mxu0 %v1972
      %2276 = vmatprep.subr.bf16.mxu0 0
      %2277 = vmatpush1.bf16.msra.mxu0 %v1971
      %2278 = vmatprep.subr.bf16.mxu0 0
      %2279 = vmatpush2.bf16.msra.mxu0 %v1986
      %2280 = vmatprep.subr.bf16.mxu0 0
      %2281 = vmatpush2.bf16.msra.mxu0 %v1985
      %2282 = vmatprep.subr.bf16.mxu0 0
      %2283 = vmatpush2.bf16.msra.mxu0 %v1984
      %2284 = vmatprep.subr.bf16.mxu0 0
      %2285 = vmatpush2.bf16.msra.mxu0 %v1983
      %2286 = vmatprep.subr.bf16.mxu0 0
      %2287 = vmatpush2.bf16.msra.mxu0 %v1982
      %2288 = vmatprep.subr.bf16.mxu0 0
      %2289 = vmatpush2.bf16.msra.mxu0 %v1981
      %2290 = vmatprep.subr.bf16.mxu0 0
      %2291 = vmatpush2.bf16.msra.mxu0 %v1980
      %2292 = vmatprep.subr.bf16.mxu0 0
      %2293 = vmatpush2.bf16.msra.mxu0 %v1979
      %2294 = vmatprep.mubr.bf16.mxu0 %v1347
      %2295 = vmatmul.mubr.bf16.gmra.mxu0 %v1214
      %v2296 = vpop.f32.mrf.mxu0
      %v2297 = vadd.f32 %v2232, %v2296
      %v2298 = vpop.f32.mrf.mxu0
      %v2299 = vpop.f32.mrf.mxu0
      %v2300 = vadd.f32 %v2235, %v2299
      %v2301 = vpop.f32.mrf.mxu0
      %2302 = vmatprep.mubr.bf16.mxu0 %v1348
      %2303 = vmatmul.mubr.bf16.gmra.mxu0 %v1215
      %v2304 = vpop.f32.mrf.mxu0
      %v2305 = vadd.f32 %v2240, %v2304
      %v2306 = vpop.f32.mrf.mxu0
      %v2307 = vpop.f32.mrf.mxu0
      %v2308 = vadd.f32 %v2243, %v2307
      %v2309 = vpop.f32.mrf.mxu0
      %2310 = vmatprep.mubr.bf16.mxu0 %v1349
      %2311 = vmatmul.mubr.bf16.gmra.mxu0 %v1216
      %v2312 = vpop.f32.mrf.mxu0
      %v2313 = vadd.f32 %v2248, %v2312
      %v2314 = vpop.f32.mrf.mxu0
      %v2315 = vpop.f32.mrf.mxu0
      %v2316 = vadd.f32 %v2251, %v2315
      %v2317 = vpop.f32.mrf.mxu0
      %2318 = vmatprep.mubr.bf16.mxu0 %v1350
      %2319 = vmatmul.mubr.bf16.gmra.mxu0 %v1217
      %v2320 = vpop.f32.mrf.mxu0
      %v2321 = vadd.f32 %v2256, %v2320
      %v2322 = vpop.f32.mrf.mxu0
      %v2323 = vpop.f32.mrf.mxu0
      %v2324 = vadd.f32 %v2259, %v2323
      %v2325 = vpop.f32.mrf.mxu0
      %2326 = vdwg.mxu0
      %2327 = vmatprep.subr.bf16.mxu0 0
      %2328 = vmatpush1.bf16.msra.mxu0 %v1994
      %2329 = vmatprep.subr.bf16.mxu0 0
      %2330 = vmatpush1.bf16.msra.mxu0 %v1993
      %2331 = vmatprep.subr.bf16.mxu0 0
      %2332 = vmatpush1.bf16.msra.mxu0 %v1992
      %2333 = vmatprep.subr.bf16.mxu0 0
      %2334 = vmatpush1.bf16.msra.mxu0 %v1991
      %2335 = vmatprep.subr.bf16.mxu0 0
      %2336 = vmatpush1.bf16.msra.mxu0 %v1990
      %2337 = vmatprep.subr.bf16.mxu0 0
      %2338 = vmatpush1.bf16.msra.mxu0 %v1989
      %2339 = vmatprep.subr.bf16.mxu0 0
      %2340 = vmatpush1.bf16.msra.mxu0 %v1988
      %2341 = vmatprep.subr.bf16.mxu0 0
      %2342 = vmatpush1.bf16.msra.mxu0 %v1987
      %2343 = vmatprep.subr.bf16.mxu0 0
      %2344 = vmatpush2.bf16.msra.mxu0 0
      %2345 = vmatprep.subr.bf16.mxu0 0
      %2346 = vmatpush2.bf16.msra.mxu0 0
      %2347 = vmatprep.subr.bf16.mxu0 0
      %2348 = vmatpush2.bf16.msra.mxu0 0
      %2349 = vmatprep.subr.bf16.mxu0 0
      %2350 = vmatpush2.bf16.msra.mxu0 0
      %2351 = vmatprep.subr.bf16.mxu0 0
      %2352 = vmatpush2.bf16.msra.mxu0 0
      %2353 = vmatprep.subr.bf16.mxu0 0
      %2354 = vmatpush2.bf16.msra.mxu0 0
      %2355 = vmatprep.subr.bf16.mxu0 0
      %2356 = vmatpush2.bf16.msra.mxu0 0
      %2357 = vmatprep.subr.bf16.mxu0 0
      %2358 = vmatpush2.bf16.msra.mxu0 0
      %2359 = vmatprep.mubr.bf16.mxu0 0
      %2360 = vmatmul.mubr.bf16.gmra.mxu0 %v1480
      %v2361 = vpop.f32.mrf.mxu0
      %v2362 = vadd.f32 %v2297, %v2361
      %v2363 = vpop.f32.mrf.mxu0
      %v2364 = vpop.f32.mrf.mxu0
      %v2365 = vadd.f32 %v2300, %v2364
      %v2366 = vpop.f32.mrf.mxu0
      %2367 = vmatprep.mubr.bf16.mxu0 0
      %2368 = vmatmul.mubr.bf16.gmra.mxu0 %v1481
      %v2369 = vpop.f32.mrf.mxu0
      %v2370 = vadd.f32 %v2305, %v2369
      %v2371 = vpop.f32.mrf.mxu0
      %v2372 = vpop.f32.mrf.mxu0
      %v2373 = vadd.f32 %v2308, %v2372
      %v2374 = vpop.f32.mrf.mxu0
      %2375 = vmatprep.mubr.bf16.mxu0 0
      %2376 = vmatmul.mubr.bf16.gmra.mxu0 %v1482
      %v2377 = vpop.f32.mrf.mxu0
      %v2378 = vadd.f32 %v2313, %v2377
      %v2379 = vpop.f32.mrf.mxu0
      %v2380 = vpop.f32.mrf.mxu0
      %v2381 = vadd.f32 %v2316, %v2380
      %v2382 = vpop.f32.mrf.mxu0
      %2383 = vmatprep.mubr.bf16.mxu0 0
      %2384 = vmatmul.mubr.bf16.gmra.mxu0 %v1483
      %v2385 = vpop.f32.mrf.mxu0
      %v2386 = vadd.f32 %v2321, %v2385
      %v2387 = vpop.f32.mrf.mxu0
      %v2388 = vpop.f32.mrf.mxu0
      %v2389 = vadd.f32 %v2324, %v2388
      %v2390 = vpop.f32.mrf.mxu0
      %2391 = vdwg.mxu0
      %v2392 = vadd.f32 %v2362, %v2365
      %v2393 = vadd.f32 %v2392, %v2370
      %v2394 = vadd.f32 %v2393, %v2373
      %v2395 = vadd.f32 %v2394, %v2378
      %v2396 = vadd.f32 %v2395, %v2381
      %v2397 = vadd.f32 %v2396, %v2386
      %v2398 = vadd.f32 %v2397, %v2389
      %v2399 = vrot.slane %v2398, 4
      %v2400 = vadd.f32 %v2398, %v2399
      %v2401 = vrot.slane %v2400, 2
      %v2402 = vadd.f32 %v2400, %v2401
      %v2403 = vrot.slane %v2402, 1
      %v2404 = vadd.f32 %v2402, %v2403
      %v2405 = vmul.f32 %v2404, 0.015625
      %v2406 = vsub.f32 %v2362, %v2405
      %v2407 = vsub.f32 %v2365, %v2405
      %v2408 = vsub.f32 %v2370, %v2405
      %v2409 = vsub.f32 %v2373, %v2405
      %v2410 = vsub.f32 %v2378, %v2405
      %v2411 = vsub.f32 %v2381, %v2405
      %v2412 = vsub.f32 %v2386, %v2405
      %v2413 = vsub.f32 %v2389, %v2405
      %v2414 = vmul.f32 %v2406, %v2406
      %v2415 = vmul.f32 %v2407, %v2407
      %v2416 = vmul.f32 %v2408, %v2408
      %v2417 = vmul.f32 %v2409, %v2409
      %v2418 = vmul.f32 %v2410, %v2410
      %v2419 = vmul.f32 %v2411, %v2411
      %v2420 = vmul.f32 %v2412, %v2412
      %v2421 = vmul.f32 %v2413, %v2413
      %v2422 = vadd.f32 %v2414, %v2415
      %v2423 = vadd.f32 %v2422, %v2416
      %v2424 = vadd.f32 %v2423, %v2417
      %v2425 = vadd.f32 %v2424, %v2418
      %v2426 = vadd.f32 %v2425, %v2419
      %v2427 = vadd.f32 %v2426, %v2420
      %v2428 = vadd.f32 %v2427, %v2421
      %v2429 = vrot.slane %v2428, 4
      %v2430 = vadd.f32 %v2428, %v2429
      %v2431 = vrot.slane %v2430, 2
      %v2432 = vadd.f32 %v2430, %v2431
      %v2433 = vrot.slane %v2432, 1
      %v2434 = vadd.f32 %v2432, %v2433
      %v2435 = vsel %vm339, %v2404, %v2434
      %2436 = vst [vmem:[%s289] sm:$0x3] %v2435
      %v2437 = vpack.c.bf16 %v2365, %v2362
      %v2438 = vpack.c.bf16 %v2373, %v2370
      %v2439 = vpack.c.bf16 %v2381, %v2378
      %v2440 = vpack.c.bf16 %v2389, %v2386
      %v2445 = vunpack.c.l.b16 %v2437
      %v2446 = vunpack.c.h.b16 %v2437
      %v2447 = vunpack.c.l.b16 %v2438
      %v2448 = vunpack.c.h.b16 %v2438
      %v2449 = vunpack.c.l.b16 %v2439
      %v2450 = vunpack.c.h.b16 %v2439
      %v2451 = vunpack.c.l.b16 %v2440
      %v2452 = vunpack.c.h.b16 %v2440
      %v2453 = vpack.c.b16 %v2445, %v2445
      %v2454 = vpack.c.b16 %v2446, %v2446
      %v2455 = vpack.c.b16 %v2447, %v2447
      %v2456 = vpack.c.b16 %v2448, %v2448
      %v2457 = vpack.c.b16 %v2449, %v2449
      %v2458 = vpack.c.b16 %v2450, %v2450
      %v2459 = vpack.c.b16 %v2451, %v2451
      %v2460 = vpack.c.b16 %v2452, %v2452
      %2469 = vst [vmem:[%s285] sm:$0xf] %v2453
      %2470 = vst [vmem:[%s285 + $0x4] sm:$0xf] %v2454
      %2471 = vst [vmem:[%s285 + $0x8] sm:$0xf] %v2455
      %2472 = vst [vmem:[%s285 + $0xc] sm:$0xf] %v2456
      %2473 = vst [vmem:[%s285 + $0x10] sm:$0xf] %v2457
      %2474 = vst [vmem:[%s285 + $0x14] sm:$0xf] %v2458
      %2475 = vst [vmem:[%s285 + $0x18] sm:$0xf] %v2459
      %2476 = vst [vmem:[%s285 + $0x1c] sm:$0xf] %v2460
      %p2477 = scmp.lt.s32.totalorder %s19, 1
      %s2478 = scalar_select %p2477, %s19, 1
      %s2479 = smul.addr %s2478, 8
      %s2480 = smul.addr %s2479, 4
      %s2481 = scalar_lea.vmem %s6, %s2480
      %p2482 = scmp.lt.s32.totalorder %s19, 1
      %s2483 = scalar_select %p2482, %s19, 1
      %s2484 = smul.addr %s2483, 2
      %s2485 = scalar_lea.vmem %s7, %s2484
      // Predicated region
      $region45: #{bottleneck_pallas.4} parent=43 // pred_check
        %p2486 = pneg %p168
      $region46: #{bottleneck_pallas.4} parent=43 // pred_check_branch
        %2488 = sbr.rel (%p2486) target = $region48
      $region47: #{bottleneck_pallas.4} parent=43 // pred_region
        _
      $region48: #{bottleneck_pallas.4} parent=43 // pred_fallthru
        _
      // Predicated region
      $region49: #{bottleneck_pallas.4} parent=43 // pred_check
        %p2489 = pneg %p194
      $region50: #{bottleneck_pallas.4} parent=43 // pred_check_branch
        %2491 = sbr.rel (%p2489) target = $region52
      $region51: #{bottleneck_pallas.4} parent=43 // pred_region
        _
      $region52: #{bottleneck_pallas.4} parent=43 // pred_fallthru
        _
    $region44: #{bottleneck_pallas.4} parent=5 // pred_fallthru
      _
    %p2492 = scmp.le.s32.totalorder 2, %s14
    // Predicated region
    $region53: #{bottleneck_pallas.4} parent=5 // pred_check
      %p2493 = pneg %p2492
    $region54: #{bottleneck_pallas.4} parent=5 // pred_check_branch
      %2495 = sbr.rel (%p2493) target = $region56
    $region55: #{bottleneck_pallas.4} parent=5 // pred_region
      %s2496 = ssub.s32 %s14, 2
      // Predicated region
      $region57: #{bottleneck_pallas.4} parent=55 // pred_check
        %p2497 = pneg %p174
      $region58: #{bottleneck_pallas.4} parent=55 // pred_check_branch
        %2499 = sbr.rel (%p2497) target = $region60
      $region59: #{bottleneck_pallas.4} parent=55 // pred_region
        %p2500 = scmp.lt.s32.totalorder %s20, 1
        %s2501 = scalar_select %p2500, %s20, 1
        %s2502 = smul.addr %s2501, 8
        %s2503 = smul.addr %s2502, 4
        %s2504 = scalar_lea.vmem %s6, %s2503
      $region60: #{bottleneck_pallas.4} parent=55 // pred_fallthru
        _
      // Predicated region
      $region61: #{bottleneck_pallas.4} parent=55 // pred_check
        %p2505 = pneg %p200
      $region62: #{bottleneck_pallas.4} parent=55 // pred_check_branch
        %2507 = sbr.rel (%p2505) target = $region64
      $region63: #{bottleneck_pallas.4} parent=55 // pred_region
        %p2508 = scmp.lt.s32.totalorder %s20, 1
        %s2509 = scalar_select %p2508, %s20, 1
        %s2510 = smul.addr %s2509, 2
        %s2511 = scalar_lea.vmem %s7, %s2510
      $region64: #{bottleneck_pallas.4} parent=55 // pred_fallthru
        _
    $region56: #{bottleneck_pallas.4} parent=5 // pred_fallthru
      _
  $region6: #{bottleneck_pallas.4} parent=0 // loop_footer
    %s18 = sadd.s32 1, %s14
  $region7: #{bottleneck_pallas.4} parent=0 // loop_footer_branch
    %13 = sbr.rel target = $region3
  $region8: #{bottleneck_pallas.4} parent=0 // loop_exit
    _

</llo_original>
